<compile_context>
chip_gen: v5e
topology: v5e:2x2
jax: 0.10.0
libtpu: 0.0.40
codegen_flags: <defaults>
</compile_context>

<pallas_src>
import numpy as np
import jax
import jax.numpy as jnp
from jax import lax
from jax.experimental import pallas as pl
from jax.experimental.pallas import tpu as pltpu


# ----------------------------------------------------------------------------
# Pallas kernel: whole forward pass (after embedding lookup) in one call.
# ----------------------------------------------------------------------------
def lstm_attn_kernel(x_ref,      # (T*Bp, E)    f32 embedded inputs (time-major rows)
                     w_ih0_ref,  # (E, 8H)      layer-0 input weights, interleaved gate cols
                     w_ihl_ref,  # (3, 2H, 8H)  layers 1..3 input weights (rows = [h_f|h_b])
                     w_hh_ref,   # (4, 2H, 8H)  block-diagonal recurrence weights per layer
                     b_ref,      # (4, 1, 8H)   fused biases (b_ih+b_hh), interleaved cols
                     fc_w_ref,   # (1, 2H)
                     fc_b_ref,   # (1, 1)
                     out_ref,    # (Bp, 1)      sigmoid outputs
                     gx_buf,     # scratch (T*Bp, 8H) per-step gate tiles (x-part)
                     buf_h):     # scratch (T*Bp, 2H) [h_f(t) | h_b(t)] per row
    TB = x_ref.shape[0]
    Bp = out_ref.shape[0]
    H2 = buf_h.shape[-1]          # 2H
    H = H2 // 2
    G8 = gx_buf.shape[-1]         # 8H
    T = TB // Bp

    # ---- hoisted column masks / activation constants (built once) ----
    col8 = lax.broadcasted_iota(jnp.int32, (1, G8), 1)
    fwd_cols = (col8 % (2 * H)) < H                           # fwd-direction gate columns
    g_cols = jnp.logical_and(col8 >= 4 * H, col8 < 6 * H)     # cell-gate (tanh) columns
    # sigmoid(x) = 0.5*(1 + tanh(x/2)) on i/f/o columns; plain tanh on g columns.
    gsel = jnp.where(g_cols, 1.0, 0.5).astype(jnp.float32)    # pre & post scale
    gshift = (1.0 - gsel).astype(jnp.float32)                 # post shift
    col2 = lax.broadcasted_iota(jnp.int32, (1, H2), 1)
    fwd_half = col2 < H

    def cell(gates, c):
        # gates: (Bp, 8H) interleaved [i_f|i_b|f_f|f_b|g_f|g_b|o_f|o_b]
        t = jnp.tanh(gates * gsel)                 # one full-tile EUP pass
        a = t * gsel + gshift                      # sigmoid on i/f/o, tanh on g
        i_g = a[:, 0 * H2:1 * H2]                  # [i_f | i_b]
        f_g = a[:, 1 * H2:2 * H2]                  # [f_f | f_b]
        g_g = a[:, 2 * H2:3 * H2]                  # [g_f | g_b]
        o_g = a[:, 3 * H2:4 * H2]                  # [o_f | o_b]
        c_new = f_g * c + i_g * g_g                # (Bp, 2H) = [c_f | c_b]
        h_new = o_g * jnp.tanh(c_new)
        return h_new, c_new

    # ---- 4 stacked bidirectional layers (static Python unroll) ----
    for layer in range(4):
        # Hoisted input projection: ONE 256-wide MXU matmul over all T*Bp rows.
        if layer == 0:
            gx = jnp.dot(x_ref[...], w_ih0_ref[...],
                         preferred_element_type=jnp.float32)           # (TB, 8H)
        else:
            gx = jnp.dot(buf_h[...], w_ihl_ref[layer - 1],
                         preferred_element_type=jnp.float32)           # (TB, 8H)
        gx = gx + b_ref[layer]

        # Pre-combine (off the serial chain) so recurrence step s reads one
        # contiguous row block: fwd columns from time s, bwd from time T-1-s.
        for t in range(T):
            rf = t * Bp
            rb = (T - 1 - t) * Bp
            gx_buf[rf:rf + Bp, :] = jnp.where(fwd_cols,
                                              gx[rf:rf + Bp, :],
                                              gx[rb:rb + Bp, :])

        w_hh_l = w_hh_ref[layer]                                       # (2H, 8H)

        # (h, c) carried as traced values ([fwd|bwd] fused in lanes).
        h = jnp.zeros((Bp, H2), jnp.float32)
        c = jnp.zeros((Bp, H2), jnp.float32)

        # Serial recurrence: ONE MXU matmul + ONE gate-tile activation per step
        # covering BOTH directions.  T is static and small -> full unroll keeps
        # every row offset static.  (If a bundle dump ever shows spill vld/vst,
        # switch to lax.fori_loop(unroll=2) with pl.ds + pl.multiple_of.)
        for s in range(T):
            rf = s * Bp                      # fwd direction writes time s
            rb = (T - 1 - s) * Bp            # bwd direction writes time T-1-s
            gates = gx_buf[rf:rf + Bp, :] + jnp.dot(
                h, w_hh_l, preferred_element_type=jnp.float32)         # (Bp, 8H)
            h, c = cell(gates, c)
            buf_h[rf:rf + Bp, 0:H] = h[:, 0:H]                         # h_f(s)
            buf_h[rb:rb + Bp, H:H2] = h[:, H:H2]                       # h_b(T-1-s)

    # ---- Bhandau attention + fc1 + sigmoid (flat, concat/reshape-free) ----
    allh = buf_h[...]                                                  # (TB, 2H)
    merged = jnp.where(fwd_half,
                       allh[(T - 1) * Bp:T * Bp, :],                   # h_f(T-1)
                       allh[0:Bp, :])                                  # h_b(0)

    sc = [jnp.sum(allh[t * Bp:(t + 1) * Bp, :] * merged,
                  axis=-1, keepdims=True) for t in range(T)]           # T x (Bp,1)
    m = sc[0]
    for t in range(1, T):
        m = jnp.maximum(m, sc[t])
    e = [jnp.exp(sc[t] - m) for t in range(T)]
    den = e[0]
    acc = allh[0:Bp, :] * e[0]
    for t in range(1, T):
        den = den + e[t]
        acc = acc + allh[t * Bp:(t + 1) * Bp, :] * e[t]
    new_hidden = acc / den                          # (Bp, 2H) attention-weighted sum

    # Dropout is identity at inference; fc1 needs no concat ([f|b] layout matches).
    lv = (jnp.sum(new_hidden * fc_w_ref[...], axis=-1, keepdims=True)
          + fc_b_ref[...])                                             # (Bp, 1)
    out_ref[...] = jax.nn.sigmoid(lv)


# ----------------------------------------------------------------------------
# Host-side weight fusion: interleaved gate columns + block-diagonal W_hh.
# ----------------------------------------------------------------------------
def _interleave_cols(w_f, w_b):
    """Fuse per-direction gate blocks into columns [i_f|i_b|f_f|f_b|g_f|g_b|o_f|o_b]."""
    H = w_f.shape[-1] // 4
    parts = []
    for k in range(4):
        parts.append(w_f[..., k * H:(k + 1) * H])
        parts.append(w_b[..., k * H:(k + 1) * H])
    return jnp.concatenate(parts, axis=-1)


def _blockdiag_hh(w_f, w_b):
    """(H,4H),(H,4H) -> block-diagonal (2H,8H) in interleaved gate column order."""
    zero = jnp.zeros_like(w_f)
    top = _interleave_cols(w_f, zero)    # rows for h_f -> fwd gate columns only
    bot = _interleave_cols(zero, w_b)    # rows for h_b -> bwd gate columns only
    return jnp.concatenate([top, bot], axis=-2)


def _prepare_kernel_params(params):
    n_upper = params["w_hh"].shape[0]                                  # = 3
    w_ih0 = _interleave_cols(params["w_ih0"][0], params["w_ih0"][1])   # (E, 8H)
    w_ihl = jnp.stack([_interleave_cols(params["w_ih"][l, 0], params["w_ih"][l, 1])
                       for l in range(n_upper)])                       # (3, 2H, 8H)
    hh = [params["w_hh0"]] + [params["w_hh"][l] for l in range(n_upper)]
    w_hh = jnp.stack([_blockdiag_hh(m[0], m[1]) for m in hh])          # (4, 2H, 8H)
    bb = [params["b0"]] + [params["b"][l] for l in range(n_upper)]
    b = jnp.stack([_interleave_cols(m[0], m[1]) for m in bb])          # (4, 1, 8H)
    fc_w = params["fc_w"].reshape(1, -1)                               # (1, 2H)
    fc_b = params["fc_b"]                                              # (1, 1)
    return w_ih0, w_ihl, w_hh, b, fc_w, fc_b


# ----------------------------------------------------------------------------
# Wrapper
# ----------------------------------------------------------------------------
@jax.jit
def attention_rnn_forward(tokens, params):
    emb = params["embedding"]                             # (V, E)
    B, T = tokens.shape
    E = emb.shape[1]
    H = params["w_hh0"].shape[-2]
    Bp = ((B + 7) // 8) * 8                               # pad batch to sublane multiple
    TB = T * Bp

    # nn.Embedding lookup (gather) + permute(1,0,2) + batch pad as JAX glue.
    x = jnp.take(emb, tokens, axis=0)                     # (B, T, E)
    x = jnp.transpose(x, (1, 0, 2)).astype(jnp.float32)   # (T, B, E) time-major
    x = jnp.pad(x, ((0, 0), (0, Bp - B), (0, 0)))         # (T, Bp, E)
    x = x.reshape(TB, E)                                  # (T*Bp, E)

    w_ih0, w_ihl, w_hh, b, fc_w, fc_b = _prepare_kernel_params(params)

    # Advisory cost estimate for XLA's scheduler around the custom call.
    flops = (2 * TB * E * 8 * H                           # layer-0 projection
             + 3 * 2 * TB * (2 * H) * (8 * H)             # layers 1-3 projections
             + 4 * T * 2 * Bp * (2 * H) * (8 * H)         # recurrence matmuls
             + 4 * TB * 2 * H)                            # attention + fc epilogue
    transcendentals = 4 * T * Bp * (8 * H + 2 * H) + TB + 2 * Bp
    bytes_accessed = 4 * (TB * E + E * 8 * H + 3 * 2 * H * 8 * H
                          + 4 * 2 * H * 8 * H + 4 * 8 * H + 2 * H + 1 + Bp)

    vmem = pltpu.MemorySpace.VMEM
    out = pl.pallas_call(
        lstm_attn_kernel,
        out_shape=jax.ShapeDtypeStruct((Bp, 1), jnp.float32),
        in_specs=[pl.BlockSpec(memory_space=vmem)] * 7,
        out_specs=pl.BlockSpec(memory_space=vmem),
        scratch_shapes=[
            pltpu.VMEM((TB, 8 * H), jnp.float32),         # hoisted per-step gate tiles
            pltpu.VMEM((TB, 2 * H), jnp.float32),         # merged [h_f|h_b] hidden outputs
        ],
        cost_estimate=pl.CostEstimate(flops=flops,
                                      transcendentals=transcendentals,
                                      bytes_accessed=bytes_accessed),
        # Single grid-less call is right at this toy size (<1 MiB VMEM).  When
        # batch grows: add a leading batch grid axis with
        # dimension_semantics=("parallel",) so v7x's 2 TensorCores split it,
        # and budget gx_buf (TB*8H*4 B) against v7x's 64 MiB VMEM via
        # vmem_limit_bytes.
    )(x, w_ih0, w_ihl, w_hh, b, fc_w, fc_b)
    return out[:B, 0]                                     # == lv.squeeze()


# ----------------------------------------------------------------------------
# Deterministic parameter init (PyTorch-style U(-1/sqrt(H), 1/sqrt(H)) for LSTM)
# ----------------------------------------------------------------------------
def init_params(key, vocab, E, H, num_layers=4):
    ks = iter(jax.random.split(key, 64))
    bound = 1.0 / np.sqrt(H)

    def u(shape):
        return jax.random.uniform(next(ks), shape, jnp.float32, -bound, bound)

    p = {}
    p["embedding"] = jax.random.normal(next(ks), (vocab, E), jnp.float32)
    # layer 0 (input dim E); weights stored transposed as (in_dim, 4H)
    p["w_ih0"] = jnp.stack([u((E, 4 * H)) for _ in range(2)])
    p["w_hh0"] = jnp.stack([u((H, 4 * H)) for _ in range(2)])
    p["b0"] = jnp.stack([u((1, 4 * H)) + u((1, 4 * H)) for _ in range(2)])
    # layers 1..3 (input dim 2H)
    p["w_ih"] = jnp.stack([jnp.stack([u((2 * H, 4 * H)) for _ in range(2)])
                           for _ in range(num_layers - 1)])
    p["w_hh"] = jnp.stack([jnp.stack([u((H, 4 * H)) for _ in range(2)])
                           for _ in range(num_layers - 1)])
    p["b"] = jnp.stack([jnp.stack([u((1, 4 * H)) + u((1, 4 * H)) for _ in range(2)])
                        for _ in range(num_layers - 1)])
    p["fc_w"] = u((2 * H, 1))
    p["fc_b"] = u((1, 1))
    return p


# ----------------------------------------------------------------------------
# Pure-JAX reference (same math) for a correctness check
# ----------------------------------------------------------------------------
def _lstm_dir_ref(x_seq, w_ih_t, w_hh_t, b, reverse):
    T, B, _ = x_seq.shape
    H = w_hh_t.shape[0]
    xs = x_seq[::-1] if reverse else x_seq

    def step(carry, x_t):
        h, c = carry
        gates = x_t @ w_ih_t + h @ w_hh_t + b
        i = jax.nn.sigmoid(gates[:, :H])
        f = jax.nn.sigmoid(gates[:, H:2 * H])
        g = jnp.tanh(gates[:, 2 * H:3 * H])
        o = jax.nn.sigmoid(gates[:, 3 * H:])
        c = f * c + i * g
        h = o * jnp.tanh(c)
        return (h, c), h

    init = (jnp.zeros((B, H), jnp.float32), jnp.zeros((B, H), jnp.float32))
    _, hs = lax.scan(step, init, xs)
    return hs[::-1] if reverse else hs


def attention_rnn_reference(tokens, params):
    x = jnp.take(params["embedding"], tokens, axis=0).transpose(1, 0, 2)  # (T,B,E)
    layer_in = x
    hf = hb = None
    for layer in range(4):
        if layer == 0:
            w_ih, w_hh, b = params["w_ih0"], params["w_hh0"], params["b0"]
        else:
            w_ih = params["w_ih"][layer - 1]
            w_hh = params["w_hh"][layer - 1]
            b = params["b"][layer - 1]
        hf = _lstm_dir_ref(layer_in, w_ih[0], w_hh[0], b[0], reverse=False)
        hb = _lstm_dir_ref(layer_in, w_ih[1], w_hh[1], b[1], reverse=True)
        layer_in = jnp.concatenate([hf, hb], axis=-1)
    outputs = layer_in                                        # (T, B, 2H)
    merged = jnp.concatenate([hf[-1], hb[0]], axis=-1)        # (B, 2H)
    scores = jnp.einsum("tbk,bk->bt", outputs, merged)        # (B, T)
    attn = jax.nn.softmax(scores, axis=1)
    new_hidden = jnp.einsum("tbk,bt->bk", outputs, attn)      # (B, 2H)
    lv = new_hidden @ params["fc_w"] + params["fc_b"]
    return jax.nn.sigmoid(lv)[:, 0]


if __name__ == "__main__":
    # Small shapes consistent with the module's forward:
    # tokens (batch=2, seq=8), embedding_dims=16, e_hidden_dims=32, nuc_pair_size=4
    nuc_pair_size, E, T, H, B = 4, 16, 8, 32, 2
    vocab = nuc_pair_size + 1

    key = jax.random.PRNGKey(0)
    pkey, tkey = jax.random.split(key)
    params = init_params(pkey, vocab, E, H)
    tokens = jax.random.randint(tkey, (B, T), 0, vocab, dtype=jnp.int32)

    out = jax.block_until_ready(attention_rnn_forward(tokens, params))
    ref = jax.block_until_ready(attention_rnn_reference(tokens, params))

    assert out.shape == (B,)
    np.testing.assert_allclose(np.asarray(out), np.asarray(ref), atol=2e-3, rtol=2e-3)
    print("KERNEL_OK")
</pallas_src>

<mosaic_0001>
module attributes {stable_mosaic.version = 11 : i64} {
  func.func @lstm_attn_kernel(%arg0: memref<64x16xf32, #tpu.memory_space<vmem>>, %arg1: memref<16x256xf32, #tpu.memory_space<vmem>>, %arg2: memref<3x64x256xf32, #tpu.memory_space<vmem>>, %arg3: memref<4x64x256xf32, #tpu.memory_space<vmem>>, %arg4: memref<4x1x256xf32, #tpu.memory_space<vmem>>, %arg5: memref<1x64xf32, #tpu.memory_space<vmem>>, %arg6: memref<1x1xf32, #tpu.memory_space<vmem>>, %arg7: memref<8x1xf32, #tpu.memory_space<vmem>>, %arg8: memref<64x256xf32, #tpu.memory_space<vmem>>, %arg9: memref<64x64xf32, #tpu.memory_space<vmem>>) attributes {dimension_semantics = [], scalar_prefetch = 0 : i64, scratch_operands = 2 : i64, tpu.core_type = #tpu.core_type<tc>} {
    %0 = tpu.iota {dimensions = array<i32: 1>} : vector<1x256xi32>
    %c64_i32 = arith.constant 64 : i32
    %c0_i32 = arith.constant 0 : i32
    %1 = arith.cmpi eq, %c64_i32, %c0_i32 : i32
    %c1_i32 = arith.constant 1 : i32
    %2 = arith.select %1, %c1_i32, %c64_i32 : i32
    %3 = vector.broadcast %2 : i32 to vector<1x256xi32>
    %4 = arith.remsi %0, %3 : vector<1x256xi32>
    %c0_i32_0 = arith.constant 0 : i32
    %5 = vector.broadcast %c0_i32_0 : i32 to vector<1x256xi32>
    %6 = arith.cmpi ne, %4, %5 : vector<1x256xi32>
    %c0_i32_1 = arith.constant 0 : i32
    %7 = vector.broadcast %c0_i32_1 : i32 to vector<1x256xi32>
    %8 = arith.cmpi slt, %4, %7 : vector<1x256xi32>
    %c0_i32_2 = arith.constant 0 : i32
    %9 = arith.cmpi slt, %2, %c0_i32_2 : i32
    %10 = vector.broadcast %9 : i1 to vector<1x256xi1>
    %11 = vector.broadcast %10 : vector<1x256xi1> to vector<1x256xi1>
    %12 = arith.xori %8, %11 : vector<1x256xi1>
    %13 = arith.andi %12, %6 : vector<1x256xi1>
    %14 = vector.broadcast %2 : i32 to vector<1x256xi32>
    %15 = arith.addi %4, %14 : vector<1x256xi32>
    %16 = arith.select %13, %15, %4 : vector<1x256xi1>, vector<1x256xi32>
    %c32_i32 = arith.constant 32 : i32
    %17 = vector.broadcast %c32_i32 : i32 to vector<1x256xi32>
    %18 = arith.cmpi slt, %16, %17 : vector<1x256xi32>
    %c128_i32 = arith.constant 128 : i32
    %19 = vector.broadcast %c128_i32 : i32 to vector<1x256xi32>
    %20 = arith.cmpi sge, %0, %19 : vector<1x256xi32>
    %c192_i32 = arith.constant 192 : i32
    %21 = vector.broadcast %c192_i32 : i32 to vector<1x256xi32>
    %22 = arith.cmpi slt, %0, %21 : vector<1x256xi32>
    %23 = arith.andi %20, %22 : vector<1x256xi1>
    %cst = arith.constant 1.000000e+00 : f32
    %cst_3 = arith.constant 5.000000e-01 : f32
    %24 = vector.broadcast %cst : f32 to vector<1x256xf32>
    %25 = vector.broadcast %cst_3 : f32 to vector<1x256xf32>
    %26 = arith.select %23, %24, %25 : vector<1x256xi1>, vector<1x256xf32>
    %cst_4 = arith.constant 1.000000e+00 : f32
    %27 = vector.broadcast %cst_4 : f32 to vector<1x256xf32>
    %28 = arith.subf %27, %26 : vector<1x256xf32>
    %29 = tpu.iota {dimensions = array<i32: 1>} : vector<1x64xi32>
    %c32_i32_5 = arith.constant 32 : i32
    %30 = vector.broadcast %c32_i32_5 : i32 to vector<1x64xi32>
    %31 = arith.cmpi slt, %29, %30 : vector<1x64xi32>
    %c0 = arith.constant 0 : index
    %c0_6 = arith.constant 0 : index
    %32 = vector.load %arg0[%c0, %c0_6] : memref<64x16xf32, #tpu.memory_space<vmem>>, vector<64x16xf32>
    %c0_7 = arith.constant 0 : index
    %c0_8 = arith.constant 0 : index
    %33 = vector.load %arg1[%c0_7, %c0_8] : memref<16x256xf32, #tpu.memory_space<vmem>>, vector<16x256xf32>
    %cst_9 = arith.constant dense<0.000000e+00> : vector<64x256xf32>
    %34 = tpu.matmul %32, %33, %cst_9 {dimension_numbers = #tpu.dot_dimension_numbers<[1], [0], [0], [1], [0, 0, 1, 1], [], []>} : vector<64x16xf32>, vector<16x256xf32>, vector<64x256xf32> -> vector<64x256xf32>
    %c0_10 = arith.constant 0 : index
    %c0_11 = arith.constant 0 : index
    %c0_12 = arith.constant 0 : index
    %35 = vector.load %arg4[%c0_10, %c0_11, %c0_12] : memref<4x1x256xf32, #tpu.memory_space<vmem>>, vector<1x1x256xf32>
    %36 = vector.shape_cast %35 : vector<1x1x256xf32> to vector<1x256xf32>
    %37 = vector.broadcast %36 : vector<1x256xf32> to vector<64x256xf32>
    %38 = arith.addf %34, %37 : vector<64x256xf32>
    %39 = vector.extract_strided_slice %38 {offsets = [0, 0], sizes = [8, 256], strides = [1, 1]} : vector<64x256xf32> to vector<8x256xf32>
    %40 = vector.extract_strided_slice %38 {offsets = [56, 0], sizes = [8, 256], strides = [1, 1]} : vector<64x256xf32> to vector<8x256xf32>
    %41 = vector.shape_cast %18 : vector<1x256xi1> to vector<1x256xi1>
    %42 = vector.broadcast %41 : vector<1x256xi1> to vector<8x256xi1>
    %43 = arith.select %42, %39, %40 : vector<8x256xi1>, vector<8x256xf32>
    %c0_13 = arith.constant 0 : index
    %c0_14 = arith.constant 0 : index
    %44 = vector.load %arg8[%c0_13, %c0_14] : memref<64x256xf32, #tpu.memory_space<vmem>>, vector<8x256xf32>
    tpu.vector_store %arg8[%c0_13, %c0_14], %43 {strides = array<i32>} : memref<64x256xf32, #tpu.memory_space<vmem>>, vector<8x256xf32>,
    %45 = vector.extract_strided_slice %38 {offsets = [8, 0], sizes = [8, 256], strides = [1, 1]} : vector<64x256xf32> to vector<8x256xf32>
    %46 = vector.extract_strided_slice %38 {offsets = [48, 0], sizes = [8, 256], strides = [1, 1]} : vector<64x256xf32> to vector<8x256xf32>
    %47 = vector.shape_cast %18 : vector<1x256xi1> to vector<1x256xi1>
    %48 = vector.broadcast %47 : vector<1x256xi1> to vector<8x256xi1>
    %49 = arith.select %48, %45, %46 : vector<8x256xi1>, vector<8x256xf32>
    %c8 = arith.constant 8 : index
    %c0_15 = arith.constant 0 : index
    %50 = vector.load %arg8[%c8, %c0_15] : memref<64x256xf32, #tpu.memory_space<vmem>>, vector<8x256xf32>
    tpu.vector_store %arg8[%c8, %c0_15], %49 {strides = array<i32>} : memref<64x256xf32, #tpu.memory_space<vmem>>, vector<8x256xf32>,
    %51 = vector.extract_strided_slice %38 {offsets = [16, 0], sizes = [8, 256], strides = [1, 1]} : vector<64x256xf32> to vector<8x256xf32>
    %52 = vector.extract_strided_slice %38 {offsets = [40, 0], sizes = [8, 256], strides = [1, 1]} : vector<64x256xf32> to vector<8x256xf32>
    %53 = vector.shape_cast %18 : vector<1x256xi1> to vector<1x256xi1>
    %54 = vector.broadcast %53 : vector<1x256xi1> to vector<8x256xi1>
    %55 = arith.select %54, %51, %52 : vector<8x256xi1>, vector<8x256xf32>
    %c16 = arith.constant 16 : index
    %c0_16 = arith.constant 0 : index
    %56 = vector.load %arg8[%c16, %c0_16] : memref<64x256xf32, #tpu.memory_space<vmem>>, vector<8x256xf32>
    tpu.vector_store %arg8[%c16, %c0_16], %55 {strides = array<i32>} : memref<64x256xf32, #tpu.memory_space<vmem>>, vector<8x256xf32>,
    %57 = vector.extract_strided_slice %38 {offsets = [24, 0], sizes = [8, 256], strides = [1, 1]} : vector<64x256xf32> to vector<8x256xf32>
    %58 = vector.extract_strided_slice %38 {offsets = [32, 0], sizes = [8, 256], strides = [1, 1]} : vector<64x256xf32> to vector<8x256xf32>
    %59 = vector.shape_cast %18 : vector<1x256xi1> to vector<1x256xi1>
    %60 = vector.broadcast %59 : vector<1x256xi1> to vector<8x256xi1>
    %61 = arith.select %60, %57, %58 : vector<8x256xi1>, vector<8x256xf32>
    %c24 = arith.constant 24 : index
    %c0_17 = arith.constant 0 : index
    %62 = vector.load %arg8[%c24, %c0_17] : memref<64x256xf32, #tpu.memory_space<vmem>>, vector<8x256xf32>
    tpu.vector_store %arg8[%c24, %c0_17], %61 {strides = array<i32>} : memref<64x256xf32, #tpu.memory_space<vmem>>, vector<8x256xf32>,
    %63 = vector.extract_strided_slice %38 {offsets = [32, 0], sizes = [8, 256], strides = [1, 1]} : vector<64x256xf32> to vector<8x256xf32>
    %64 = vector.extract_strided_slice %38 {offsets = [24, 0], sizes = [8, 256], strides = [1, 1]} : vector<64x256xf32> to vector<8x256xf32>
    %65 = vector.shape_cast %18 : vector<1x256xi1> to vector<1x256xi1>
    %66 = vector.broadcast %65 : vector<1x256xi1> to vector<8x256xi1>
    %67 = arith.select %66, %63, %64 : vector<8x256xi1>, vector<8x256xf32>
    %c32 = arith.constant 32 : index
    %c0_18 = arith.constant 0 : index
    %68 = vector.load %arg8[%c32, %c0_18] : memref<64x256xf32, #tpu.memory_space<vmem>>, vector<8x256xf32>
    tpu.vector_store %arg8[%c32, %c0_18], %67 {strides = array<i32>} : memref<64x256xf32, #tpu.memory_space<vmem>>, vector<8x256xf32>,
    %69 = vector.extract_strided_slice %38 {offsets = [40, 0], sizes = [8, 256], strides = [1, 1]} : vector<64x256xf32> to vector<8x256xf32>
    %70 = vector.extract_strided_slice %38 {offsets = [16, 0], sizes = [8, 256], strides = [1, 1]} : vector<64x256xf32> to vector<8x256xf32>
    %71 = vector.shape_cast %18 : vector<1x256xi1> to vector<1x256xi1>
    %72 = vector.broadcast %71 : vector<1x256xi1> to vector<8x256xi1>
    %73 = arith.select %72, %69, %70 : vector<8x256xi1>, vector<8x256xf32>
    %c40 = arith.constant 40 : index
    %c0_19 = arith.constant 0 : index
    %74 = vector.load %arg8[%c40, %c0_19] : memref<64x256xf32, #tpu.memory_space<vmem>>, vector<8x256xf32>
    tpu.vector_store %arg8[%c40, %c0_19], %73 {strides = array<i32>} : memref<64x256xf32, #tpu.memory_space<vmem>>, vector<8x256xf32>,
    %75 = vector.extract_strided_slice %38 {offsets = [48, 0], sizes = [8, 256], strides = [1, 1]} : vector<64x256xf32> to vector<8x256xf32>
    %76 = vector.extract_strided_slice %38 {offsets = [8, 0], sizes = [8, 256], strides = [1, 1]} : vector<64x256xf32> to vector<8x256xf32>
    %77 = vector.shape_cast %18 : vector<1x256xi1> to vector<1x256xi1>
    %78 = vector.broadcast %77 : vector<1x256xi1> to vector<8x256xi1>
    %79 = arith.select %78, %75, %76 : vector<8x256xi1>, vector<8x256xf32>
    %c48 = arith.constant 48 : index
    %c0_20 = arith.constant 0 : index
    %80 = vector.load %arg8[%c48, %c0_20] : memref<64x256xf32, #tpu.memory_space<vmem>>, vector<8x256xf32>
    tpu.vector_store %arg8[%c48, %c0_20], %79 {strides = array<i32>} : memref<64x256xf32, #tpu.memory_space<vmem>>, vector<8x256xf32>,
    %81 = vector.extract_strided_slice %38 {offsets = [56, 0], sizes = [8, 256], strides = [1, 1]} : vector<64x256xf32> to vector<8x256xf32>
    %82 = vector.extract_strided_slice %38 {offsets = [0, 0], sizes = [8, 256], strides = [1, 1]} : vector<64x256xf32> to vector<8x256xf32>
    %83 = vector.shape_cast %18 : vector<1x256xi1> to vector<1x256xi1>
    %84 = vector.broadcast %83 : vector<1x256xi1> to vector<8x256xi1>
    %85 = arith.select %84, %81, %82 : vector<8x256xi1>, vector<8x256xf32>
    %c56 = arith.constant 56 : index
    %c0_21 = arith.constant 0 : index
    %86 = vector.load %arg8[%c56, %c0_21] : memref<64x256xf32, #tpu.memory_space<vmem>>, vector<8x256xf32>
    tpu.vector_store %arg8[%c56, %c0_21], %85 {strides = array<i32>} : memref<64x256xf32, #tpu.memory_space<vmem>>, vector<8x256xf32>,
    %c0_22 = arith.constant 0 : index
    %c0_23 = arith.constant 0 : index
    %c0_24 = arith.constant 0 : index
    %87 = vector.load %arg3[%c0_22, %c0_23, %c0_24] : memref<4x64x256xf32, #tpu.memory_space<vmem>>, vector<1x64x256xf32>
    %88 = vector.shape_cast %87 : vector<1x64x256xf32> to vector<64x256xf32>
    %cst_25 = arith.constant 0.000000e+00 : f32
    %89 = vector.broadcast %cst_25 : f32 to vector<8x64xf32>
    %cst_26 = arith.constant 0.000000e+00 : f32
    %90 = vector.broadcast %cst_26 : f32 to vector<8x64xf32>
    %c0_27 = arith.constant 0 : index
    %c0_28 = arith.constant 0 : index
    %91 = vector.load %arg8[%c0_27, %c0_28] : memref<64x256xf32, #tpu.memory_space<vmem>>, vector<8x256xf32>
    %cst_29 = arith.constant dense<0.000000e+00> : vector<8x256xf32>
    %92 = tpu.matmul %89, %88, %cst_29 {dimension_numbers = #tpu.dot_dimension_numbers<[1], [0], [0], [1], [0, 0, 1, 1], [], []>} : vector<8x64xf32>, vector<64x256xf32>, vector<8x256xf32> -> vector<8x256xf32>
    %93 = arith.addf %91, %92 : vector<8x256xf32>
    %94 = vector.broadcast %26 : vector<1x256xf32> to vector<8x256xf32>
    %95 = arith.mulf %93, %94 : vector<8x256xf32>
    %96 = math.tanh %95 : vector<8x256xf32>
    %97 = vector.broadcast %26 : vector<1x256xf32> to vector<8x256xf32>
    %98 = arith.mulf %96, %97 : vector<8x256xf32>
    %99 = vector.broadcast %28 : vector<1x256xf32> to vector<8x256xf32>
    %100 = arith.addf %98, %99 : vector<8x256xf32>
    %101 = vector.extract_strided_slice %100 {offsets = [0, 0], sizes = [8, 64], strides = [1, 1]} : vector<8x256xf32> to vector<8x64xf32>
    %102 = vector.extract_strided_slice %100 {offsets = [0, 64], sizes = [8, 64], strides = [1, 1]} : vector<8x256xf32> to vector<8x64xf32>
    %103 = vector.extract_strided_slice %100 {offsets = [0, 128], sizes = [8, 64], strides = [1, 1]} : vector<8x256xf32> to vector<8x64xf32>
    %104 = vector.extract_strided_slice %100 {offsets = [0, 192], sizes = [8, 64], strides = [1, 1]} : vector<8x256xf32> to vector<8x64xf32>
    %105 = arith.mulf %102, %90 : vector<8x64xf32>
    %106 = arith.mulf %101, %103 : vector<8x64xf32>
    %107 = arith.addf %105, %106 : vector<8x64xf32>
    %108 = math.tanh %107 : vector<8x64xf32>
    %109 = arith.mulf %104, %108 : vector<8x64xf32>
    %110 = vector.extract_strided_slice %109 {offsets = [0, 0], sizes = [8, 32], strides = [1, 1]} : vector<8x64xf32> to vector<8x32xf32>
    %c0_30 = arith.constant 0 : index
    %c0_31 = arith.constant 0 : index
    %111 = vector.load %arg9[%c0_30, %c0_31] : memref<64x64xf32, #tpu.memory_space<vmem>>, vector<8x32xf32>
    tpu.vector_store %arg9[%c0_30, %c0_31], %110 {strides = array<i32>} : memref<64x64xf32, #tpu.memory_space<vmem>>, vector<8x32xf32>,
    %112 = vector.extract_strided_slice %109 {offsets = [0, 32], sizes = [8, 32], strides = [1, 1]} : vector<8x64xf32> to vector<8x32xf32>
    %c56_32 = arith.constant 56 : index
    %c32_33 = arith.constant 32 : index
    %113 = vector.load %arg9[%c56_32, %c32_33] : memref<64x64xf32, #tpu.memory_space<vmem>>, vector<8x32xf32>
    tpu.vector_store %arg9[%c56_32, %c32_33], %112 {strides = array<i32>} : memref<64x64xf32, #tpu.memory_space<vmem>>, vector<8x32xf32>,
    %c8_34 = arith.constant 8 : index
    %c0_35 = arith.constant 0 : index
    %114 = vector.load %arg8[%c8_34, %c0_35] : memref<64x256xf32, #tpu.memory_space<vmem>>, vector<8x256xf32>
    %cst_36 = arith.constant dense<0.000000e+00> : vector<8x256xf32>
    %115 = tpu.matmul %109, %88, %cst_36 {dimension_numbers = #tpu.dot_dimension_numbers<[1], [0], [0], [1], [0, 0, 1, 1], [], []>} : vector<8x64xf32>, vector<64x256xf32>, vector<8x256xf32> -> vector<8x256xf32>
    %116 = arith.addf %114, %115 : vector<8x256xf32>
    %117 = vector.broadcast %26 : vector<1x256xf32> to vector<8x256xf32>
    %118 = arith.mulf %116, %117 : vector<8x256xf32>
    %119 = math.tanh %118 : vector<8x256xf32>
    %120 = vector.broadcast %26 : vector<1x256xf32> to vector<8x256xf32>
    %121 = arith.mulf %119, %120 : vector<8x256xf32>
    %122 = vector.broadcast %28 : vector<1x256xf32> to vector<8x256xf32>
    %123 = arith.addf %121, %122 : vector<8x256xf32>
    %124 = vector.extract_strided_slice %123 {offsets = [0, 0], sizes = [8, 64], strides = [1, 1]} : vector<8x256xf32> to vector<8x64xf32>
    %125 = vector.extract_strided_slice %123 {offsets = [0, 64], sizes = [8, 64], strides = [1, 1]} : vector<8x256xf32> to vector<8x64xf32>
    %126 = vector.extract_strided_slice %123 {offsets = [0, 128], sizes = [8, 64], strides = [1, 1]} : vector<8x256xf32> to vector<8x64xf32>
    %127 = vector.extract_strided_slice %123 {offsets = [0, 192], sizes = [8, 64], strides = [1, 1]} : vector<8x256xf32> to vector<8x64xf32>
    %128 = arith.mulf %125, %107 : vector<8x64xf32>
    %129 = arith.mulf %124, %126 : vector<8x64xf32>
    %130 = arith.addf %128, %129 : vector<8x64xf32>
    %131 = math.tanh %130 : vector<8x64xf32>
    %132 = arith.mulf %127, %131 : vector<8x64xf32>
    %133 = vector.extract_strided_slice %132 {offsets = [0, 0], sizes = [8, 32], strides = [1, 1]} : vector<8x64xf32> to vector<8x32xf32>
    %c8_37 = arith.constant 8 : index
    %c0_38 = arith.constant 0 : index
    %134 = vector.load %arg9[%c8_37, %c0_38] : memref<64x64xf32, #tpu.memory_space<vmem>>, vector<8x32xf32>
    tpu.vector_store %arg9[%c8_37, %c0_38], %133 {strides = array<i32>} : memref<64x64xf32, #tpu.memory_space<vmem>>, vector<8x32xf32>,
    %135 = vector.extract_strided_slice %132 {offsets = [0, 32], sizes = [8, 32], strides = [1, 1]} : vector<8x64xf32> to vector<8x32xf32>
    %c48_39 = arith.constant 48 : index
    %c32_40 = arith.constant 32 : index
    %136 = vector.load %arg9[%c48_39, %c32_40] : memref<64x64xf32, #tpu.memory_space<vmem>>, vector<8x32xf32>
    tpu.vector_store %arg9[%c48_39, %c32_40], %135 {strides = array<i32>} : memref<64x64xf32, #tpu.memory_space<vmem>>, vector<8x32xf32>,
    %c16_41 = arith.constant 16 : index
    %c0_42 = arith.constant 0 : index
    %137 = vector.load %arg8[%c16_41, %c0_42] : memref<64x256xf32, #tpu.memory_space<vmem>>, vector<8x256xf32>
    %cst_43 = arith.constant dense<0.000000e+00> : vector<8x256xf32>
    %138 = tpu.matmul %132, %88, %cst_43 {dimension_numbers = #tpu.dot_dimension_numbers<[1], [0], [0], [1], [0, 0, 1, 1], [], []>} : vector<8x64xf32>, vector<64x256xf32>, vector<8x256xf32> -> vector<8x256xf32>
    %139 = arith.addf %137, %138 : vector<8x256xf32>
    %140 = vector.broadcast %26 : vector<1x256xf32> to vector<8x256xf32>
    %141 = arith.mulf %139, %140 : vector<8x256xf32>
    %142 = math.tanh %141 : vector<8x256xf32>
    %143 = vector.broadcast %26 : vector<1x256xf32> to vector<8x256xf32>
    %144 = arith.mulf %142, %143 : vector<8x256xf32>
    %145 = vector.broadcast %28 : vector<1x256xf32> to vector<8x256xf32>
    %146 = arith.addf %144, %145 : vector<8x256xf32>
    %147 = vector.extract_strided_slice %146 {offsets = [0, 0], sizes = [8, 64], strides = [1, 1]} : vector<8x256xf32> to vector<8x64xf32>
    %148 = vector.extract_strided_slice %146 {offsets = [0, 64], sizes = [8, 64], strides = [1, 1]} : vector<8x256xf32> to vector<8x64xf32>
    %149 = vector.extract_strided_slice %146 {offsets = [0, 128], sizes = [8, 64], strides = [1, 1]} : vector<8x256xf32> to vector<8x64xf32>
    %150 = vector.extract_strided_slice %146 {offsets = [0, 192], sizes = [8, 64], strides = [1, 1]} : vector<8x256xf32> to vector<8x64xf32>
    %151 = arith.mulf %148, %130 : vector<8x64xf32>
    %152 = arith.mulf %147, %149 : vector<8x64xf32>
    %153 = arith.addf %151, %152 : vector<8x64xf32>
    %154 = math.tanh %153 : vector<8x64xf32>
    %155 = arith.mulf %150, %154 : vector<8x64xf32>
    %156 = vector.extract_strided_slice %155 {offsets = [0, 0], sizes = [8, 32], strides = [1, 1]} : vector<8x64xf32> to vector<8x32xf32>
    %c16_44 = arith.constant 16 : index
    %c0_45 = arith.constant 0 : index
    %157 = vector.load %arg9[%c16_44, %c0_45] : memref<64x64xf32, #tpu.memory_space<vmem>>, vector<8x32xf32>
    tpu.vector_store %arg9[%c16_44, %c0_45], %156 {strides = array<i32>} : memref<64x64xf32, #tpu.memory_space<vmem>>, vector<8x32xf32>,
    %158 = vector.extract_strided_slice %155 {offsets = [0, 32], sizes = [8, 32], strides = [1, 1]} : vector<8x64xf32> to vector<8x32xf32>
    %c40_46 = arith.constant 40 : index
    %c32_47 = arith.constant 32 : index
    %159 = vector.load %arg9[%c40_46, %c32_47] : memref<64x64xf32, #tpu.memory_space<vmem>>, vector<8x32xf32>
    tpu.vector_store %arg9[%c40_46, %c32_47], %158 {strides = array<i32>} : memref<64x64xf32, #tpu.memory_space<vmem>>, vector<8x32xf32>,
    %c24_48 = arith.constant 24 : index
    %c0_49 = arith.constant 0 : index
    %160 = vector.load %arg8[%c24_48, %c0_49] : memref<64x256xf32, #tpu.memory_space<vmem>>, vector<8x256xf32>
    %cst_50 = arith.constant dense<0.000000e+00> : vector<8x256xf32>
    %161 = tpu.matmul %155, %88, %cst_50 {dimension_numbers = #tpu.dot_dimension_numbers<[1], [0], [0], [1], [0, 0, 1, 1], [], []>} : vector<8x64xf32>, vector<64x256xf32>, vector<8x256xf32> -> vector<8x256xf32>
    %162 = arith.addf %160, %161 : vector<8x256xf32>
    %163 = vector.broadcast %26 : vector<1x256xf32> to vector<8x256xf32>
    %164 = arith.mulf %162, %163 : vector<8x256xf32>
    %165 = math.tanh %164 : vector<8x256xf32>
    %166 = vector.broadcast %26 : vector<1x256xf32> to vector<8x256xf32>
    %167 = arith.mulf %165, %166 : vector<8x256xf32>
    %168 = vector.broadcast %28 : vector<1x256xf32> to vector<8x256xf32>
    %169 = arith.addf %167, %168 : vector<8x256xf32>
    %170 = vector.extract_strided_slice %169 {offsets = [0, 0], sizes = [8, 64], strides = [1, 1]} : vector<8x256xf32> to vector<8x64xf32>
    %171 = vector.extract_strided_slice %169 {offsets = [0, 64], sizes = [8, 64], strides = [1, 1]} : vector<8x256xf32> to vector<8x64xf32>
    %172 = vector.extract_strided_slice %169 {offsets = [0, 128], sizes = [8, 64], strides = [1, 1]} : vector<8x256xf32> to vector<8x64xf32>
    %173 = vector.extract_strided_slice %169 {offsets = [0, 192], sizes = [8, 64], strides = [1, 1]} : vector<8x256xf32> to vector<8x64xf32>
    %174 = arith.mulf %171, %153 : vector<8x64xf32>
    %175 = arith.mulf %170, %172 : vector<8x64xf32>
    %176 = arith.addf %174, %175 : vector<8x64xf32>
    %177 = math.tanh %176 : vector<8x64xf32>
    %178 = arith.mulf %173, %177 : vector<8x64xf32>
    %179 = vector.extract_strided_slice %178 {offsets = [0, 0], sizes = [8, 32], strides = [1, 1]} : vector<8x64xf32> to vector<8x32xf32>
    %c24_51 = arith.constant 24 : index
    %c0_52 = arith.constant 0 : index
    %180 = vector.load %arg9[%c24_51, %c0_52] : memref<64x64xf32, #tpu.memory_space<vmem>>, vector<8x32xf32>
    tpu.vector_store %arg9[%c24_51, %c0_52], %179 {strides = array<i32>} : memref<64x64xf32, #tpu.memory_space<vmem>>, vector<8x32xf32>,
    %181 = vector.extract_strided_slice %178 {offsets = [0, 32], sizes = [8, 32], strides = [1, 1]} : vector<8x64xf32> to vector<8x32xf32>
    %c32_53 = arith.constant 32 : index
    %c32_54 = arith.constant 32 : index
    %182 = vector.load %arg9[%c32_53, %c32_54] : memref<64x64xf32, #tpu.memory_space<vmem>>, vector<8x32xf32>
    tpu.vector_store %arg9[%c32_53, %c32_54], %181 {strides = array<i32>} : memref<64x64xf32, #tpu.memory_space<vmem>>, vector<8x32xf32>,
    %c32_55 = arith.constant 32 : index
    %c0_56 = arith.constant 0 : index
    %183 = vector.load %arg8[%c32_55, %c0_56] : memref<64x256xf32, #tpu.memory_space<vmem>>, vector<8x256xf32>
    %cst_57 = arith.constant dense<0.000000e+00> : vector<8x256xf32>
    %184 = tpu.matmul %178, %88, %cst_57 {dimension_numbers = #tpu.dot_dimension_numbers<[1], [0], [0], [1], [0, 0, 1, 1], [], []>} : vector<8x64xf32>, vector<64x256xf32>, vector<8x256xf32> -> vector<8x256xf32>
    %185 = arith.addf %183, %184 : vector<8x256xf32>
    %186 = vector.broadcast %26 : vector<1x256xf32> to vector<8x256xf32>
    %187 = arith.mulf %185, %186 : vector<8x256xf32>
    %188 = math.tanh %187 : vector<8x256xf32>
    %189 = vector.broadcast %26 : vector<1x256xf32> to vector<8x256xf32>
    %190 = arith.mulf %188, %189 : vector<8x256xf32>
    %191 = vector.broadcast %28 : vector<1x256xf32> to vector<8x256xf32>
    %192 = arith.addf %190, %191 : vector<8x256xf32>
    %193 = vector.extract_strided_slice %192 {offsets = [0, 0], sizes = [8, 64], strides = [1, 1]} : vector<8x256xf32> to vector<8x64xf32>
    %194 = vector.extract_strided_slice %192 {offsets = [0, 64], sizes = [8, 64], strides = [1, 1]} : vector<8x256xf32> to vector<8x64xf32>
    %195 = vector.extract_strided_slice %192 {offsets = [0, 128], sizes = [8, 64], strides = [1, 1]} : vector<8x256xf32> to vector<8x64xf32>
    %196 = vector.extract_strided_slice %192 {offsets = [0, 192], sizes = [8, 64], strides = [1, 1]} : vector<8x256xf32> to vector<8x64xf32>
    %197 = arith.mulf %194, %176 : vector<8x64xf32>
    %198 = arith.mulf %193, %195 : vector<8x64xf32>
    %199 = arith.addf %197, %198 : vector<8x64xf32>
    %200 = math.tanh %199 : vector<8x64xf32>
    %201 = arith.mulf %196, %200 : vector<8x64xf32>
    %202 = vector.extract_strided_slice %201 {offsets = [0, 0], sizes = [8, 32], strides = [1, 1]} : vector<8x64xf32> to vector<8x32xf32>
    %c32_58 = arith.constant 32 : index
    %c0_59 = arith.constant 0 : index
    %203 = vector.load %arg9[%c32_58, %c0_59] : memref<64x64xf32, #tpu.memory_space<vmem>>, vector<8x32xf32>
    tpu.vector_store %arg9[%c32_58, %c0_59], %202 {strides = array<i32>} : memref<64x64xf32, #tpu.memory_space<vmem>>, vector<8x32xf32>,
    %204 = vector.extract_strided_slice %201 {offsets = [0, 32], sizes = [8, 32], strides = [1, 1]} : vector<8x64xf32> to vector<8x32xf32>
    %c24_60 = arith.constant 24 : index
    %c32_61 = arith.constant 32 : index
    %205 = vector.load %arg9[%c24_60, %c32_61] : memref<64x64xf32, #tpu.memory_space<vmem>>, vector<8x32xf32>
    tpu.vector_store %arg9[%c24_60, %c32_61], %204 {strides = array<i32>} : memref<64x64xf32, #tpu.memory_space<vmem>>, vector<8x32xf32>,
    %c40_62 = arith.constant 40 : index
    %c0_63 = arith.constant 0 : index
    %206 = vector.load %arg8[%c40_62, %c0_63] : memref<64x256xf32, #tpu.memory_space<vmem>>, vector<8x256xf32>
    %cst_64 = arith.constant dense<0.000000e+00> : vector<8x256xf32>
    %207 = tpu.matmul %201, %88, %cst_64 {dimension_numbers = #tpu.dot_dimension_numbers<[1], [0], [0], [1], [0, 0, 1, 1], [], []>} : vector<8x64xf32>, vector<64x256xf32>, vector<8x256xf32> -> vector<8x256xf32>
    %208 = arith.addf %206, %207 : vector<8x256xf32>
    %209 = vector.broadcast %26 : vector<1x256xf32> to vector<8x256xf32>
    %210 = arith.mulf %208, %209 : vector<8x256xf32>
    %211 = math.tanh %210 : vector<8x256xf32>
    %212 = vector.broadcast %26 : vector<1x256xf32> to vector<8x256xf32>
    %213 = arith.mulf %211, %212 : vector<8x256xf32>
    %214 = vector.broadcast %28 : vector<1x256xf32> to vector<8x256xf32>
    %215 = arith.addf %213, %214 : vector<8x256xf32>
    %216 = vector.extract_strided_slice %215 {offsets = [0, 0], sizes = [8, 64], strides = [1, 1]} : vector<8x256xf32> to vector<8x64xf32>
    %217 = vector.extract_strided_slice %215 {offsets = [0, 64], sizes = [8, 64], strides = [1, 1]} : vector<8x256xf32> to vector<8x64xf32>
    %218 = vector.extract_strided_slice %215 {offsets = [0, 128], sizes = [8, 64], strides = [1, 1]} : vector<8x256xf32> to vector<8x64xf32>
    %219 = vector.extract_strided_slice %215 {offsets = [0, 192], sizes = [8, 64], strides = [1, 1]} : vector<8x256xf32> to vector<8x64xf32>
    %220 = arith.mulf %217, %199 : vector<8x64xf32>
    %221 = arith.mulf %216, %218 : vector<8x64xf32>
    %222 = arith.addf %220, %221 : vector<8x64xf32>
    %223 = math.tanh %222 : vector<8x64xf32>
    %224 = arith.mulf %219, %223 : vector<8x64xf32>
    %225 = vector.extract_strided_slice %224 {offsets = [0, 0], sizes = [8, 32], strides = [1, 1]} : vector<8x64xf32> to vector<8x32xf32>
    %c40_65 = arith.constant 40 : index
    %c0_66 = arith.constant 0 : index
    %226 = vector.load %arg9[%c40_65, %c0_66] : memref<64x64xf32, #tpu.memory_space<vmem>>, vector<8x32xf32>
    tpu.vector_store %arg9[%c40_65, %c0_66], %225 {strides = array<i32>} : memref<64x64xf32, #tpu.memory_space<vmem>>, vector<8x32xf32>,
    %227 = vector.extract_strided_slice %224 {offsets = [0, 32], sizes = [8, 32], strides = [1, 1]} : vector<8x64xf32> to vector<8x32xf32>
    %c16_67 = arith.constant 16 : index
    %c32_68 = arith.constant 32 : index
    %228 = vector.load %arg9[%c16_67, %c32_68] : memref<64x64xf32, #tpu.memory_space<vmem>>, vector<8x32xf32>
    tpu.vector_store %arg9[%c16_67, %c32_68], %227 {strides = array<i32>} : memref<64x64xf32, #tpu.memory_space<vmem>>, vector<8x32xf32>,
    %c48_69 = arith.constant 48 : index
    %c0_70 = arith.constant 0 : index
    %229 = vector.load %arg8[%c48_69, %c0_70] : memref<64x256xf32, #tpu.memory_space<vmem>>, vector<8x256xf32>
    %cst_71 = arith.constant dense<0.000000e+00> : vector<8x256xf32>
    %230 = tpu.matmul %224, %88, %cst_71 {dimension_numbers = #tpu.dot_dimension_numbers<[1], [0], [0], [1], [0, 0, 1, 1], [], []>} : vector<8x64xf32>, vector<64x256xf32>, vector<8x256xf32> -> vector<8x256xf32>
    %231 = arith.addf %229, %230 : vector<8x256xf32>
    %232 = vector.broadcast %26 : vector<1x256xf32> to vector<8x256xf32>
    %233 = arith.mulf %231, %232 : vector<8x256xf32>
    %234 = math.tanh %233 : vector<8x256xf32>
    %235 = vector.broadcast %26 : vector<1x256xf32> to vector<8x256xf32>
    %236 = arith.mulf %234, %235 : vector<8x256xf32>
    %237 = vector.broadcast %28 : vector<1x256xf32> to vector<8x256xf32>
    %238 = arith.addf %236, %237 : vector<8x256xf32>
    %239 = vector.extract_strided_slice %238 {offsets = [0, 0], sizes = [8, 64], strides = [1, 1]} : vector<8x256xf32> to vector<8x64xf32>
    %240 = vector.extract_strided_slice %238 {offsets = [0, 64], sizes = [8, 64], strides = [1, 1]} : vector<8x256xf32> to vector<8x64xf32>
    %241 = vector.extract_strided_slice %238 {offsets = [0, 128], sizes = [8, 64], strides = [1, 1]} : vector<8x256xf32> to vector<8x64xf32>
    %242 = vector.extract_strided_slice %238 {offsets = [0, 192], sizes = [8, 64], strides = [1, 1]} : vector<8x256xf32> to vector<8x64xf32>
    %243 = arith.mulf %240, %222 : vector<8x64xf32>
    %244 = arith.mulf %239, %241 : vector<8x64xf32>
    %245 = arith.addf %243, %244 : vector<8x64xf32>
    %246 = math.tanh %245 : vector<8x64xf32>
    %247 = arith.mulf %242, %246 : vector<8x64xf32>
    %248 = vector.extract_strided_slice %247 {offsets = [0, 0], sizes = [8, 32], strides = [1, 1]} : vector<8x64xf32> to vector<8x32xf32>
    %c48_72 = arith.constant 48 : index
    %c0_73 = arith.constant 0 : index
    %249 = vector.load %arg9[%c48_72, %c0_73] : memref<64x64xf32, #tpu.memory_space<vmem>>, vector<8x32xf32>
    tpu.vector_store %arg9[%c48_72, %c0_73], %248 {strides = array<i32>} : memref<64x64xf32, #tpu.memory_space<vmem>>, vector<8x32xf32>,
    %250 = vector.extract_strided_slice %247 {offsets = [0, 32], sizes = [8, 32], strides = [1, 1]} : vector<8x64xf32> to vector<8x32xf32>
    %c8_74 = arith.constant 8 : index
    %c32_75 = arith.constant 32 : index
    %251 = vector.load %arg9[%c8_74, %c32_75] : memref<64x64xf32, #tpu.memory_space<vmem>>, vector<8x32xf32>
    tpu.vector_store %arg9[%c8_74, %c32_75], %250 {strides = array<i32>} : memref<64x64xf32, #tpu.memory_space<vmem>>, vector<8x32xf32>,
    %c56_76 = arith.constant 56 : index
    %c0_77 = arith.constant 0 : index
    %252 = vector.load %arg8[%c56_76, %c0_77] : memref<64x256xf32, #tpu.memory_space<vmem>>, vector<8x256xf32>
    %cst_78 = arith.constant dense<0.000000e+00> : vector<8x256xf32>
    %253 = tpu.matmul %247, %88, %cst_78 {dimension_numbers = #tpu.dot_dimension_numbers<[1], [0], [0], [1], [0, 0, 1, 1], [], []>} : vector<8x64xf32>, vector<64x256xf32>, vector<8x256xf32> -> vector<8x256xf32>
    %254 = arith.addf %252, %253 : vector<8x256xf32>
    %255 = vector.broadcast %26 : vector<1x256xf32> to vector<8x256xf32>
    %256 = arith.mulf %254, %255 : vector<8x256xf32>
    %257 = math.tanh %256 : vector<8x256xf32>
    %258 = vector.broadcast %26 : vector<1x256xf32> to vector<8x256xf32>
    %259 = arith.mulf %257, %258 : vector<8x256xf32>
    %260 = vector.broadcast %28 : vector<1x256xf32> to vector<8x256xf32>
    %261 = arith.addf %259, %260 : vector<8x256xf32>
    %262 = vector.extract_strided_slice %261 {offsets = [0, 0], sizes = [8, 64], strides = [1, 1]} : vector<8x256xf32> to vector<8x64xf32>
    %263 = vector.extract_strided_slice %261 {offsets = [0, 64], sizes = [8, 64], strides = [1, 1]} : vector<8x256xf32> to vector<8x64xf32>
    %264 = vector.extract_strided_slice %261 {offsets = [0, 128], sizes = [8, 64], strides = [1, 1]} : vector<8x256xf32> to vector<8x64xf32>
    %265 = vector.extract_strided_slice %261 {offsets = [0, 192], sizes = [8, 64], strides = [1, 1]} : vector<8x256xf32> to vector<8x64xf32>
    %266 = arith.mulf %263, %245 : vector<8x64xf32>
    %267 = arith.mulf %262, %264 : vector<8x64xf32>
    %268 = arith.addf %266, %267 : vector<8x64xf32>
    %269 = math.tanh %268 : vector<8x64xf32>
    %270 = arith.mulf %265, %269 : vector<8x64xf32>
    %271 = vector.extract_strided_slice %270 {offsets = [0, 0], sizes = [8, 32], strides = [1, 1]} : vector<8x64xf32> to vector<8x32xf32>
    %c56_79 = arith.constant 56 : index
    %c0_80 = arith.constant 0 : index
    %272 = vector.load %arg9[%c56_79, %c0_80] : memref<64x64xf32, #tpu.memory_space<vmem>>, vector<8x32xf32>
    tpu.vector_store %arg9[%c56_79, %c0_80], %271 {strides = array<i32>} : memref<64x64xf32, #tpu.memory_space<vmem>>, vector<8x32xf32>,
    %273 = vector.extract_strided_slice %270 {offsets = [0, 32], sizes = [8, 32], strides = [1, 1]} : vector<8x64xf32> to vector<8x32xf32>
    %c0_81 = arith.constant 0 : index
    %c32_82 = arith.constant 32 : index
    %274 = vector.load %arg9[%c0_81, %c32_82] : memref<64x64xf32, #tpu.memory_space<vmem>>, vector<8x32xf32>
    tpu.vector_store %arg9[%c0_81, %c32_82], %273 {strides = array<i32>} : memref<64x64xf32, #tpu.memory_space<vmem>>, vector<8x32xf32>,
    %c0_83 = arith.constant 0 : index
    %c0_84 = arith.constant 0 : index
    %275 = vector.load %arg9[%c0_83, %c0_84] : memref<64x64xf32, #tpu.memory_space<vmem>>, vector<64x64xf32>
    %c0_85 = arith.constant 0 : index
    %c0_86 = arith.constant 0 : index
    %c0_87 = arith.constant 0 : index
    %276 = vector.load %arg2[%c0_85, %c0_86, %c0_87] : memref<3x64x256xf32, #tpu.memory_space<vmem>>, vector<1x64x256xf32>
    %277 = vector.shape_cast %276 : vector<1x64x256xf32> to vector<64x256xf32>
    %cst_88 = arith.constant dense<0.000000e+00> : vector<64x256xf32>
    %278 = tpu.matmul %275, %277, %cst_88 {dimension_numbers = #tpu.dot_dimension_numbers<[1], [0], [0], [1], [0, 0, 1, 1], [], []>} : vector<64x64xf32>, vector<64x256xf32>, vector<64x256xf32> -> vector<64x256xf32>
    %c1 = arith.constant 1 : index
    %c0_89 = arith.constant 0 : index
    %c0_90 = arith.constant 0 : index
    %279 = vector.load %arg4[%c1, %c0_89, %c0_90] : memref<4x1x256xf32, #tpu.memory_space<vmem>>, vector<1x1x256xf32>
    %280 = vector.shape_cast %279 : vector<1x1x256xf32> to vector<1x256xf32>
    %281 = vector.broadcast %280 : vector<1x256xf32> to vector<64x256xf32>
    %282 = arith.addf %278, %281 : vector<64x256xf32>
    %283 = vector.extract_strided_slice %282 {offsets = [0, 0], sizes = [8, 256], strides = [1, 1]} : vector<64x256xf32> to vector<8x256xf32>
    %284 = vector.extract_strided_slice %282 {offsets = [56, 0], sizes = [8, 256], strides = [1, 1]} : vector<64x256xf32> to vector<8x256xf32>
    %285 = vector.shape_cast %18 : vector<1x256xi1> to vector<1x256xi1>
    %286 = vector.broadcast %285 : vector<1x256xi1> to vector<8x256xi1>
    %287 = arith.select %286, %283, %284 : vector<8x256xi1>, vector<8x256xf32>
    %c0_91 = arith.constant 0 : index
    %c0_92 = arith.constant 0 : index
    %288 = vector.load %arg8[%c0_91, %c0_92] : memref<64x256xf32, #tpu.memory_space<vmem>>, vector<8x256xf32>
    tpu.vector_store %arg8[%c0_91, %c0_92], %287 {strides = array<i32>} : memref<64x256xf32, #tpu.memory_space<vmem>>, vector<8x256xf32>,
    %289 = vector.extract_strided_slice %282 {offsets = [8, 0], sizes = [8, 256], strides = [1, 1]} : vector<64x256xf32> to vector<8x256xf32>
    %290 = vector.extract_strided_slice %282 {offsets = [48, 0], sizes = [8, 256], strides = [1, 1]} : vector<64x256xf32> to vector<8x256xf32>
    %291 = vector.shape_cast %18 : vector<1x256xi1> to vector<1x256xi1>
    %292 = vector.broadcast %291 : vector<1x256xi1> to vector<8x256xi1>
    %293 = arith.select %292, %289, %290 : vector<8x256xi1>, vector<8x256xf32>
    %c8_93 = arith.constant 8 : index
    %c0_94 = arith.constant 0 : index
    %294 = vector.load %arg8[%c8_93, %c0_94] : memref<64x256xf32, #tpu.memory_space<vmem>>, vector<8x256xf32>
    tpu.vector_store %arg8[%c8_93, %c0_94], %293 {strides = array<i32>} : memref<64x256xf32, #tpu.memory_space<vmem>>, vector<8x256xf32>,
    %295 = vector.extract_strided_slice %282 {offsets = [16, 0], sizes = [8, 256], strides = [1, 1]} : vector<64x256xf32> to vector<8x256xf32>
    %296 = vector.extract_strided_slice %282 {offsets = [40, 0], sizes = [8, 256], strides = [1, 1]} : vector<64x256xf32> to vector<8x256xf32>
    %297 = vector.shape_cast %18 : vector<1x256xi1> to vector<1x256xi1>
    %298 = vector.broadcast %297 : vector<1x256xi1> to vector<8x256xi1>
    %299 = arith.select %298, %295, %296 : vector<8x256xi1>, vector<8x256xf32>
    %c16_95 = arith.constant 16 : index
    %c0_96 = arith.constant 0 : index
    %300 = vector.load %arg8[%c16_95, %c0_96] : memref<64x256xf32, #tpu.memory_space<vmem>>, vector<8x256xf32>
    tpu.vector_store %arg8[%c16_95, %c0_96], %299 {strides = array<i32>} : memref<64x256xf32, #tpu.memory_space<vmem>>, vector<8x256xf32>,
    %301 = vector.extract_strided_slice %282 {offsets = [24, 0], sizes = [8, 256], strides = [1, 1]} : vector<64x256xf32> to vector<8x256xf32>
    %302 = vector.extract_strided_slice %282 {offsets = [32, 0], sizes = [8, 256], strides = [1, 1]} : vector<64x256xf32> to vector<8x256xf32>
    %303 = vector.shape_cast %18 : vector<1x256xi1> to vector<1x256xi1>
    %304 = vector.broadcast %303 : vector<1x256xi1> to vector<8x256xi1>
    %305 = arith.select %304, %301, %302 : vector<8x256xi1>, vector<8x256xf32>
    %c24_97 = arith.constant 24 : index
    %c0_98 = arith.constant 0 : index
    %306 = vector.load %arg8[%c24_97, %c0_98] : memref<64x256xf32, #tpu.memory_space<vmem>>, vector<8x256xf32>
    tpu.vector_store %arg8[%c24_97, %c0_98], %305 {strides = array<i32>} : memref<64x256xf32, #tpu.memory_space<vmem>>, vector<8x256xf32>,
    %307 = vector.extract_strided_slice %282 {offsets = [32, 0], sizes = [8, 256], strides = [1, 1]} : vector<64x256xf32> to vector<8x256xf32>
    %308 = vector.extract_strided_slice %282 {offsets = [24, 0], sizes = [8, 256], strides = [1, 1]} : vector<64x256xf32> to vector<8x256xf32>
    %309 = vector.shape_cast %18 : vector<1x256xi1> to vector<1x256xi1>
    %310 = vector.broadcast %309 : vector<1x256xi1> to vector<8x256xi1>
    %311 = arith.select %310, %307, %308 : vector<8x256xi1>, vector<8x256xf32>
    %c32_99 = arith.constant 32 : index
    %c0_100 = arith.constant 0 : index
    %312 = vector.load %arg8[%c32_99, %c0_100] : memref<64x256xf32, #tpu.memory_space<vmem>>, vector<8x256xf32>
    tpu.vector_store %arg8[%c32_99, %c0_100], %311 {strides = array<i32>} : memref<64x256xf32, #tpu.memory_space<vmem>>, vector<8x256xf32>,
    %313 = vector.extract_strided_slice %282 {offsets = [40, 0], sizes = [8, 256], strides = [1, 1]} : vector<64x256xf32> to vector<8x256xf32>
    %314 = vector.extract_strided_slice %282 {offsets = [16, 0], sizes = [8, 256], strides = [1, 1]} : vector<64x256xf32> to vector<8x256xf32>
    %315 = vector.shape_cast %18 : vector<1x256xi1> to vector<1x256xi1>
    %316 = vector.broadcast %315 : vector<1x256xi1> to vector<8x256xi1>
    %317 = arith.select %316, %313, %314 : vector<8x256xi1>, vector<8x256xf32>
    %c40_101 = arith.constant 40 : index
    %c0_102 = arith.constant 0 : index
    %318 = vector.load %arg8[%c40_101, %c0_102] : memref<64x256xf32, #tpu.memory_space<vmem>>, vector<8x256xf32>
    tpu.vector_store %arg8[%c40_101, %c0_102], %317 {strides = array<i32>} : memref<64x256xf32, #tpu.memory_space<vmem>>, vector<8x256xf32>,
    %319 = vector.extract_strided_slice %282 {offsets = [48, 0], sizes = [8, 256], strides = [1, 1]} : vector<64x256xf32> to vector<8x256xf32>
    %320 = vector.extract_strided_slice %282 {offsets = [8, 0], sizes = [8, 256], strides = [1, 1]} : vector<64x256xf32> to vector<8x256xf32>
    %321 = vector.shape_cast %18 : vector<1x256xi1> to vector<1x256xi1>
    %322 = vector.broadcast %321 : vector<1x256xi1> to vector<8x256xi1>
    %323 = arith.select %322, %319, %320 : vector<8x256xi1>, vector<8x256xf32>
    %c48_103 = arith.constant 48 : index
    %c0_104 = arith.constant 0 : index
    %324 = vector.load %arg8[%c48_103, %c0_104] : memref<64x256xf32, #tpu.memory_space<vmem>>, vector<8x256xf32>
    tpu.vector_store %arg8[%c48_103, %c0_104], %323 {strides = array<i32>} : memref<64x256xf32, #tpu.memory_space<vmem>>, vector<8x256xf32>,
    %325 = vector.extract_strided_slice %282 {offsets = [56, 0], sizes = [8, 256], strides = [1, 1]} : vector<64x256xf32> to vector<8x256xf32>
    %326 = vector.extract_strided_slice %282 {offsets = [0, 0], sizes = [8, 256], strides = [1, 1]} : vector<64x256xf32> to vector<8x256xf32>
    %327 = vector.shape_cast %18 : vector<1x256xi1> to vector<1x256xi1>
    %328 = vector.broadcast %327 : vector<1x256xi1> to vector<8x256xi1>
    %329 = arith.select %328, %325, %326 : vector<8x256xi1>, vector<8x256xf32>
    %c56_105 = arith.constant 56 : index
    %c0_106 = arith.constant 0 : index
    %330 = vector.load %arg8[%c56_105, %c0_106] : memref<64x256xf32, #tpu.memory_space<vmem>>, vector<8x256xf32>
    tpu.vector_store %arg8[%c56_105, %c0_106], %329 {strides = array<i32>} : memref<64x256xf32, #tpu.memory_space<vmem>>, vector<8x256xf32>,
    %c1_107 = arith.constant 1 : index
    %c0_108 = arith.constant 0 : index
    %c0_109 = arith.constant 0 : index
    %331 = vector.load %arg3[%c1_107, %c0_108, %c0_109] : memref<4x64x256xf32, #tpu.memory_space<vmem>>, vector<1x64x256xf32>
    %332 = vector.shape_cast %331 : vector<1x64x256xf32> to vector<64x256xf32>
    %cst_110 = arith.constant 0.000000e+00 : f32
    %333 = vector.broadcast %cst_110 : f32 to vector<8x64xf32>
    %cst_111 = arith.constant 0.000000e+00 : f32
    %334 = vector.broadcast %cst_111 : f32 to vector<8x64xf32>
    %c0_112 = arith.constant 0 : index
    %c0_113 = arith.constant 0 : index
    %335 = vector.load %arg8[%c0_112, %c0_113] : memref<64x256xf32, #tpu.memory_space<vmem>>, vector<8x256xf32>
    %cst_114 = arith.constant dense<0.000000e+00> : vector<8x256xf32>
    %336 = tpu.matmul %333, %332, %cst_114 {dimension_numbers = #tpu.dot_dimension_numbers<[1], [0], [0], [1], [0, 0, 1, 1], [], []>} : vector<8x64xf32>, vector<64x256xf32>, vector<8x256xf32> -> vector<8x256xf32>
    %337 = arith.addf %335, %336 : vector<8x256xf32>
    %338 = vector.broadcast %26 : vector<1x256xf32> to vector<8x256xf32>
    %339 = arith.mulf %337, %338 : vector<8x256xf32>
    %340 = math.tanh %339 : vector<8x256xf32>
    %341 = vector.broadcast %26 : vector<1x256xf32> to vector<8x256xf32>
    %342 = arith.mulf %340, %341 : vector<8x256xf32>
    %343 = vector.broadcast %28 : vector<1x256xf32> to vector<8x256xf32>
    %344 = arith.addf %342, %343 : vector<8x256xf32>
    %345 = vector.extract_strided_slice %344 {offsets = [0, 0], sizes = [8, 64], strides = [1, 1]} : vector<8x256xf32> to vector<8x64xf32>
    %346 = vector.extract_strided_slice %344 {offsets = [0, 64], sizes = [8, 64], strides = [1, 1]} : vector<8x256xf32> to vector<8x64xf32>
    %347 = vector.extract_strided_slice %344 {offsets = [0, 128], sizes = [8, 64], strides = [1, 1]} : vector<8x256xf32> to vector<8x64xf32>
    %348 = vector.extract_strided_slice %344 {offsets = [0, 192], sizes = [8, 64], strides = [1, 1]} : vector<8x256xf32> to vector<8x64xf32>
    %349 = arith.mulf %346, %334 : vector<8x64xf32>
    %350 = arith.mulf %345, %347 : vector<8x64xf32>
    %351 = arith.addf %349, %350 : vector<8x64xf32>
    %352 = math.tanh %351 : vector<8x64xf32>
    %353 = arith.mulf %348, %352 : vector<8x64xf32>
    %354 = vector.extract_strided_slice %353 {offsets = [0, 0], sizes = [8, 32], strides = [1, 1]} : vector<8x64xf32> to vector<8x32xf32>
    %c0_115 = arith.constant 0 : index
    %c0_116 = arith.constant 0 : index
    %355 = vector.load %arg9[%c0_115, %c0_116] : memref<64x64xf32, #tpu.memory_space<vmem>>, vector<8x32xf32>
    tpu.vector_store %arg9[%c0_115, %c0_116], %354 {strides = array<i32>} : memref<64x64xf32, #tpu.memory_space<vmem>>, vector<8x32xf32>,
    %356 = vector.extract_strided_slice %353 {offsets = [0, 32], sizes = [8, 32], strides = [1, 1]} : vector<8x64xf32> to vector<8x32xf32>
    %c56_117 = arith.constant 56 : index
    %c32_118 = arith.constant 32 : index
    %357 = vector.load %arg9[%c56_117, %c32_118] : memref<64x64xf32, #tpu.memory_space<vmem>>, vector<8x32xf32>
    tpu.vector_store %arg9[%c56_117, %c32_118], %356 {strides = array<i32>} : memref<64x64xf32, #tpu.memory_space<vmem>>, vector<8x32xf32>,
    %c8_119 = arith.constant 8 : index
    %c0_120 = arith.constant 0 : index
    %358 = vector.load %arg8[%c8_119, %c0_120] : memref<64x256xf32, #tpu.memory_space<vmem>>, vector<8x256xf32>
    %cst_121 = arith.constant dense<0.000000e+00> : vector<8x256xf32>
    %359 = tpu.matmul %353, %332, %cst_121 {dimension_numbers = #tpu.dot_dimension_numbers<[1], [0], [0], [1], [0, 0, 1, 1], [], []>} : vector<8x64xf32>, vector<64x256xf32>, vector<8x256xf32> -> vector<8x256xf32>
    %360 = arith.addf %358, %359 : vector<8x256xf32>
    %361 = vector.broadcast %26 : vector<1x256xf32> to vector<8x256xf32>
    %362 = arith.mulf %360, %361 : vector<8x256xf32>
    %363 = math.tanh %362 : vector<8x256xf32>
    %364 = vector.broadcast %26 : vector<1x256xf32> to vector<8x256xf32>
    %365 = arith.mulf %363, %364 : vector<8x256xf32>
    %366 = vector.broadcast %28 : vector<1x256xf32> to vector<8x256xf32>
    %367 = arith.addf %365, %366 : vector<8x256xf32>
    %368 = vector.extract_strided_slice %367 {offsets = [0, 0], sizes = [8, 64], strides = [1, 1]} : vector<8x256xf32> to vector<8x64xf32>
    %369 = vector.extract_strided_slice %367 {offsets = [0, 64], sizes = [8, 64], strides = [1, 1]} : vector<8x256xf32> to vector<8x64xf32>
    %370 = vector.extract_strided_slice %367 {offsets = [0, 128], sizes = [8, 64], strides = [1, 1]} : vector<8x256xf32> to vector<8x64xf32>
    %371 = vector.extract_strided_slice %367 {offsets = [0, 192], sizes = [8, 64], strides = [1, 1]} : vector<8x256xf32> to vector<8x64xf32>
    %372 = arith.mulf %369, %351 : vector<8x64xf32>
    %373 = arith.mulf %368, %370 : vector<8x64xf32>
    %374 = arith.addf %372, %373 : vector<8x64xf32>
    %375 = math.tanh %374 : vector<8x64xf32>
    %376 = arith.mulf %371, %375 : vector<8x64xf32>
    %377 = vector.extract_strided_slice %376 {offsets = [0, 0], sizes = [8, 32], strides = [1, 1]} : vector<8x64xf32> to vector<8x32xf32>
    %c8_122 = arith.constant 8 : index
    %c0_123 = arith.constant 0 : index
    %378 = vector.load %arg9[%c8_122, %c0_123] : memref<64x64xf32, #tpu.memory_space<vmem>>, vector<8x32xf32>
    tpu.vector_store %arg9[%c8_122, %c0_123], %377 {strides = array<i32>} : memref<64x64xf32, #tpu.memory_space<vmem>>, vector<8x32xf32>,
    %379 = vector.extract_strided_slice %376 {offsets = [0, 32], sizes = [8, 32], strides = [1, 1]} : vector<8x64xf32> to vector<8x32xf32>
    %c48_124 = arith.constant 48 : index
    %c32_125 = arith.constant 32 : index
    %380 = vector.load %arg9[%c48_124, %c32_125] : memref<64x64xf32, #tpu.memory_space<vmem>>, vector<8x32xf32>
    tpu.vector_store %arg9[%c48_124, %c32_125], %379 {strides = array<i32>} : memref<64x64xf32, #tpu.memory_space<vmem>>, vector<8x32xf32>,
    %c16_126 = arith.constant 16 : index
    %c0_127 = arith.constant 0 : index
    %381 = vector.load %arg8[%c16_126, %c0_127] : memref<64x256xf32, #tpu.memory_space<vmem>>, vector<8x256xf32>
    %cst_128 = arith.constant dense<0.000000e+00> : vector<8x256xf32>
    %382 = tpu.matmul %376, %332, %cst_128 {dimension_numbers = #tpu.dot_dimension_numbers<[1], [0], [0], [1], [0, 0, 1, 1], [], []>} : vector<8x64xf32>, vector<64x256xf32>, vector<8x256xf32> -> vector<8x256xf32>
    %383 = arith.addf %381, %382 : vector<8x256xf32>
    %384 = vector.broadcast %26 : vector<1x256xf32> to vector<8x256xf32>
    %385 = arith.mulf %383, %384 : vector<8x256xf32>
    %386 = math.tanh %385 : vector<8x256xf32>
    %387 = vector.broadcast %26 : vector<1x256xf32> to vector<8x256xf32>
    %388 = arith.mulf %386, %387 : vector<8x256xf32>
    %389 = vector.broadcast %28 : vector<1x256xf32> to vector<8x256xf32>
    %390 = arith.addf %388, %389 : vector<8x256xf32>
    %391 = vector.extract_strided_slice %390 {offsets = [0, 0], sizes = [8, 64], strides = [1, 1]} : vector<8x256xf32> to vector<8x64xf32>
    %392 = vector.extract_strided_slice %390 {offsets = [0, 64], sizes = [8, 64], strides = [1, 1]} : vector<8x256xf32> to vector<8x64xf32>
    %393 = vector.extract_strided_slice %390 {offsets = [0, 128], sizes = [8, 64], strides = [1, 1]} : vector<8x256xf32> to vector<8x64xf32>
    %394 = vector.extract_strided_slice %390 {offsets = [0, 192], sizes = [8, 64], strides = [1, 1]} : vector<8x256xf32> to vector<8x64xf32>
    %395 = arith.mulf %392, %374 : vector<8x64xf32>
    %396 = arith.mulf %391, %393 : vector<8x64xf32>
    %397 = arith.addf %395, %396 : vector<8x64xf32>
    %398 = math.tanh %397 : vector<8x64xf32>
    %399 = arith.mulf %394, %398 : vector<8x64xf32>
    %400 = vector.extract_strided_slice %399 {offsets = [0, 0], sizes = [8, 32], strides = [1, 1]} : vector<8x64xf32> to vector<8x32xf32>
    %c16_129 = arith.constant 16 : index
    %c0_130 = arith.constant 0 : index
    %401 = vector.load %arg9[%c16_129, %c0_130] : memref<64x64xf32, #tpu.memory_space<vmem>>, vector<8x32xf32>
    tpu.vector_store %arg9[%c16_129, %c0_130], %400 {strides = array<i32>} : memref<64x64xf32, #tpu.memory_space<vmem>>, vector<8x32xf32>,
    %402 = vector.extract_strided_slice %399 {offsets = [0, 32], sizes = [8, 32], strides = [1, 1]} : vector<8x64xf32> to vector<8x32xf32>
    %c40_131 = arith.constant 40 : index
    %c32_132 = arith.constant 32 : index
    %403 = vector.load %arg9[%c40_131, %c32_132] : memref<64x64xf32, #tpu.memory_space<vmem>>, vector<8x32xf32>
    tpu.vector_store %arg9[%c40_131, %c32_132], %402 {strides = array<i32>} : memref<64x64xf32, #tpu.memory_space<vmem>>, vector<8x32xf32>,
    %c24_133 = arith.constant 24 : index
    %c0_134 = arith.constant 0 : index
    %404 = vector.load %arg8[%c24_133, %c0_134] : memref<64x256xf32, #tpu.memory_space<vmem>>, vector<8x256xf32>
    %cst_135 = arith.constant dense<0.000000e+00> : vector<8x256xf32>
    %405 = tpu.matmul %399, %332, %cst_135 {dimension_numbers = #tpu.dot_dimension_numbers<[1], [0], [0], [1], [0, 0, 1, 1], [], []>} : vector<8x64xf32>, vector<64x256xf32>, vector<8x256xf32> -> vector<8x256xf32>
    %406 = arith.addf %404, %405 : vector<8x256xf32>
    %407 = vector.broadcast %26 : vector<1x256xf32> to vector<8x256xf32>
    %408 = arith.mulf %406, %407 : vector<8x256xf32>
    %409 = math.tanh %408 : vector<8x256xf32>
    %410 = vector.broadcast %26 : vector<1x256xf32> to vector<8x256xf32>
    %411 = arith.mulf %409, %410 : vector<8x256xf32>
    %412 = vector.broadcast %28 : vector<1x256xf32> to vector<8x256xf32>
    %413 = arith.addf %411, %412 : vector<8x256xf32>
    %414 = vector.extract_strided_slice %413 {offsets = [0, 0], sizes = [8, 64], strides = [1, 1]} : vector<8x256xf32> to vector<8x64xf32>
    %415 = vector.extract_strided_slice %413 {offsets = [0, 64], sizes = [8, 64], strides = [1, 1]} : vector<8x256xf32> to vector<8x64xf32>
    %416 = vector.extract_strided_slice %413 {offsets = [0, 128], sizes = [8, 64], strides = [1, 1]} : vector<8x256xf32> to vector<8x64xf32>
    %417 = vector.extract_strided_slice %413 {offsets = [0, 192], sizes = [8, 64], strides = [1, 1]} : vector<8x256xf32> to vector<8x64xf32>
    %418 = arith.mulf %415, %397 : vector<8x64xf32>
    %419 = arith.mulf %414, %416 : vector<8x64xf32>
    %420 = arith.addf %418, %419 : vector<8x64xf32>
    %421 = math.tanh %420 : vector<8x64xf32>
    %422 = arith.mulf %417, %421 : vector<8x64xf32>
    %423 = vector.extract_strided_slice %422 {offsets = [0, 0], sizes = [8, 32], strides = [1, 1]} : vector<8x64xf32> to vector<8x32xf32>
    %c24_136 = arith.constant 24 : index
    %c0_137 = arith.constant 0 : index
    %424 = vector.load %arg9[%c24_136, %c0_137] : memref<64x64xf32, #tpu.memory_space<vmem>>, vector<8x32xf32>
    tpu.vector_store %arg9[%c24_136, %c0_137], %423 {strides = array<i32>} : memref<64x64xf32, #tpu.memory_space<vmem>>, vector<8x32xf32>,
    %425 = vector.extract_strided_slice %422 {offsets = [0, 32], sizes = [8, 32], strides = [1, 1]} : vector<8x64xf32> to vector<8x32xf32>
    %c32_138 = arith.constant 32 : index
    %c32_139 = arith.constant 32 : index
    %426 = vector.load %arg9[%c32_138, %c32_139] : memref<64x64xf32, #tpu.memory_space<vmem>>, vector<8x32xf32>
    tpu.vector_store %arg9[%c32_138, %c32_139], %425 {strides = array<i32>} : memref<64x64xf32, #tpu.memory_space<vmem>>, vector<8x32xf32>,
    %c32_140 = arith.constant 32 : index
    %c0_141 = arith.constant 0 : index
    %427 = vector.load %arg8[%c32_140, %c0_141] : memref<64x256xf32, #tpu.memory_space<vmem>>, vector<8x256xf32>
    %cst_142 = arith.constant dense<0.000000e+00> : vector<8x256xf32>
    %428 = tpu.matmul %422, %332, %cst_142 {dimension_numbers = #tpu.dot_dimension_numbers<[1], [0], [0], [1], [0, 0, 1, 1], [], []>} : vector<8x64xf32>, vector<64x256xf32>, vector<8x256xf32> -> vector<8x256xf32>
    %429 = arith.addf %427, %428 : vector<8x256xf32>
    %430 = vector.broadcast %26 : vector<1x256xf32> to vector<8x256xf32>
    %431 = arith.mulf %429, %430 : vector<8x256xf32>
    %432 = math.tanh %431 : vector<8x256xf32>
    %433 = vector.broadcast %26 : vector<1x256xf32> to vector<8x256xf32>
    %434 = arith.mulf %432, %433 : vector<8x256xf32>
    %435 = vector.broadcast %28 : vector<1x256xf32> to vector<8x256xf32>
    %436 = arith.addf %434, %435 : vector<8x256xf32>
    %437 = vector.extract_strided_slice %436 {offsets = [0, 0], sizes = [8, 64], strides = [1, 1]} : vector<8x256xf32> to vector<8x64xf32>
    %438 = vector.extract_strided_slice %436 {offsets = [0, 64], sizes = [8, 64], strides = [1, 1]} : vector<8x256xf32> to vector<8x64xf32>
    %439 = vector.extract_strided_slice %436 {offsets = [0, 128], sizes = [8, 64], strides = [1, 1]} : vector<8x256xf32> to vector<8x64xf32>
    %440 = vector.extract_strided_slice %436 {offsets = [0, 192], sizes = [8, 64], strides = [1, 1]} : vector<8x256xf32> to vector<8x64xf32>
    %441 = arith.mulf %438, %420 : vector<8x64xf32>
    %442 = arith.mulf %437, %439 : vector<8x64xf32>
    %443 = arith.addf %441, %442 : vector<8x64xf32>
    %444 = math.tanh %443 : vector<8x64xf32>
    %445 = arith.mulf %440, %444 : vector<8x64xf32>
    %446 = vector.extract_strided_slice %445 {offsets = [0, 0], sizes = [8, 32], strides = [1, 1]} : vector<8x64xf32> to vector<8x32xf32>
    %c32_143 = arith.constant 32 : index
    %c0_144 = arith.constant 0 : index
    %447 = vector.load %arg9[%c32_143, %c0_144] : memref<64x64xf32, #tpu.memory_space<vmem>>, vector<8x32xf32>
    tpu.vector_store %arg9[%c32_143, %c0_144], %446 {strides = array<i32>} : memref<64x64xf32, #tpu.memory_space<vmem>>, vector<8x32xf32>,
    %448 = vector.extract_strided_slice %445 {offsets = [0, 32], sizes = [8, 32], strides = [1, 1]} : vector<8x64xf32> to vector<8x32xf32>
    %c24_145 = arith.constant 24 : index
    %c32_146 = arith.constant 32 : index
    %449 = vector.load %arg9[%c24_145, %c32_146] : memref<64x64xf32, #tpu.memory_space<vmem>>, vector<8x32xf32>
    tpu.vector_store %arg9[%c24_145, %c32_146], %448 {strides = array<i32>} : memref<64x64xf32, #tpu.memory_space<vmem>>, vector<8x32xf32>,
    %c40_147 = arith.constant 40 : index
    %c0_148 = arith.constant 0 : index
    %450 = vector.load %arg8[%c40_147, %c0_148] : memref<64x256xf32, #tpu.memory_space<vmem>>, vector<8x256xf32>
    %cst_149 = arith.constant dense<0.000000e+00> : vector<8x256xf32>
    %451 = tpu.matmul %445, %332, %cst_149 {dimension_numbers = #tpu.dot_dimension_numbers<[1], [0], [0], [1], [0, 0, 1, 1], [], []>} : vector<8x64xf32>, vector<64x256xf32>, vector<8x256xf32> -> vector<8x256xf32>
    %452 = arith.addf %450, %451 : vector<8x256xf32>
    %453 = vector.broadcast %26 : vector<1x256xf32> to vector<8x256xf32>
    %454 = arith.mulf %452, %453 : vector<8x256xf32>
    %455 = math.tanh %454 : vector<8x256xf32>
    %456 = vector.broadcast %26 : vector<1x256xf32> to vector<8x256xf32>
    %457 = arith.mulf %455, %456 : vector<8x256xf32>
    %458 = vector.broadcast %28 : vector<1x256xf32> to vector<8x256xf32>
    %459 = arith.addf %457, %458 : vector<8x256xf32>
    %460 = vector.extract_strided_slice %459 {offsets = [0, 0], sizes = [8, 64], strides = [1, 1]} : vector<8x256xf32> to vector<8x64xf32>
    %461 = vector.extract_strided_slice %459 {offsets = [0, 64], sizes = [8, 64], strides = [1, 1]} : vector<8x256xf32> to vector<8x64xf32>
    %462 = vector.extract_strided_slice %459 {offsets = [0, 128], sizes = [8, 64], strides = [1, 1]} : vector<8x256xf32> to vector<8x64xf32>
    %463 = vector.extract_strided_slice %459 {offsets = [0, 192], sizes = [8, 64], strides = [1, 1]} : vector<8x256xf32> to vector<8x64xf32>
    %464 = arith.mulf %461, %443 : vector<8x64xf32>
    %465 = arith.mulf %460, %462 : vector<8x64xf32>
    %466 = arith.addf %464, %465 : vector<8x64xf32>
    %467 = math.tanh %466 : vector<8x64xf32>
    %468 = arith.mulf %463, %467 : vector<8x64xf32>
    %469 = vector.extract_strided_slice %468 {offsets = [0, 0], sizes = [8, 32], strides = [1, 1]} : vector<8x64xf32> to vector<8x32xf32>
    %c40_150 = arith.constant 40 : index
    %c0_151 = arith.constant 0 : index
    %470 = vector.load %arg9[%c40_150, %c0_151] : memref<64x64xf32, #tpu.memory_space<vmem>>, vector<8x32xf32>
    tpu.vector_store %arg9[%c40_150, %c0_151], %469 {strides = array<i32>} : memref<64x64xf32, #tpu.memory_space<vmem>>, vector<8x32xf32>,
    %471 = vector.extract_strided_slice %468 {offsets = [0, 32], sizes = [8, 32], strides = [1, 1]} : vector<8x64xf32> to vector<8x32xf32>
    %c16_152 = arith.constant 16 : index
    %c32_153 = arith.constant 32 : index
    %472 = vector.load %arg9[%c16_152, %c32_153] : memref<64x64xf32, #tpu.memory_space<vmem>>, vector<8x32xf32>
    tpu.vector_store %arg9[%c16_152, %c32_153], %471 {strides = array<i32>} : memref<64x64xf32, #tpu.memory_space<vmem>>, vector<8x32xf32>,
    %c48_154 = arith.constant 48 : index
    %c0_155 = arith.constant 0 : index
    %473 = vector.load %arg8[%c48_154, %c0_155] : memref<64x256xf32, #tpu.memory_space<vmem>>, vector<8x256xf32>
    %cst_156 = arith.constant dense<0.000000e+00> : vector<8x256xf32>
    %474 = tpu.matmul %468, %332, %cst_156 {dimension_numbers = #tpu.dot_dimension_numbers<[1], [0], [0], [1], [0, 0, 1, 1], [], []>} : vector<8x64xf32>, vector<64x256xf32>, vector<8x256xf32> -> vector<8x256xf32>
    %475 = arith.addf %473, %474 : vector<8x256xf32>
    %476 = vector.broadcast %26 : vector<1x256xf32> to vector<8x256xf32>
    %477 = arith.mulf %475, %476 : vector<8x256xf32>
    %478 = math.tanh %477 : vector<8x256xf32>
    %479 = vector.broadcast %26 : vector<1x256xf32> to vector<8x256xf32>
    %480 = arith.mulf %478, %479 : vector<8x256xf32>
    %481 = vector.broadcast %28 : vector<1x256xf32> to vector<8x256xf32>
    %482 = arith.addf %480, %481 : vector<8x256xf32>
    %483 = vector.extract_strided_slice %482 {offsets = [0, 0], sizes = [8, 64], strides = [1, 1]} : vector<8x256xf32> to vector<8x64xf32>
    %484 = vector.extract_strided_slice %482 {offsets = [0, 64], sizes = [8, 64], strides = [1, 1]} : vector<8x256xf32> to vector<8x64xf32>
    %485 = vector.extract_strided_slice %482 {offsets = [0, 128], sizes = [8, 64], strides = [1, 1]} : vector<8x256xf32> to vector<8x64xf32>
    %486 = vector.extract_strided_slice %482 {offsets = [0, 192], sizes = [8, 64], strides = [1, 1]} : vector<8x256xf32> to vector<8x64xf32>
    %487 = arith.mulf %484, %466 : vector<8x64xf32>
    %488 = arith.mulf %483, %485 : vector<8x64xf32>
    %489 = arith.addf %487, %488 : vector<8x64xf32>
    %490 = math.tanh %489 : vector<8x64xf32>
    %491 = arith.mulf %486, %490 : vector<8x64xf32>
    %492 = vector.extract_strided_slice %491 {offsets = [0, 0], sizes = [8, 32], strides = [1, 1]} : vector<8x64xf32> to vector<8x32xf32>
    %c48_157 = arith.constant 48 : index
    %c0_158 = arith.constant 0 : index
    %493 = vector.load %arg9[%c48_157, %c0_158] : memref<64x64xf32, #tpu.memory_space<vmem>>, vector<8x32xf32>
    tpu.vector_store %arg9[%c48_157, %c0_158], %492 {strides = array<i32>} : memref<64x64xf32, #tpu.memory_space<vmem>>, vector<8x32xf32>,
    %494 = vector.extract_strided_slice %491 {offsets = [0, 32], sizes = [8, 32], strides = [1, 1]} : vector<8x64xf32> to vector<8x32xf32>
    %c8_159 = arith.constant 8 : index
    %c32_160 = arith.constant 32 : index
    %495 = vector.load %arg9[%c8_159, %c32_160] : memref<64x64xf32, #tpu.memory_space<vmem>>, vector<8x32xf32>
    tpu.vector_store %arg9[%c8_159, %c32_160], %494 {strides = array<i32>} : memref<64x64xf32, #tpu.memory_space<vmem>>, vector<8x32xf32>,
    %c56_161 = arith.constant 56 : index
    %c0_162 = arith.constant 0 : index
    %496 = vector.load %arg8[%c56_161, %c0_162] : memref<64x256xf32, #tpu.memory_space<vmem>>, vector<8x256xf32>
    %cst_163 = arith.constant dense<0.000000e+00> : vector<8x256xf32>
    %497 = tpu.matmul %491, %332, %cst_163 {dimension_numbers = #tpu.dot_dimension_numbers<[1], [0], [0], [1], [0, 0, 1, 1], [], []>} : vector<8x64xf32>, vector<64x256xf32>, vector<8x256xf32> -> vector<8x256xf32>
    %498 = arith.addf %496, %497 : vector<8x256xf32>
    %499 = vector.broadcast %26 : vector<1x256xf32> to vector<8x256xf32>
    %500 = arith.mulf %498, %499 : vector<8x256xf32>
    %501 = math.tanh %500 : vector<8x256xf32>
    %502 = vector.broadcast %26 : vector<1x256xf32> to vector<8x256xf32>
    %503 = arith.mulf %501, %502 : vector<8x256xf32>
    %504 = vector.broadcast %28 : vector<1x256xf32> to vector<8x256xf32>
    %505 = arith.addf %503, %504 : vector<8x256xf32>
    %506 = vector.extract_strided_slice %505 {offsets = [0, 0], sizes = [8, 64], strides = [1, 1]} : vector<8x256xf32> to vector<8x64xf32>
    %507 = vector.extract_strided_slice %505 {offsets = [0, 64], sizes = [8, 64], strides = [1, 1]} : vector<8x256xf32> to vector<8x64xf32>
    %508 = vector.extract_strided_slice %505 {offsets = [0, 128], sizes = [8, 64], strides = [1, 1]} : vector<8x256xf32> to vector<8x64xf32>
    %509 = vector.extract_strided_slice %505 {offsets = [0, 192], sizes = [8, 64], strides = [1, 1]} : vector<8x256xf32> to vector<8x64xf32>
    %510 = arith.mulf %507, %489 : vector<8x64xf32>
    %511 = arith.mulf %506, %508 : vector<8x64xf32>
    %512 = arith.addf %510, %511 : vector<8x64xf32>
    %513 = math.tanh %512 : vector<8x64xf32>
    %514 = arith.mulf %509, %513 : vector<8x64xf32>
    %515 = vector.extract_strided_slice %514 {offsets = [0, 0], sizes = [8, 32], strides = [1, 1]} : vector<8x64xf32> to vector<8x32xf32>
    %c56_164 = arith.constant 56 : index
    %c0_165 = arith.constant 0 : index
    %516 = vector.load %arg9[%c56_164, %c0_165] : memref<64x64xf32, #tpu.memory_space<vmem>>, vector<8x32xf32>
    tpu.vector_store %arg9[%c56_164, %c0_165], %515 {strides = array<i32>} : memref<64x64xf32, #tpu.memory_space<vmem>>, vector<8x32xf32>,
    %517 = vector.extract_strided_slice %514 {offsets = [0, 32], sizes = [8, 32], strides = [1, 1]} : vector<8x64xf32> to vector<8x32xf32>
    %c0_166 = arith.constant 0 : index
    %c32_167 = arith.constant 32 : index
    %518 = vector.load %arg9[%c0_166, %c32_167] : memref<64x64xf32, #tpu.memory_space<vmem>>, vector<8x32xf32>
    tpu.vector_store %arg9[%c0_166, %c32_167], %517 {strides = array<i32>} : memref<64x64xf32, #tpu.memory_space<vmem>>, vector<8x32xf32>,
    %c0_168 = arith.constant 0 : index
    %c0_169 = arith.constant 0 : index
    %519 = vector.load %arg9[%c0_168, %c0_169] : memref<64x64xf32, #tpu.memory_space<vmem>>, vector<64x64xf32>
    %c1_170 = arith.constant 1 : index
    %c0_171 = arith.constant 0 : index
    %c0_172 = arith.constant 0 : index
    %520 = vector.load %arg2[%c1_170, %c0_171, %c0_172] : memref<3x64x256xf32, #tpu.memory_space<vmem>>, vector<1x64x256xf32>
    %521 = vector.shape_cast %520 : vector<1x64x256xf32> to vector<64x256xf32>
    %cst_173 = arith.constant dense<0.000000e+00> : vector<64x256xf32>
    %522 = tpu.matmul %519, %521, %cst_173 {dimension_numbers = #tpu.dot_dimension_numbers<[1], [0], [0], [1], [0, 0, 1, 1], [], []>} : vector<64x64xf32>, vector<64x256xf32>, vector<64x256xf32> -> vector<64x256xf32>
    %c2 = arith.constant 2 : index
    %c0_174 = arith.constant 0 : index
    %c0_175 = arith.constant 0 : index
    %523 = vector.load %arg4[%c2, %c0_174, %c0_175] : memref<4x1x256xf32, #tpu.memory_space<vmem>>, vector<1x1x256xf32>
    %524 = vector.shape_cast %523 : vector<1x1x256xf32> to vector<1x256xf32>
    %525 = vector.broadcast %524 : vector<1x256xf32> to vector<64x256xf32>
    %526 = arith.addf %522, %525 : vector<64x256xf32>
    %527 = vector.extract_strided_slice %526 {offsets = [0, 0], sizes = [8, 256], strides = [1, 1]} : vector<64x256xf32> to vector<8x256xf32>
    %528 = vector.extract_strided_slice %526 {offsets = [56, 0], sizes = [8, 256], strides = [1, 1]} : vector<64x256xf32> to vector<8x256xf32>
    %529 = vector.shape_cast %18 : vector<1x256xi1> to vector<1x256xi1>
    %530 = vector.broadcast %529 : vector<1x256xi1> to vector<8x256xi1>
    %531 = arith.select %530, %527, %528 : vector<8x256xi1>, vector<8x256xf32>
    %c0_176 = arith.constant 0 : index
    %c0_177 = arith.constant 0 : index
    %532 = vector.load %arg8[%c0_176, %c0_177] : memref<64x256xf32, #tpu.memory_space<vmem>>, vector<8x256xf32>
    tpu.vector_store %arg8[%c0_176, %c0_177], %531 {strides = array<i32>} : memref<64x256xf32, #tpu.memory_space<vmem>>, vector<8x256xf32>,
    %533 = vector.extract_strided_slice %526 {offsets = [8, 0], sizes = [8, 256], strides = [1, 1]} : vector<64x256xf32> to vector<8x256xf32>
    %534 = vector.extract_strided_slice %526 {offsets = [48, 0], sizes = [8, 256], strides = [1, 1]} : vector<64x256xf32> to vector<8x256xf32>
    %535 = vector.shape_cast %18 : vector<1x256xi1> to vector<1x256xi1>
    %536 = vector.broadcast %535 : vector<1x256xi1> to vector<8x256xi1>
    %537 = arith.select %536, %533, %534 : vector<8x256xi1>, vector<8x256xf32>
    %c8_178 = arith.constant 8 : index
    %c0_179 = arith.constant 0 : index
    %538 = vector.load %arg8[%c8_178, %c0_179] : memref<64x256xf32, #tpu.memory_space<vmem>>, vector<8x256xf32>
    tpu.vector_store %arg8[%c8_178, %c0_179], %537 {strides = array<i32>} : memref<64x256xf32, #tpu.memory_space<vmem>>, vector<8x256xf32>,
    %539 = vector.extract_strided_slice %526 {offsets = [16, 0], sizes = [8, 256], strides = [1, 1]} : vector<64x256xf32> to vector<8x256xf32>
    %540 = vector.extract_strided_slice %526 {offsets = [40, 0], sizes = [8, 256], strides = [1, 1]} : vector<64x256xf32> to vector<8x256xf32>
    %541 = vector.shape_cast %18 : vector<1x256xi1> to vector<1x256xi1>
    %542 = vector.broadcast %541 : vector<1x256xi1> to vector<8x256xi1>
    %543 = arith.select %542, %539, %540 : vector<8x256xi1>, vector<8x256xf32>
    %c16_180 = arith.constant 16 : index
    %c0_181 = arith.constant 0 : index
    %544 = vector.load %arg8[%c16_180, %c0_181] : memref<64x256xf32, #tpu.memory_space<vmem>>, vector<8x256xf32>
    tpu.vector_store %arg8[%c16_180, %c0_181], %543 {strides = array<i32>} : memref<64x256xf32, #tpu.memory_space<vmem>>, vector<8x256xf32>,
    %545 = vector.extract_strided_slice %526 {offsets = [24, 0], sizes = [8, 256], strides = [1, 1]} : vector<64x256xf32> to vector<8x256xf32>
    %546 = vector.extract_strided_slice %526 {offsets = [32, 0], sizes = [8, 256], strides = [1, 1]} : vector<64x256xf32> to vector<8x256xf32>
    %547 = vector.shape_cast %18 : vector<1x256xi1> to vector<1x256xi1>
    %548 = vector.broadcast %547 : vector<1x256xi1> to vector<8x256xi1>
    %549 = arith.select %548, %545, %546 : vector<8x256xi1>, vector<8x256xf32>
    %c24_182 = arith.constant 24 : index
    %c0_183 = arith.constant 0 : index
    %550 = vector.load %arg8[%c24_182, %c0_183] : memref<64x256xf32, #tpu.memory_space<vmem>>, vector<8x256xf32>
    tpu.vector_store %arg8[%c24_182, %c0_183], %549 {strides = array<i32>} : memref<64x256xf32, #tpu.memory_space<vmem>>, vector<8x256xf32>,
    %551 = vector.extract_strided_slice %526 {offsets = [32, 0], sizes = [8, 256], strides = [1, 1]} : vector<64x256xf32> to vector<8x256xf32>
    %552 = vector.extract_strided_slice %526 {offsets = [24, 0], sizes = [8, 256], strides = [1, 1]} : vector<64x256xf32> to vector<8x256xf32>
    %553 = vector.shape_cast %18 : vector<1x256xi1> to vector<1x256xi1>
    %554 = vector.broadcast %553 : vector<1x256xi1> to vector<8x256xi1>
    %555 = arith.select %554, %551, %552 : vector<8x256xi1>, vector<8x256xf32>
    %c32_184 = arith.constant 32 : index
    %c0_185 = arith.constant 0 : index
    %556 = vector.load %arg8[%c32_184, %c0_185] : memref<64x256xf32, #tpu.memory_space<vmem>>, vector<8x256xf32>
    tpu.vector_store %arg8[%c32_184, %c0_185], %555 {strides = array<i32>} : memref<64x256xf32, #tpu.memory_space<vmem>>, vector<8x256xf32>,
    %557 = vector.extract_strided_slice %526 {offsets = [40, 0], sizes = [8, 256], strides = [1, 1]} : vector<64x256xf32> to vector<8x256xf32>
    %558 = vector.extract_strided_slice %526 {offsets = [16, 0], sizes = [8, 256], strides = [1, 1]} : vector<64x256xf32> to vector<8x256xf32>
    %559 = vector.shape_cast %18 : vector<1x256xi1> to vector<1x256xi1>
    %560 = vector.broadcast %559 : vector<1x256xi1> to vector<8x256xi1>
    %561 = arith.select %560, %557, %558 : vector<8x256xi1>, vector<8x256xf32>
    %c40_186 = arith.constant 40 : index
    %c0_187 = arith.constant 0 : index
    %562 = vector.load %arg8[%c40_186, %c0_187] : memref<64x256xf32, #tpu.memory_space<vmem>>, vector<8x256xf32>
    tpu.vector_store %arg8[%c40_186, %c0_187], %561 {strides = array<i32>} : memref<64x256xf32, #tpu.memory_space<vmem>>, vector<8x256xf32>,
    %563 = vector.extract_strided_slice %526 {offsets = [48, 0], sizes = [8, 256], strides = [1, 1]} : vector<64x256xf32> to vector<8x256xf32>
    %564 = vector.extract_strided_slice %526 {offsets = [8, 0], sizes = [8, 256], strides = [1, 1]} : vector<64x256xf32> to vector<8x256xf32>
    %565 = vector.shape_cast %18 : vector<1x256xi1> to vector<1x256xi1>
    %566 = vector.broadcast %565 : vector<1x256xi1> to vector<8x256xi1>
    %567 = arith.select %566, %563, %564 : vector<8x256xi1>, vector<8x256xf32>
    %c48_188 = arith.constant 48 : index
    %c0_189 = arith.constant 0 : index
    %568 = vector.load %arg8[%c48_188, %c0_189] : memref<64x256xf32, #tpu.memory_space<vmem>>, vector<8x256xf32>
    tpu.vector_store %arg8[%c48_188, %c0_189], %567 {strides = array<i32>} : memref<64x256xf32, #tpu.memory_space<vmem>>, vector<8x256xf32>,
    %569 = vector.extract_strided_slice %526 {offsets = [56, 0], sizes = [8, 256], strides = [1, 1]} : vector<64x256xf32> to vector<8x256xf32>
    %570 = vector.extract_strided_slice %526 {offsets = [0, 0], sizes = [8, 256], strides = [1, 1]} : vector<64x256xf32> to vector<8x256xf32>
    %571 = vector.shape_cast %18 : vector<1x256xi1> to vector<1x256xi1>
    %572 = vector.broadcast %571 : vector<1x256xi1> to vector<8x256xi1>
    %573 = arith.select %572, %569, %570 : vector<8x256xi1>, vector<8x256xf32>
    %c56_190 = arith.constant 56 : index
    %c0_191 = arith.constant 0 : index
    %574 = vector.load %arg8[%c56_190, %c0_191] : memref<64x256xf32, #tpu.memory_space<vmem>>, vector<8x256xf32>
    tpu.vector_store %arg8[%c56_190, %c0_191], %573 {strides = array<i32>} : memref<64x256xf32, #tpu.memory_space<vmem>>, vector<8x256xf32>,
    %c2_192 = arith.constant 2 : index
    %c0_193 = arith.constant 0 : index
    %c0_194 = arith.constant 0 : index
    %575 = vector.load %arg3[%c2_192, %c0_193, %c0_194] : memref<4x64x256xf32, #tpu.memory_space<vmem>>, vector<1x64x256xf32>
    %576 = vector.shape_cast %575 : vector<1x64x256xf32> to vector<64x256xf32>
    %cst_195 = arith.constant 0.000000e+00 : f32
    %577 = vector.broadcast %cst_195 : f32 to vector<8x64xf32>
    %cst_196 = arith.constant 0.000000e+00 : f32
    %578 = vector.broadcast %cst_196 : f32 to vector<8x64xf32>
    %c0_197 = arith.constant 0 : index
    %c0_198 = arith.constant 0 : index
    %579 = vector.load %arg8[%c0_197, %c0_198] : memref<64x256xf32, #tpu.memory_space<vmem>>, vector<8x256xf32>
    %cst_199 = arith.constant dense<0.000000e+00> : vector<8x256xf32>
    %580 = tpu.matmul %577, %576, %cst_199 {dimension_numbers = #tpu.dot_dimension_numbers<[1], [0], [0], [1], [0, 0, 1, 1], [], []>} : vector<8x64xf32>, vector<64x256xf32>, vector<8x256xf32> -> vector<8x256xf32>
    %581 = arith.addf %579, %580 : vector<8x256xf32>
    %582 = vector.broadcast %26 : vector<1x256xf32> to vector<8x256xf32>
    %583 = arith.mulf %581, %582 : vector<8x256xf32>
    %584 = math.tanh %583 : vector<8x256xf32>
    %585 = vector.broadcast %26 : vector<1x256xf32> to vector<8x256xf32>
    %586 = arith.mulf %584, %585 : vector<8x256xf32>
    %587 = vector.broadcast %28 : vector<1x256xf32> to vector<8x256xf32>
    %588 = arith.addf %586, %587 : vector<8x256xf32>
    %589 = vector.extract_strided_slice %588 {offsets = [0, 0], sizes = [8, 64], strides = [1, 1]} : vector<8x256xf32> to vector<8x64xf32>
    %590 = vector.extract_strided_slice %588 {offsets = [0, 64], sizes = [8, 64], strides = [1, 1]} : vector<8x256xf32> to vector<8x64xf32>
    %591 = vector.extract_strided_slice %588 {offsets = [0, 128], sizes = [8, 64], strides = [1, 1]} : vector<8x256xf32> to vector<8x64xf32>
    %592 = vector.extract_strided_slice %588 {offsets = [0, 192], sizes = [8, 64], strides = [1, 1]} : vector<8x256xf32> to vector<8x64xf32>
    %593 = arith.mulf %590, %578 : vector<8x64xf32>
    %594 = arith.mulf %589, %591 : vector<8x64xf32>
    %595 = arith.addf %593, %594 : vector<8x64xf32>
    %596 = math.tanh %595 : vector<8x64xf32>
    %597 = arith.mulf %592, %596 : vector<8x64xf32>
    %598 = vector.extract_strided_slice %597 {offsets = [0, 0], sizes = [8, 32], strides = [1, 1]} : vector<8x64xf32> to vector<8x32xf32>
    %c0_200 = arith.constant 0 : index
    %c0_201 = arith.constant 0 : index
    %599 = vector.load %arg9[%c0_200, %c0_201] : memref<64x64xf32, #tpu.memory_space<vmem>>, vector<8x32xf32>
    tpu.vector_store %arg9[%c0_200, %c0_201], %598 {strides = array<i32>} : memref<64x64xf32, #tpu.memory_space<vmem>>, vector<8x32xf32>,
    %600 = vector.extract_strided_slice %597 {offsets = [0, 32], sizes = [8, 32], strides = [1, 1]} : vector<8x64xf32> to vector<8x32xf32>
    %c56_202 = arith.constant 56 : index
    %c32_203 = arith.constant 32 : index
    %601 = vector.load %arg9[%c56_202, %c32_203] : memref<64x64xf32, #tpu.memory_space<vmem>>, vector<8x32xf32>
    tpu.vector_store %arg9[%c56_202, %c32_203], %600 {strides = array<i32>} : memref<64x64xf32, #tpu.memory_space<vmem>>, vector<8x32xf32>,
    %c8_204 = arith.constant 8 : index
    %c0_205 = arith.constant 0 : index
    %602 = vector.load %arg8[%c8_204, %c0_205] : memref<64x256xf32, #tpu.memory_space<vmem>>, vector<8x256xf32>
    %cst_206 = arith.constant dense<0.000000e+00> : vector<8x256xf32>
    %603 = tpu.matmul %597, %576, %cst_206 {dimension_numbers = #tpu.dot_dimension_numbers<[1], [0], [0], [1], [0, 0, 1, 1], [], []>} : vector<8x64xf32>, vector<64x256xf32>, vector<8x256xf32> -> vector<8x256xf32>
    %604 = arith.addf %602, %603 : vector<8x256xf32>
    %605 = vector.broadcast %26 : vector<1x256xf32> to vector<8x256xf32>
    %606 = arith.mulf %604, %605 : vector<8x256xf32>
    %607 = math.tanh %606 : vector<8x256xf32>
    %608 = vector.broadcast %26 : vector<1x256xf32> to vector<8x256xf32>
    %609 = arith.mulf %607, %608 : vector<8x256xf32>
    %610 = vector.broadcast %28 : vector<1x256xf32> to vector<8x256xf32>
    %611 = arith.addf %609, %610 : vector<8x256xf32>
    %612 = vector.extract_strided_slice %611 {offsets = [0, 0], sizes = [8, 64], strides = [1, 1]} : vector<8x256xf32> to vector<8x64xf32>
    %613 = vector.extract_strided_slice %611 {offsets = [0, 64], sizes = [8, 64], strides = [1, 1]} : vector<8x256xf32> to vector<8x64xf32>
    %614 = vector.extract_strided_slice %611 {offsets = [0, 128], sizes = [8, 64], strides = [1, 1]} : vector<8x256xf32> to vector<8x64xf32>
    %615 = vector.extract_strided_slice %611 {offsets = [0, 192], sizes = [8, 64], strides = [1, 1]} : vector<8x256xf32> to vector<8x64xf32>
    %616 = arith.mulf %613, %595 : vector<8x64xf32>
    %617 = arith.mulf %612, %614 : vector<8x64xf32>
    %618 = arith.addf %616, %617 : vector<8x64xf32>
    %619 = math.tanh %618 : vector<8x64xf32>
    %620 = arith.mulf %615, %619 : vector<8x64xf32>
    %621 = vector.extract_strided_slice %620 {offsets = [0, 0], sizes = [8, 32], strides = [1, 1]} : vector<8x64xf32> to vector<8x32xf32>
    %c8_207 = arith.constant 8 : index
    %c0_208 = arith.constant 0 : index
    %622 = vector.load %arg9[%c8_207, %c0_208] : memref<64x64xf32, #tpu.memory_space<vmem>>, vector<8x32xf32>
    tpu.vector_store %arg9[%c8_207, %c0_208], %621 {strides = array<i32>} : memref<64x64xf32, #tpu.memory_space<vmem>>, vector<8x32xf32>,
    %623 = vector.extract_strided_slice %620 {offsets = [0, 32], sizes = [8, 32], strides = [1, 1]} : vector<8x64xf32> to vector<8x32xf32>
    %c48_209 = arith.constant 48 : index
    %c32_210 = arith.constant 32 : index
    %624 = vector.load %arg9[%c48_209, %c32_210] : memref<64x64xf32, #tpu.memory_space<vmem>>, vector<8x32xf32>
    tpu.vector_store %arg9[%c48_209, %c32_210], %623 {strides = array<i32>} : memref<64x64xf32, #tpu.memory_space<vmem>>, vector<8x32xf32>,
    %c16_211 = arith.constant 16 : index
    %c0_212 = arith.constant 0 : index
    %625 = vector.load %arg8[%c16_211, %c0_212] : memref<64x256xf32, #tpu.memory_space<vmem>>, vector<8x256xf32>
    %cst_213 = arith.constant dense<0.000000e+00> : vector<8x256xf32>
    %626 = tpu.matmul %620, %576, %cst_213 {dimension_numbers = #tpu.dot_dimension_numbers<[1], [0], [0], [1], [0, 0, 1, 1], [], []>} : vector<8x64xf32>, vector<64x256xf32>, vector<8x256xf32> -> vector<8x256xf32>
    %627 = arith.addf %625, %626 : vector<8x256xf32>
    %628 = vector.broadcast %26 : vector<1x256xf32> to vector<8x256xf32>
    %629 = arith.mulf %627, %628 : vector<8x256xf32>
    %630 = math.tanh %629 : vector<8x256xf32>
    %631 = vector.broadcast %26 : vector<1x256xf32> to vector<8x256xf32>
    %632 = arith.mulf %630, %631 : vector<8x256xf32>
    %633 = vector.broadcast %28 : vector<1x256xf32> to vector<8x256xf32>
    %634 = arith.addf %632, %633 : vector<8x256xf32>
    %635 = vector.extract_strided_slice %634 {offsets = [0, 0], sizes = [8, 64], strides = [1, 1]} : vector<8x256xf32> to vector<8x64xf32>
    %636 = vector.extract_strided_slice %634 {offsets = [0, 64], sizes = [8, 64], strides = [1, 1]} : vector<8x256xf32> to vector<8x64xf32>
    %637 = vector.extract_strided_slice %634 {offsets = [0, 128], sizes = [8, 64], strides = [1, 1]} : vector<8x256xf32> to vector<8x64xf32>
    %638 = vector.extract_strided_slice %634 {offsets = [0, 192], sizes = [8, 64], strides = [1, 1]} : vector<8x256xf32> to vector<8x64xf32>
    %639 = arith.mulf %636, %618 : vector<8x64xf32>
    %640 = arith.mulf %635, %637 : vector<8x64xf32>
    %641 = arith.addf %639, %640 : vector<8x64xf32>
    %642 = math.tanh %641 : vector<8x64xf32>
    %643 = arith.mulf %638, %642 : vector<8x64xf32>
    %644 = vector.extract_strided_slice %643 {offsets = [0, 0], sizes = [8, 32], strides = [1, 1]} : vector<8x64xf32> to vector<8x32xf32>
    %c16_214 = arith.constant 16 : index
    %c0_215 = arith.constant 0 : index
    %645 = vector.load %arg9[%c16_214, %c0_215] : memref<64x64xf32, #tpu.memory_space<vmem>>, vector<8x32xf32>
    tpu.vector_store %arg9[%c16_214, %c0_215], %644 {strides = array<i32>} : memref<64x64xf32, #tpu.memory_space<vmem>>, vector<8x32xf32>,
    %646 = vector.extract_strided_slice %643 {offsets = [0, 32], sizes = [8, 32], strides = [1, 1]} : vector<8x64xf32> to vector<8x32xf32>
    %c40_216 = arith.constant 40 : index
    %c32_217 = arith.constant 32 : index
    %647 = vector.load %arg9[%c40_216, %c32_217] : memref<64x64xf32, #tpu.memory_space<vmem>>, vector<8x32xf32>
    tpu.vector_store %arg9[%c40_216, %c32_217], %646 {strides = array<i32>} : memref<64x64xf32, #tpu.memory_space<vmem>>, vector<8x32xf32>,
    %c24_218 = arith.constant 24 : index
    %c0_219 = arith.constant 0 : index
    %648 = vector.load %arg8[%c24_218, %c0_219] : memref<64x256xf32, #tpu.memory_space<vmem>>, vector<8x256xf32>
    %cst_220 = arith.constant dense<0.000000e+00> : vector<8x256xf32>
    %649 = tpu.matmul %643, %576, %cst_220 {dimension_numbers = #tpu.dot_dimension_numbers<[1], [0], [0], [1], [0, 0, 1, 1], [], []>} : vector<8x64xf32>, vector<64x256xf32>, vector<8x256xf32> -> vector<8x256xf32>
    %650 = arith.addf %648, %649 : vector<8x256xf32>
    %651 = vector.broadcast %26 : vector<1x256xf32> to vector<8x256xf32>
    %652 = arith.mulf %650, %651 : vector<8x256xf32>
    %653 = math.tanh %652 : vector<8x256xf32>
    %654 = vector.broadcast %26 : vector<1x256xf32> to vector<8x256xf32>
    %655 = arith.mulf %653, %654 : vector<8x256xf32>
    %656 = vector.broadcast %28 : vector<1x256xf32> to vector<8x256xf32>
    %657 = arith.addf %655, %656 : vector<8x256xf32>
    %658 = vector.extract_strided_slice %657 {offsets = [0, 0], sizes = [8, 64], strides = [1, 1]} : vector<8x256xf32> to vector<8x64xf32>
    %659 = vector.extract_strided_slice %657 {offsets = [0, 64], sizes = [8, 64], strides = [1, 1]} : vector<8x256xf32> to vector<8x64xf32>
    %660 = vector.extract_strided_slice %657 {offsets = [0, 128], sizes = [8, 64], strides = [1, 1]} : vector<8x256xf32> to vector<8x64xf32>
    %661 = vector.extract_strided_slice %657 {offsets = [0, 192], sizes = [8, 64], strides = [1, 1]} : vector<8x256xf32> to vector<8x64xf32>
    %662 = arith.mulf %659, %641 : vector<8x64xf32>
    %663 = arith.mulf %658, %660 : vector<8x64xf32>
    %664 = arith.addf %662, %663 : vector<8x64xf32>
    %665 = math.tanh %664 : vector<8x64xf32>
    %666 = arith.mulf %661, %665 : vector<8x64xf32>
    %667 = vector.extract_strided_slice %666 {offsets = [0, 0], sizes = [8, 32], strides = [1, 1]} : vector<8x64xf32> to vector<8x32xf32>
    %c24_221 = arith.constant 24 : index
    %c0_222 = arith.constant 0 : index
    %668 = vector.load %arg9[%c24_221, %c0_222] : memref<64x64xf32, #tpu.memory_space<vmem>>, vector<8x32xf32>
    tpu.vector_store %arg9[%c24_221, %c0_222], %667 {strides = array<i32>} : memref<64x64xf32, #tpu.memory_space<vmem>>, vector<8x32xf32>,
    %669 = vector.extract_strided_slice %666 {offsets = [0, 32], sizes = [8, 32], strides = [1, 1]} : vector<8x64xf32> to vector<8x32xf32>
    %c32_223 = arith.constant 32 : index
    %c32_224 = arith.constant 32 : index
    %670 = vector.load %arg9[%c32_223, %c32_224] : memref<64x64xf32, #tpu.memory_space<vmem>>, vector<8x32xf32>
    tpu.vector_store %arg9[%c32_223, %c32_224], %669 {strides = array<i32>} : memref<64x64xf32, #tpu.memory_space<vmem>>, vector<8x32xf32>,
    %c32_225 = arith.constant 32 : index
    %c0_226 = arith.constant 0 : index
    %671 = vector.load %arg8[%c32_225, %c0_226] : memref<64x256xf32, #tpu.memory_space<vmem>>, vector<8x256xf32>
    %cst_227 = arith.constant dense<0.000000e+00> : vector<8x256xf32>
    %672 = tpu.matmul %666, %576, %cst_227 {dimension_numbers = #tpu.dot_dimension_numbers<[1], [0], [0], [1], [0, 0, 1, 1], [], []>} : vector<8x64xf32>, vector<64x256xf32>, vector<8x256xf32> -> vector<8x256xf32>
    %673 = arith.addf %671, %672 : vector<8x256xf32>
    %674 = vector.broadcast %26 : vector<1x256xf32> to vector<8x256xf32>
    %675 = arith.mulf %673, %674 : vector<8x256xf32>
    %676 = math.tanh %675 : vector<8x256xf32>
    %677 = vector.broadcast %26 : vector<1x256xf32> to vector<8x256xf32>
    %678 = arith.mulf %676, %677 : vector<8x256xf32>
    %679 = vector.broadcast %28 : vector<1x256xf32> to vector<8x256xf32>
    %680 = arith.addf %678, %679 : vector<8x256xf32>
    %681 = vector.extract_strided_slice %680 {offsets = [0, 0], sizes = [8, 64], strides = [1, 1]} : vector<8x256xf32> to vector<8x64xf32>
    %682 = vector.extract_strided_slice %680 {offsets = [0, 64], sizes = [8, 64], strides = [1, 1]} : vector<8x256xf32> to vector<8x64xf32>
    %683 = vector.extract_strided_slice %680 {offsets = [0, 128], sizes = [8, 64], strides = [1, 1]} : vector<8x256xf32> to vector<8x64xf32>
    %684 = vector.extract_strided_slice %680 {offsets = [0, 192], sizes = [8, 64], strides = [1, 1]} : vector<8x256xf32> to vector<8x64xf32>
    %685 = arith.mulf %682, %664 : vector<8x64xf32>
    %686 = arith.mulf %681, %683 : vector<8x64xf32>
    %687 = arith.addf %685, %686 : vector<8x64xf32>
    %688 = math.tanh %687 : vector<8x64xf32>
    %689 = arith.mulf %684, %688 : vector<8x64xf32>
    %690 = vector.extract_strided_slice %689 {offsets = [0, 0], sizes = [8, 32], strides = [1, 1]} : vector<8x64xf32> to vector<8x32xf32>
    %c32_228 = arith.constant 32 : index
    %c0_229 = arith.constant 0 : index
    %691 = vector.load %arg9[%c32_228, %c0_229] : memref<64x64xf32, #tpu.memory_space<vmem>>, vector<8x32xf32>
    tpu.vector_store %arg9[%c32_228, %c0_229], %690 {strides = array<i32>} : memref<64x64xf32, #tpu.memory_space<vmem>>, vector<8x32xf32>,
    %692 = vector.extract_strided_slice %689 {offsets = [0, 32], sizes = [8, 32], strides = [1, 1]} : vector<8x64xf32> to vector<8x32xf32>
    %c24_230 = arith.constant 24 : index
    %c32_231 = arith.constant 32 : index
    %693 = vector.load %arg9[%c24_230, %c32_231] : memref<64x64xf32, #tpu.memory_space<vmem>>, vector<8x32xf32>
    tpu.vector_store %arg9[%c24_230, %c32_231], %692 {strides = array<i32>} : memref<64x64xf32, #tpu.memory_space<vmem>>, vector<8x32xf32>,
    %c40_232 = arith.constant 40 : index
    %c0_233 = arith.constant 0 : index
    %694 = vector.load %arg8[%c40_232, %c0_233] : memref<64x256xf32, #tpu.memory_space<vmem>>, vector<8x256xf32>
    %cst_234 = arith.constant dense<0.000000e+00> : vector<8x256xf32>
    %695 = tpu.matmul %689, %576, %cst_234 {dimension_numbers = #tpu.dot_dimension_numbers<[1], [0], [0], [1], [0, 0, 1, 1], [], []>} : vector<8x64xf32>, vector<64x256xf32>, vector<8x256xf32> -> vector<8x256xf32>
    %696 = arith.addf %694, %695 : vector<8x256xf32>
    %697 = vector.broadcast %26 : vector<1x256xf32> to vector<8x256xf32>
    %698 = arith.mulf %696, %697 : vector<8x256xf32>
    %699 = math.tanh %698 : vector<8x256xf32>
    %700 = vector.broadcast %26 : vector<1x256xf32> to vector<8x256xf32>
    %701 = arith.mulf %699, %700 : vector<8x256xf32>
    %702 = vector.broadcast %28 : vector<1x256xf32> to vector<8x256xf32>
    %703 = arith.addf %701, %702 : vector<8x256xf32>
    %704 = vector.extract_strided_slice %703 {offsets = [0, 0], sizes = [8, 64], strides = [1, 1]} : vector<8x256xf32> to vector<8x64xf32>
    %705 = vector.extract_strided_slice %703 {offsets = [0, 64], sizes = [8, 64], strides = [1, 1]} : vector<8x256xf32> to vector<8x64xf32>
    %706 = vector.extract_strided_slice %703 {offsets = [0, 128], sizes = [8, 64], strides = [1, 1]} : vector<8x256xf32> to vector<8x64xf32>
    %707 = vector.extract_strided_slice %703 {offsets = [0, 192], sizes = [8, 64], strides = [1, 1]} : vector<8x256xf32> to vector<8x64xf32>
    %708 = arith.mulf %705, %687 : vector<8x64xf32>
    %709 = arith.mulf %704, %706 : vector<8x64xf32>
    %710 = arith.addf %708, %709 : vector<8x64xf32>
    %711 = math.tanh %710 : vector<8x64xf32>
    %712 = arith.mulf %707, %711 : vector<8x64xf32>
    %713 = vector.extract_strided_slice %712 {offsets = [0, 0], sizes = [8, 32], strides = [1, 1]} : vector<8x64xf32> to vector<8x32xf32>
    %c40_235 = arith.constant 40 : index
    %c0_236 = arith.constant 0 : index
    %714 = vector.load %arg9[%c40_235, %c0_236] : memref<64x64xf32, #tpu.memory_space<vmem>>, vector<8x32xf32>
    tpu.vector_store %arg9[%c40_235, %c0_236], %713 {strides = array<i32>} : memref<64x64xf32, #tpu.memory_space<vmem>>, vector<8x32xf32>,
    %715 = vector.extract_strided_slice %712 {offsets = [0, 32], sizes = [8, 32], strides = [1, 1]} : vector<8x64xf32> to vector<8x32xf32>
    %c16_237 = arith.constant 16 : index
    %c32_238 = arith.constant 32 : index
    %716 = vector.load %arg9[%c16_237, %c32_238] : memref<64x64xf32, #tpu.memory_space<vmem>>, vector<8x32xf32>
    tpu.vector_store %arg9[%c16_237, %c32_238], %715 {strides = array<i32>} : memref<64x64xf32, #tpu.memory_space<vmem>>, vector<8x32xf32>,
    %c48_239 = arith.constant 48 : index
    %c0_240 = arith.constant 0 : index
    %717 = vector.load %arg8[%c48_239, %c0_240] : memref<64x256xf32, #tpu.memory_space<vmem>>, vector<8x256xf32>
    %cst_241 = arith.constant dense<0.000000e+00> : vector<8x256xf32>
    %718 = tpu.matmul %712, %576, %cst_241 {dimension_numbers = #tpu.dot_dimension_numbers<[1], [0], [0], [1], [0, 0, 1, 1], [], []>} : vector<8x64xf32>, vector<64x256xf32>, vector<8x256xf32> -> vector<8x256xf32>
    %719 = arith.addf %717, %718 : vector<8x256xf32>
    %720 = vector.broadcast %26 : vector<1x256xf32> to vector<8x256xf32>
    %721 = arith.mulf %719, %720 : vector<8x256xf32>
    %722 = math.tanh %721 : vector<8x256xf32>
    %723 = vector.broadcast %26 : vector<1x256xf32> to vector<8x256xf32>
    %724 = arith.mulf %722, %723 : vector<8x256xf32>
    %725 = vector.broadcast %28 : vector<1x256xf32> to vector<8x256xf32>
    %726 = arith.addf %724, %725 : vector<8x256xf32>
    %727 = vector.extract_strided_slice %726 {offsets = [0, 0], sizes = [8, 64], strides = [1, 1]} : vector<8x256xf32> to vector<8x64xf32>
    %728 = vector.extract_strided_slice %726 {offsets = [0, 64], sizes = [8, 64], strides = [1, 1]} : vector<8x256xf32> to vector<8x64xf32>
    %729 = vector.extract_strided_slice %726 {offsets = [0, 128], sizes = [8, 64], strides = [1, 1]} : vector<8x256xf32> to vector<8x64xf32>
    %730 = vector.extract_strided_slice %726 {offsets = [0, 192], sizes = [8, 64], strides = [1, 1]} : vector<8x256xf32> to vector<8x64xf32>
    %731 = arith.mulf %728, %710 : vector<8x64xf32>
    %732 = arith.mulf %727, %729 : vector<8x64xf32>
    %733 = arith.addf %731, %732 : vector<8x64xf32>
    %734 = math.tanh %733 : vector<8x64xf32>
    %735 = arith.mulf %730, %734 : vector<8x64xf32>
    %736 = vector.extract_strided_slice %735 {offsets = [0, 0], sizes = [8, 32], strides = [1, 1]} : vector<8x64xf32> to vector<8x32xf32>
    %c48_242 = arith.constant 48 : index
    %c0_243 = arith.constant 0 : index
    %737 = vector.load %arg9[%c48_242, %c0_243] : memref<64x64xf32, #tpu.memory_space<vmem>>, vector<8x32xf32>
    tpu.vector_store %arg9[%c48_242, %c0_243], %736 {strides = array<i32>} : memref<64x64xf32, #tpu.memory_space<vmem>>, vector<8x32xf32>,
    %738 = vector.extract_strided_slice %735 {offsets = [0, 32], sizes = [8, 32], strides = [1, 1]} : vector<8x64xf32> to vector<8x32xf32>
    %c8_244 = arith.constant 8 : index
    %c32_245 = arith.constant 32 : index
    %739 = vector.load %arg9[%c8_244, %c32_245] : memref<64x64xf32, #tpu.memory_space<vmem>>, vector<8x32xf32>
    tpu.vector_store %arg9[%c8_244, %c32_245], %738 {strides = array<i32>} : memref<64x64xf32, #tpu.memory_space<vmem>>, vector<8x32xf32>,
    %c56_246 = arith.constant 56 : index
    %c0_247 = arith.constant 0 : index
    %740 = vector.load %arg8[%c56_246, %c0_247] : memref<64x256xf32, #tpu.memory_space<vmem>>, vector<8x256xf32>
    %cst_248 = arith.constant dense<0.000000e+00> : vector<8x256xf32>
    %741 = tpu.matmul %735, %576, %cst_248 {dimension_numbers = #tpu.dot_dimension_numbers<[1], [0], [0], [1], [0, 0, 1, 1], [], []>} : vector<8x64xf32>, vector<64x256xf32>, vector<8x256xf32> -> vector<8x256xf32>
    %742 = arith.addf %740, %741 : vector<8x256xf32>
    %743 = vector.broadcast %26 : vector<1x256xf32> to vector<8x256xf32>
    %744 = arith.mulf %742, %743 : vector<8x256xf32>
    %745 = math.tanh %744 : vector<8x256xf32>
    %746 = vector.broadcast %26 : vector<1x256xf32> to vector<8x256xf32>
    %747 = arith.mulf %745, %746 : vector<8x256xf32>
    %748 = vector.broadcast %28 : vector<1x256xf32> to vector<8x256xf32>
    %749 = arith.addf %747, %748 : vector<8x256xf32>
    %750 = vector.extract_strided_slice %749 {offsets = [0, 0], sizes = [8, 64], strides = [1, 1]} : vector<8x256xf32> to vector<8x64xf32>
    %751 = vector.extract_strided_slice %749 {offsets = [0, 64], sizes = [8, 64], strides = [1, 1]} : vector<8x256xf32> to vector<8x64xf32>
    %752 = vector.extract_strided_slice %749 {offsets = [0, 128], sizes = [8, 64], strides = [1, 1]} : vector<8x256xf32> to vector<8x64xf32>
    %753 = vector.extract_strided_slice %749 {offsets = [0, 192], sizes = [8, 64], strides = [1, 1]} : vector<8x256xf32> to vector<8x64xf32>
    %754 = arith.mulf %751, %733 : vector<8x64xf32>
    %755 = arith.mulf %750, %752 : vector<8x64xf32>
    %756 = arith.addf %754, %755 : vector<8x64xf32>
    %757 = math.tanh %756 : vector<8x64xf32>
    %758 = arith.mulf %753, %757 : vector<8x64xf32>
    %759 = vector.extract_strided_slice %758 {offsets = [0, 0], sizes = [8, 32], strides = [1, 1]} : vector<8x64xf32> to vector<8x32xf32>
    %c56_249 = arith.constant 56 : index
    %c0_250 = arith.constant 0 : index
    %760 = vector.load %arg9[%c56_249, %c0_250] : memref<64x64xf32, #tpu.memory_space<vmem>>, vector<8x32xf32>
    tpu.vector_store %arg9[%c56_249, %c0_250], %759 {strides = array<i32>} : memref<64x64xf32, #tpu.memory_space<vmem>>, vector<8x32xf32>,
    %761 = vector.extract_strided_slice %758 {offsets = [0, 32], sizes = [8, 32], strides = [1, 1]} : vector<8x64xf32> to vector<8x32xf32>
    %c0_251 = arith.constant 0 : index
    %c32_252 = arith.constant 32 : index
    %762 = vector.load %arg9[%c0_251, %c32_252] : memref<64x64xf32, #tpu.memory_space<vmem>>, vector<8x32xf32>
    tpu.vector_store %arg9[%c0_251, %c32_252], %761 {strides = array<i32>} : memref<64x64xf32, #tpu.memory_space<vmem>>, vector<8x32xf32>,
    %c0_253 = arith.constant 0 : index
    %c0_254 = arith.constant 0 : index
    %763 = vector.load %arg9[%c0_253, %c0_254] : memref<64x64xf32, #tpu.memory_space<vmem>>, vector<64x64xf32>
    %c2_255 = arith.constant 2 : index
    %c0_256 = arith.constant 0 : index
    %c0_257 = arith.constant 0 : index
    %764 = vector.load %arg2[%c2_255, %c0_256, %c0_257] : memref<3x64x256xf32, #tpu.memory_space<vmem>>, vector<1x64x256xf32>
    %765 = vector.shape_cast %764 : vector<1x64x256xf32> to vector<64x256xf32>
    %cst_258 = arith.constant dense<0.000000e+00> : vector<64x256xf32>
    %766 = tpu.matmul %763, %765, %cst_258 {dimension_numbers = #tpu.dot_dimension_numbers<[1], [0], [0], [1], [0, 0, 1, 1], [], []>} : vector<64x64xf32>, vector<64x256xf32>, vector<64x256xf32> -> vector<64x256xf32>
    %c3 = arith.constant 3 : index
    %c0_259 = arith.constant 0 : index
    %c0_260 = arith.constant 0 : index
    %767 = vector.load %arg4[%c3, %c0_259, %c0_260] : memref<4x1x256xf32, #tpu.memory_space<vmem>>, vector<1x1x256xf32>
    %768 = vector.shape_cast %767 : vector<1x1x256xf32> to vector<1x256xf32>
    %769 = vector.broadcast %768 : vector<1x256xf32> to vector<64x256xf32>
    %770 = arith.addf %766, %769 : vector<64x256xf32>
    %771 = vector.extract_strided_slice %770 {offsets = [0, 0], sizes = [8, 256], strides = [1, 1]} : vector<64x256xf32> to vector<8x256xf32>
    %772 = vector.extract_strided_slice %770 {offsets = [56, 0], sizes = [8, 256], strides = [1, 1]} : vector<64x256xf32> to vector<8x256xf32>
    %773 = vector.shape_cast %18 : vector<1x256xi1> to vector<1x256xi1>
    %774 = vector.broadcast %773 : vector<1x256xi1> to vector<8x256xi1>
    %775 = arith.select %774, %771, %772 : vector<8x256xi1>, vector<8x256xf32>
    %c0_261 = arith.constant 0 : index
    %c0_262 = arith.constant 0 : index
    %776 = vector.load %arg8[%c0_261, %c0_262] : memref<64x256xf32, #tpu.memory_space<vmem>>, vector<8x256xf32>
    tpu.vector_store %arg8[%c0_261, %c0_262], %775 {strides = array<i32>} : memref<64x256xf32, #tpu.memory_space<vmem>>, vector<8x256xf32>,
    %777 = vector.extract_strided_slice %770 {offsets = [8, 0], sizes = [8, 256], strides = [1, 1]} : vector<64x256xf32> to vector<8x256xf32>
    %778 = vector.extract_strided_slice %770 {offsets = [48, 0], sizes = [8, 256], strides = [1, 1]} : vector<64x256xf32> to vector<8x256xf32>
    %779 = vector.shape_cast %18 : vector<1x256xi1> to vector<1x256xi1>
    %780 = vector.broadcast %779 : vector<1x256xi1> to vector<8x256xi1>
    %781 = arith.select %780, %777, %778 : vector<8x256xi1>, vector<8x256xf32>
    %c8_263 = arith.constant 8 : index
    %c0_264 = arith.constant 0 : index
    %782 = vector.load %arg8[%c8_263, %c0_264] : memref<64x256xf32, #tpu.memory_space<vmem>>, vector<8x256xf32>
    tpu.vector_store %arg8[%c8_263, %c0_264], %781 {strides = array<i32>} : memref<64x256xf32, #tpu.memory_space<vmem>>, vector<8x256xf32>,
    %783 = vector.extract_strided_slice %770 {offsets = [16, 0], sizes = [8, 256], strides = [1, 1]} : vector<64x256xf32> to vector<8x256xf32>
    %784 = vector.extract_strided_slice %770 {offsets = [40, 0], sizes = [8, 256], strides = [1, 1]} : vector<64x256xf32> to vector<8x256xf32>
    %785 = vector.shape_cast %18 : vector<1x256xi1> to vector<1x256xi1>
    %786 = vector.broadcast %785 : vector<1x256xi1> to vector<8x256xi1>
    %787 = arith.select %786, %783, %784 : vector<8x256xi1>, vector<8x256xf32>
    %c16_265 = arith.constant 16 : index
    %c0_266 = arith.constant 0 : index
    %788 = vector.load %arg8[%c16_265, %c0_266] : memref<64x256xf32, #tpu.memory_space<vmem>>, vector<8x256xf32>
    tpu.vector_store %arg8[%c16_265, %c0_266], %787 {strides = array<i32>} : memref<64x256xf32, #tpu.memory_space<vmem>>, vector<8x256xf32>,
    %789 = vector.extract_strided_slice %770 {offsets = [24, 0], sizes = [8, 256], strides = [1, 1]} : vector<64x256xf32> to vector<8x256xf32>
    %790 = vector.extract_strided_slice %770 {offsets = [32, 0], sizes = [8, 256], strides = [1, 1]} : vector<64x256xf32> to vector<8x256xf32>
    %791 = vector.shape_cast %18 : vector<1x256xi1> to vector<1x256xi1>
    %792 = vector.broadcast %791 : vector<1x256xi1> to vector<8x256xi1>
    %793 = arith.select %792, %789, %790 : vector<8x256xi1>, vector<8x256xf32>
    %c24_267 = arith.constant 24 : index
    %c0_268 = arith.constant 0 : index
    %794 = vector.load %arg8[%c24_267, %c0_268] : memref<64x256xf32, #tpu.memory_space<vmem>>, vector<8x256xf32>
    tpu.vector_store %arg8[%c24_267, %c0_268], %793 {strides = array<i32>} : memref<64x256xf32, #tpu.memory_space<vmem>>, vector<8x256xf32>,
    %795 = vector.extract_strided_slice %770 {offsets = [32, 0], sizes = [8, 256], strides = [1, 1]} : vector<64x256xf32> to vector<8x256xf32>
    %796 = vector.extract_strided_slice %770 {offsets = [24, 0], sizes = [8, 256], strides = [1, 1]} : vector<64x256xf32> to vector<8x256xf32>
    %797 = vector.shape_cast %18 : vector<1x256xi1> to vector<1x256xi1>
    %798 = vector.broadcast %797 : vector<1x256xi1> to vector<8x256xi1>
    %799 = arith.select %798, %795, %796 : vector<8x256xi1>, vector<8x256xf32>
    %c32_269 = arith.constant 32 : index
    %c0_270 = arith.constant 0 : index
    %800 = vector.load %arg8[%c32_269, %c0_270] : memref<64x256xf32, #tpu.memory_space<vmem>>, vector<8x256xf32>
    tpu.vector_store %arg8[%c32_269, %c0_270], %799 {strides = array<i32>} : memref<64x256xf32, #tpu.memory_space<vmem>>, vector<8x256xf32>,
    %801 = vector.extract_strided_slice %770 {offsets = [40, 0], sizes = [8, 256], strides = [1, 1]} : vector<64x256xf32> to vector<8x256xf32>
    %802 = vector.extract_strided_slice %770 {offsets = [16, 0], sizes = [8, 256], strides = [1, 1]} : vector<64x256xf32> to vector<8x256xf32>
    %803 = vector.shape_cast %18 : vector<1x256xi1> to vector<1x256xi1>
    %804 = vector.broadcast %803 : vector<1x256xi1> to vector<8x256xi1>
    %805 = arith.select %804, %801, %802 : vector<8x256xi1>, vector<8x256xf32>
    %c40_271 = arith.constant 40 : index
    %c0_272 = arith.constant 0 : index
    %806 = vector.load %arg8[%c40_271, %c0_272] : memref<64x256xf32, #tpu.memory_space<vmem>>, vector<8x256xf32>
    tpu.vector_store %arg8[%c40_271, %c0_272], %805 {strides = array<i32>} : memref<64x256xf32, #tpu.memory_space<vmem>>, vector<8x256xf32>,
    %807 = vector.extract_strided_slice %770 {offsets = [48, 0], sizes = [8, 256], strides = [1, 1]} : vector<64x256xf32> to vector<8x256xf32>
    %808 = vector.extract_strided_slice %770 {offsets = [8, 0], sizes = [8, 256], strides = [1, 1]} : vector<64x256xf32> to vector<8x256xf32>
    %809 = vector.shape_cast %18 : vector<1x256xi1> to vector<1x256xi1>
    %810 = vector.broadcast %809 : vector<1x256xi1> to vector<8x256xi1>
    %811 = arith.select %810, %807, %808 : vector<8x256xi1>, vector<8x256xf32>
    %c48_273 = arith.constant 48 : index
    %c0_274 = arith.constant 0 : index
    %812 = vector.load %arg8[%c48_273, %c0_274] : memref<64x256xf32, #tpu.memory_space<vmem>>, vector<8x256xf32>
    tpu.vector_store %arg8[%c48_273, %c0_274], %811 {strides = array<i32>} : memref<64x256xf32, #tpu.memory_space<vmem>>, vector<8x256xf32>,
    %813 = vector.extract_strided_slice %770 {offsets = [56, 0], sizes = [8, 256], strides = [1, 1]} : vector<64x256xf32> to vector<8x256xf32>
    %814 = vector.extract_strided_slice %770 {offsets = [0, 0], sizes = [8, 256], strides = [1, 1]} : vector<64x256xf32> to vector<8x256xf32>
    %815 = vector.shape_cast %18 : vector<1x256xi1> to vector<1x256xi1>
    %816 = vector.broadcast %815 : vector<1x256xi1> to vector<8x256xi1>
    %817 = arith.select %816, %813, %814 : vector<8x256xi1>, vector<8x256xf32>
    %c56_275 = arith.constant 56 : index
    %c0_276 = arith.constant 0 : index
    %818 = vector.load %arg8[%c56_275, %c0_276] : memref<64x256xf32, #tpu.memory_space<vmem>>, vector<8x256xf32>
    tpu.vector_store %arg8[%c56_275, %c0_276], %817 {strides = array<i32>} : memref<64x256xf32, #tpu.memory_space<vmem>>, vector<8x256xf32>,
    %c3_277 = arith.constant 3 : index
    %c0_278 = arith.constant 0 : index
    %c0_279 = arith.constant 0 : index
    %819 = vector.load %arg3[%c3_277, %c0_278, %c0_279] : memref<4x64x256xf32, #tpu.memory_space<vmem>>, vector<1x64x256xf32>
    %820 = vector.shape_cast %819 : vector<1x64x256xf32> to vector<64x256xf32>
    %cst_280 = arith.constant 0.000000e+00 : f32
    %821 = vector.broadcast %cst_280 : f32 to vector<8x64xf32>
    %cst_281 = arith.constant 0.000000e+00 : f32
    %822 = vector.broadcast %cst_281 : f32 to vector<8x64xf32>
    %c0_282 = arith.constant 0 : index
    %c0_283 = arith.constant 0 : index
    %823 = vector.load %arg8[%c0_282, %c0_283] : memref<64x256xf32, #tpu.memory_space<vmem>>, vector<8x256xf32>
    %cst_284 = arith.constant dense<0.000000e+00> : vector<8x256xf32>
    %824 = tpu.matmul %821, %820, %cst_284 {dimension_numbers = #tpu.dot_dimension_numbers<[1], [0], [0], [1], [0, 0, 1, 1], [], []>} : vector<8x64xf32>, vector<64x256xf32>, vector<8x256xf32> -> vector<8x256xf32>
    %825 = arith.addf %823, %824 : vector<8x256xf32>
    %826 = vector.broadcast %26 : vector<1x256xf32> to vector<8x256xf32>
    %827 = arith.mulf %825, %826 : vector<8x256xf32>
    %828 = math.tanh %827 : vector<8x256xf32>
    %829 = vector.broadcast %26 : vector<1x256xf32> to vector<8x256xf32>
    %830 = arith.mulf %828, %829 : vector<8x256xf32>
    %831 = vector.broadcast %28 : vector<1x256xf32> to vector<8x256xf32>
    %832 = arith.addf %830, %831 : vector<8x256xf32>
    %833 = vector.extract_strided_slice %832 {offsets = [0, 0], sizes = [8, 64], strides = [1, 1]} : vector<8x256xf32> to vector<8x64xf32>
    %834 = vector.extract_strided_slice %832 {offsets = [0, 64], sizes = [8, 64], strides = [1, 1]} : vector<8x256xf32> to vector<8x64xf32>
    %835 = vector.extract_strided_slice %832 {offsets = [0, 128], sizes = [8, 64], strides = [1, 1]} : vector<8x256xf32> to vector<8x64xf32>
    %836 = vector.extract_strided_slice %832 {offsets = [0, 192], sizes = [8, 64], strides = [1, 1]} : vector<8x256xf32> to vector<8x64xf32>
    %837 = arith.mulf %834, %822 : vector<8x64xf32>
    %838 = arith.mulf %833, %835 : vector<8x64xf32>
    %839 = arith.addf %837, %838 : vector<8x64xf32>
    %840 = math.tanh %839 : vector<8x64xf32>
    %841 = arith.mulf %836, %840 : vector<8x64xf32>
    %842 = vector.extract_strided_slice %841 {offsets = [0, 0], sizes = [8, 32], strides = [1, 1]} : vector<8x64xf32> to vector<8x32xf32>
    %c0_285 = arith.constant 0 : index
    %c0_286 = arith.constant 0 : index
    %843 = vector.load %arg9[%c0_285, %c0_286] : memref<64x64xf32, #tpu.memory_space<vmem>>, vector<8x32xf32>
    tpu.vector_store %arg9[%c0_285, %c0_286], %842 {strides = array<i32>} : memref<64x64xf32, #tpu.memory_space<vmem>>, vector<8x32xf32>,
    %844 = vector.extract_strided_slice %841 {offsets = [0, 32], sizes = [8, 32], strides = [1, 1]} : vector<8x64xf32> to vector<8x32xf32>
    %c56_287 = arith.constant 56 : index
    %c32_288 = arith.constant 32 : index
    %845 = vector.load %arg9[%c56_287, %c32_288] : memref<64x64xf32, #tpu.memory_space<vmem>>, vector<8x32xf32>
    tpu.vector_store %arg9[%c56_287, %c32_288], %844 {strides = array<i32>} : memref<64x64xf32, #tpu.memory_space<vmem>>, vector<8x32xf32>,
    %c8_289 = arith.constant 8 : index
    %c0_290 = arith.constant 0 : index
    %846 = vector.load %arg8[%c8_289, %c0_290] : memref<64x256xf32, #tpu.memory_space<vmem>>, vector<8x256xf32>
    %cst_291 = arith.constant dense<0.000000e+00> : vector<8x256xf32>
    %847 = tpu.matmul %841, %820, %cst_291 {dimension_numbers = #tpu.dot_dimension_numbers<[1], [0], [0], [1], [0, 0, 1, 1], [], []>} : vector<8x64xf32>, vector<64x256xf32>, vector<8x256xf32> -> vector<8x256xf32>
    %848 = arith.addf %846, %847 : vector<8x256xf32>
    %849 = vector.broadcast %26 : vector<1x256xf32> to vector<8x256xf32>
    %850 = arith.mulf %848, %849 : vector<8x256xf32>
    %851 = math.tanh %850 : vector<8x256xf32>
    %852 = vector.broadcast %26 : vector<1x256xf32> to vector<8x256xf32>
    %853 = arith.mulf %851, %852 : vector<8x256xf32>
    %854 = vector.broadcast %28 : vector<1x256xf32> to vector<8x256xf32>
    %855 = arith.addf %853, %854 : vector<8x256xf32>
    %856 = vector.extract_strided_slice %855 {offsets = [0, 0], sizes = [8, 64], strides = [1, 1]} : vector<8x256xf32> to vector<8x64xf32>
    %857 = vector.extract_strided_slice %855 {offsets = [0, 64], sizes = [8, 64], strides = [1, 1]} : vector<8x256xf32> to vector<8x64xf32>
    %858 = vector.extract_strided_slice %855 {offsets = [0, 128], sizes = [8, 64], strides = [1, 1]} : vector<8x256xf32> to vector<8x64xf32>
    %859 = vector.extract_strided_slice %855 {offsets = [0, 192], sizes = [8, 64], strides = [1, 1]} : vector<8x256xf32> to vector<8x64xf32>
    %860 = arith.mulf %857, %839 : vector<8x64xf32>
    %861 = arith.mulf %856, %858 : vector<8x64xf32>
    %862 = arith.addf %860, %861 : vector<8x64xf32>
    %863 = math.tanh %862 : vector<8x64xf32>
    %864 = arith.mulf %859, %863 : vector<8x64xf32>
    %865 = vector.extract_strided_slice %864 {offsets = [0, 0], sizes = [8, 32], strides = [1, 1]} : vector<8x64xf32> to vector<8x32xf32>
    %c8_292 = arith.constant 8 : index
    %c0_293 = arith.constant 0 : index
    %866 = vector.load %arg9[%c8_292, %c0_293] : memref<64x64xf32, #tpu.memory_space<vmem>>, vector<8x32xf32>
    tpu.vector_store %arg9[%c8_292, %c0_293], %865 {strides = array<i32>} : memref<64x64xf32, #tpu.memory_space<vmem>>, vector<8x32xf32>,
    %867 = vector.extract_strided_slice %864 {offsets = [0, 32], sizes = [8, 32], strides = [1, 1]} : vector<8x64xf32> to vector<8x32xf32>
    %c48_294 = arith.constant 48 : index
    %c32_295 = arith.constant 32 : index
    %868 = vector.load %arg9[%c48_294, %c32_295] : memref<64x64xf32, #tpu.memory_space<vmem>>, vector<8x32xf32>
    tpu.vector_store %arg9[%c48_294, %c32_295], %867 {strides = array<i32>} : memref<64x64xf32, #tpu.memory_space<vmem>>, vector<8x32xf32>,
    %c16_296 = arith.constant 16 : index
    %c0_297 = arith.constant 0 : index
    %869 = vector.load %arg8[%c16_296, %c0_297] : memref<64x256xf32, #tpu.memory_space<vmem>>, vector<8x256xf32>
    %cst_298 = arith.constant dense<0.000000e+00> : vector<8x256xf32>
    %870 = tpu.matmul %864, %820, %cst_298 {dimension_numbers = #tpu.dot_dimension_numbers<[1], [0], [0], [1], [0, 0, 1, 1], [], []>} : vector<8x64xf32>, vector<64x256xf32>, vector<8x256xf32> -> vector<8x256xf32>
    %871 = arith.addf %869, %870 : vector<8x256xf32>
    %872 = vector.broadcast %26 : vector<1x256xf32> to vector<8x256xf32>
    %873 = arith.mulf %871, %872 : vector<8x256xf32>
    %874 = math.tanh %873 : vector<8x256xf32>
    %875 = vector.broadcast %26 : vector<1x256xf32> to vector<8x256xf32>
    %876 = arith.mulf %874, %875 : vector<8x256xf32>
    %877 = vector.broadcast %28 : vector<1x256xf32> to vector<8x256xf32>
    %878 = arith.addf %876, %877 : vector<8x256xf32>
    %879 = vector.extract_strided_slice %878 {offsets = [0, 0], sizes = [8, 64], strides = [1, 1]} : vector<8x256xf32> to vector<8x64xf32>
    %880 = vector.extract_strided_slice %878 {offsets = [0, 64], sizes = [8, 64], strides = [1, 1]} : vector<8x256xf32> to vector<8x64xf32>
    %881 = vector.extract_strided_slice %878 {offsets = [0, 128], sizes = [8, 64], strides = [1, 1]} : vector<8x256xf32> to vector<8x64xf32>
    %882 = vector.extract_strided_slice %878 {offsets = [0, 192], sizes = [8, 64], strides = [1, 1]} : vector<8x256xf32> to vector<8x64xf32>
    %883 = arith.mulf %880, %862 : vector<8x64xf32>
    %884 = arith.mulf %879, %881 : vector<8x64xf32>
    %885 = arith.addf %883, %884 : vector<8x64xf32>
    %886 = math.tanh %885 : vector<8x64xf32>
    %887 = arith.mulf %882, %886 : vector<8x64xf32>
    %888 = vector.extract_strided_slice %887 {offsets = [0, 0], sizes = [8, 32], strides = [1, 1]} : vector<8x64xf32> to vector<8x32xf32>
    %c16_299 = arith.constant 16 : index
    %c0_300 = arith.constant 0 : index
    %889 = vector.load %arg9[%c16_299, %c0_300] : memref<64x64xf32, #tpu.memory_space<vmem>>, vector<8x32xf32>
    tpu.vector_store %arg9[%c16_299, %c0_300], %888 {strides = array<i32>} : memref<64x64xf32, #tpu.memory_space<vmem>>, vector<8x32xf32>,
    %890 = vector.extract_strided_slice %887 {offsets = [0, 32], sizes = [8, 32], strides = [1, 1]} : vector<8x64xf32> to vector<8x32xf32>
    %c40_301 = arith.constant 40 : index
    %c32_302 = arith.constant 32 : index
    %891 = vector.load %arg9[%c40_301, %c32_302] : memref<64x64xf32, #tpu.memory_space<vmem>>, vector<8x32xf32>
    tpu.vector_store %arg9[%c40_301, %c32_302], %890 {strides = array<i32>} : memref<64x64xf32, #tpu.memory_space<vmem>>, vector<8x32xf32>,
    %c24_303 = arith.constant 24 : index
    %c0_304 = arith.constant 0 : index
    %892 = vector.load %arg8[%c24_303, %c0_304] : memref<64x256xf32, #tpu.memory_space<vmem>>, vector<8x256xf32>
    %cst_305 = arith.constant dense<0.000000e+00> : vector<8x256xf32>
    %893 = tpu.matmul %887, %820, %cst_305 {dimension_numbers = #tpu.dot_dimension_numbers<[1], [0], [0], [1], [0, 0, 1, 1], [], []>} : vector<8x64xf32>, vector<64x256xf32>, vector<8x256xf32> -> vector<8x256xf32>
    %894 = arith.addf %892, %893 : vector<8x256xf32>
    %895 = vector.broadcast %26 : vector<1x256xf32> to vector<8x256xf32>
    %896 = arith.mulf %894, %895 : vector<8x256xf32>
    %897 = math.tanh %896 : vector<8x256xf32>
    %898 = vector.broadcast %26 : vector<1x256xf32> to vector<8x256xf32>
    %899 = arith.mulf %897, %898 : vector<8x256xf32>
    %900 = vector.broadcast %28 : vector<1x256xf32> to vector<8x256xf32>
    %901 = arith.addf %899, %900 : vector<8x256xf32>
    %902 = vector.extract_strided_slice %901 {offsets = [0, 0], sizes = [8, 64], strides = [1, 1]} : vector<8x256xf32> to vector<8x64xf32>
    %903 = vector.extract_strided_slice %901 {offsets = [0, 64], sizes = [8, 64], strides = [1, 1]} : vector<8x256xf32> to vector<8x64xf32>
    %904 = vector.extract_strided_slice %901 {offsets = [0, 128], sizes = [8, 64], strides = [1, 1]} : vector<8x256xf32> to vector<8x64xf32>
    %905 = vector.extract_strided_slice %901 {offsets = [0, 192], sizes = [8, 64], strides = [1, 1]} : vector<8x256xf32> to vector<8x64xf32>
    %906 = arith.mulf %903, %885 : vector<8x64xf32>
    %907 = arith.mulf %902, %904 : vector<8x64xf32>
    %908 = arith.addf %906, %907 : vector<8x64xf32>
    %909 = math.tanh %908 : vector<8x64xf32>
    %910 = arith.mulf %905, %909 : vector<8x64xf32>
    %911 = vector.extract_strided_slice %910 {offsets = [0, 0], sizes = [8, 32], strides = [1, 1]} : vector<8x64xf32> to vector<8x32xf32>
    %c24_306 = arith.constant 24 : index
    %c0_307 = arith.constant 0 : index
    %912 = vector.load %arg9[%c24_306, %c0_307] : memref<64x64xf32, #tpu.memory_space<vmem>>, vector<8x32xf32>
    tpu.vector_store %arg9[%c24_306, %c0_307], %911 {strides = array<i32>} : memref<64x64xf32, #tpu.memory_space<vmem>>, vector<8x32xf32>,
    %913 = vector.extract_strided_slice %910 {offsets = [0, 32], sizes = [8, 32], strides = [1, 1]} : vector<8x64xf32> to vector<8x32xf32>
    %c32_308 = arith.constant 32 : index
    %c32_309 = arith.constant 32 : index
    %914 = vector.load %arg9[%c32_308, %c32_309] : memref<64x64xf32, #tpu.memory_space<vmem>>, vector<8x32xf32>
    tpu.vector_store %arg9[%c32_308, %c32_309], %913 {strides = array<i32>} : memref<64x64xf32, #tpu.memory_space<vmem>>, vector<8x32xf32>,
    %c32_310 = arith.constant 32 : index
    %c0_311 = arith.constant 0 : index
    %915 = vector.load %arg8[%c32_310, %c0_311] : memref<64x256xf32, #tpu.memory_space<vmem>>, vector<8x256xf32>
    %cst_312 = arith.constant dense<0.000000e+00> : vector<8x256xf32>
    %916 = tpu.matmul %910, %820, %cst_312 {dimension_numbers = #tpu.dot_dimension_numbers<[1], [0], [0], [1], [0, 0, 1, 1], [], []>} : vector<8x64xf32>, vector<64x256xf32>, vector<8x256xf32> -> vector<8x256xf32>
    %917 = arith.addf %915, %916 : vector<8x256xf32>
    %918 = vector.broadcast %26 : vector<1x256xf32> to vector<8x256xf32>
    %919 = arith.mulf %917, %918 : vector<8x256xf32>
    %920 = math.tanh %919 : vector<8x256xf32>
    %921 = vector.broadcast %26 : vector<1x256xf32> to vector<8x256xf32>
    %922 = arith.mulf %920, %921 : vector<8x256xf32>
    %923 = vector.broadcast %28 : vector<1x256xf32> to vector<8x256xf32>
    %924 = arith.addf %922, %923 : vector<8x256xf32>
    %925 = vector.extract_strided_slice %924 {offsets = [0, 0], sizes = [8, 64], strides = [1, 1]} : vector<8x256xf32> to vector<8x64xf32>
    %926 = vector.extract_strided_slice %924 {offsets = [0, 64], sizes = [8, 64], strides = [1, 1]} : vector<8x256xf32> to vector<8x64xf32>
    %927 = vector.extract_strided_slice %924 {offsets = [0, 128], sizes = [8, 64], strides = [1, 1]} : vector<8x256xf32> to vector<8x64xf32>
    %928 = vector.extract_strided_slice %924 {offsets = [0, 192], sizes = [8, 64], strides = [1, 1]} : vector<8x256xf32> to vector<8x64xf32>
    %929 = arith.mulf %926, %908 : vector<8x64xf32>
    %930 = arith.mulf %925, %927 : vector<8x64xf32>
    %931 = arith.addf %929, %930 : vector<8x64xf32>
    %932 = math.tanh %931 : vector<8x64xf32>
    %933 = arith.mulf %928, %932 : vector<8x64xf32>
    %934 = vector.extract_strided_slice %933 {offsets = [0, 0], sizes = [8, 32], strides = [1, 1]} : vector<8x64xf32> to vector<8x32xf32>
    %c32_313 = arith.constant 32 : index
    %c0_314 = arith.constant 0 : index
    %935 = vector.load %arg9[%c32_313, %c0_314] : memref<64x64xf32, #tpu.memory_space<vmem>>, vector<8x32xf32>
    tpu.vector_store %arg9[%c32_313, %c0_314], %934 {strides = array<i32>} : memref<64x64xf32, #tpu.memory_space<vmem>>, vector<8x32xf32>,
    %936 = vector.extract_strided_slice %933 {offsets = [0, 32], sizes = [8, 32], strides = [1, 1]} : vector<8x64xf32> to vector<8x32xf32>
    %c24_315 = arith.constant 24 : index
    %c32_316 = arith.constant 32 : index
    %937 = vector.load %arg9[%c24_315, %c32_316] : memref<64x64xf32, #tpu.memory_space<vmem>>, vector<8x32xf32>
    tpu.vector_store %arg9[%c24_315, %c32_316], %936 {strides = array<i32>} : memref<64x64xf32, #tpu.memory_space<vmem>>, vector<8x32xf32>,
    %c40_317 = arith.constant 40 : index
    %c0_318 = arith.constant 0 : index
    %938 = vector.load %arg8[%c40_317, %c0_318] : memref<64x256xf32, #tpu.memory_space<vmem>>, vector<8x256xf32>
    %cst_319 = arith.constant dense<0.000000e+00> : vector<8x256xf32>
    %939 = tpu.matmul %933, %820, %cst_319 {dimension_numbers = #tpu.dot_dimension_numbers<[1], [0], [0], [1], [0, 0, 1, 1], [], []>} : vector<8x64xf32>, vector<64x256xf32>, vector<8x256xf32> -> vector<8x256xf32>
    %940 = arith.addf %938, %939 : vector<8x256xf32>
    %941 = vector.broadcast %26 : vector<1x256xf32> to vector<8x256xf32>
    %942 = arith.mulf %940, %941 : vector<8x256xf32>
    %943 = math.tanh %942 : vector<8x256xf32>
    %944 = vector.broadcast %26 : vector<1x256xf32> to vector<8x256xf32>
    %945 = arith.mulf %943, %944 : vector<8x256xf32>
    %946 = vector.broadcast %28 : vector<1x256xf32> to vector<8x256xf32>
    %947 = arith.addf %945, %946 : vector<8x256xf32>
    %948 = vector.extract_strided_slice %947 {offsets = [0, 0], sizes = [8, 64], strides = [1, 1]} : vector<8x256xf32> to vector<8x64xf32>
    %949 = vector.extract_strided_slice %947 {offsets = [0, 64], sizes = [8, 64], strides = [1, 1]} : vector<8x256xf32> to vector<8x64xf32>
    %950 = vector.extract_strided_slice %947 {offsets = [0, 128], sizes = [8, 64], strides = [1, 1]} : vector<8x256xf32> to vector<8x64xf32>
    %951 = vector.extract_strided_slice %947 {offsets = [0, 192], sizes = [8, 64], strides = [1, 1]} : vector<8x256xf32> to vector<8x64xf32>
    %952 = arith.mulf %949, %931 : vector<8x64xf32>
    %953 = arith.mulf %948, %950 : vector<8x64xf32>
    %954 = arith.addf %952, %953 : vector<8x64xf32>
    %955 = math.tanh %954 : vector<8x64xf32>
    %956 = arith.mulf %951, %955 : vector<8x64xf32>
    %957 = vector.extract_strided_slice %956 {offsets = [0, 0], sizes = [8, 32], strides = [1, 1]} : vector<8x64xf32> to vector<8x32xf32>
    %c40_320 = arith.constant 40 : index
    %c0_321 = arith.constant 0 : index
    %958 = vector.load %arg9[%c40_320, %c0_321] : memref<64x64xf32, #tpu.memory_space<vmem>>, vector<8x32xf32>
    tpu.vector_store %arg9[%c40_320, %c0_321], %957 {strides = array<i32>} : memref<64x64xf32, #tpu.memory_space<vmem>>, vector<8x32xf32>,
    %959 = vector.extract_strided_slice %956 {offsets = [0, 32], sizes = [8, 32], strides = [1, 1]} : vector<8x64xf32> to vector<8x32xf32>
    %c16_322 = arith.constant 16 : index
    %c32_323 = arith.constant 32 : index
    %960 = vector.load %arg9[%c16_322, %c32_323] : memref<64x64xf32, #tpu.memory_space<vmem>>, vector<8x32xf32>
    tpu.vector_store %arg9[%c16_322, %c32_323], %959 {strides = array<i32>} : memref<64x64xf32, #tpu.memory_space<vmem>>, vector<8x32xf32>,
    %c48_324 = arith.constant 48 : index
    %c0_325 = arith.constant 0 : index
    %961 = vector.load %arg8[%c48_324, %c0_325] : memref<64x256xf32, #tpu.memory_space<vmem>>, vector<8x256xf32>
    %cst_326 = arith.constant dense<0.000000e+00> : vector<8x256xf32>
    %962 = tpu.matmul %956, %820, %cst_326 {dimension_numbers = #tpu.dot_dimension_numbers<[1], [0], [0], [1], [0, 0, 1, 1], [], []>} : vector<8x64xf32>, vector<64x256xf32>, vector<8x256xf32> -> vector<8x256xf32>
    %963 = arith.addf %961, %962 : vector<8x256xf32>
    %964 = vector.broadcast %26 : vector<1x256xf32> to vector<8x256xf32>
    %965 = arith.mulf %963, %964 : vector<8x256xf32>
    %966 = math.tanh %965 : vector<8x256xf32>
    %967 = vector.broadcast %26 : vector<1x256xf32> to vector<8x256xf32>
    %968 = arith.mulf %966, %967 : vector<8x256xf32>
    %969 = vector.broadcast %28 : vector<1x256xf32> to vector<8x256xf32>
    %970 = arith.addf %968, %969 : vector<8x256xf32>
    %971 = vector.extract_strided_slice %970 {offsets = [0, 0], sizes = [8, 64], strides = [1, 1]} : vector<8x256xf32> to vector<8x64xf32>
    %972 = vector.extract_strided_slice %970 {offsets = [0, 64], sizes = [8, 64], strides = [1, 1]} : vector<8x256xf32> to vector<8x64xf32>
    %973 = vector.extract_strided_slice %970 {offsets = [0, 128], sizes = [8, 64], strides = [1, 1]} : vector<8x256xf32> to vector<8x64xf32>
    %974 = vector.extract_strided_slice %970 {offsets = [0, 192], sizes = [8, 64], strides = [1, 1]} : vector<8x256xf32> to vector<8x64xf32>
    %975 = arith.mulf %972, %954 : vector<8x64xf32>
    %976 = arith.mulf %971, %973 : vector<8x64xf32>
    %977 = arith.addf %975, %976 : vector<8x64xf32>
    %978 = math.tanh %977 : vector<8x64xf32>
    %979 = arith.mulf %974, %978 : vector<8x64xf32>
    %980 = vector.extract_strided_slice %979 {offsets = [0, 0], sizes = [8, 32], strides = [1, 1]} : vector<8x64xf32> to vector<8x32xf32>
    %c48_327 = arith.constant 48 : index
    %c0_328 = arith.constant 0 : index
    %981 = vector.load %arg9[%c48_327, %c0_328] : memref<64x64xf32, #tpu.memory_space<vmem>>, vector<8x32xf32>
    tpu.vector_store %arg9[%c48_327, %c0_328], %980 {strides = array<i32>} : memref<64x64xf32, #tpu.memory_space<vmem>>, vector<8x32xf32>,
    %982 = vector.extract_strided_slice %979 {offsets = [0, 32], sizes = [8, 32], strides = [1, 1]} : vector<8x64xf32> to vector<8x32xf32>
    %c8_329 = arith.constant 8 : index
    %c32_330 = arith.constant 32 : index
    %983 = vector.load %arg9[%c8_329, %c32_330] : memref<64x64xf32, #tpu.memory_space<vmem>>, vector<8x32xf32>
    tpu.vector_store %arg9[%c8_329, %c32_330], %982 {strides = array<i32>} : memref<64x64xf32, #tpu.memory_space<vmem>>, vector<8x32xf32>,
    %c56_331 = arith.constant 56 : index
    %c0_332 = arith.constant 0 : index
    %984 = vector.load %arg8[%c56_331, %c0_332] : memref<64x256xf32, #tpu.memory_space<vmem>>, vector<8x256xf32>
    %cst_333 = arith.constant dense<0.000000e+00> : vector<8x256xf32>
    %985 = tpu.matmul %979, %820, %cst_333 {dimension_numbers = #tpu.dot_dimension_numbers<[1], [0], [0], [1], [0, 0, 1, 1], [], []>} : vector<8x64xf32>, vector<64x256xf32>, vector<8x256xf32> -> vector<8x256xf32>
    %986 = arith.addf %984, %985 : vector<8x256xf32>
    %987 = vector.broadcast %26 : vector<1x256xf32> to vector<8x256xf32>
    %988 = arith.mulf %986, %987 : vector<8x256xf32>
    %989 = math.tanh %988 : vector<8x256xf32>
    %990 = vector.broadcast %26 : vector<1x256xf32> to vector<8x256xf32>
    %991 = arith.mulf %989, %990 : vector<8x256xf32>
    %992 = vector.broadcast %28 : vector<1x256xf32> to vector<8x256xf32>
    %993 = arith.addf %991, %992 : vector<8x256xf32>
    %994 = vector.extract_strided_slice %993 {offsets = [0, 0], sizes = [8, 64], strides = [1, 1]} : vector<8x256xf32> to vector<8x64xf32>
    %995 = vector.extract_strided_slice %993 {offsets = [0, 64], sizes = [8, 64], strides = [1, 1]} : vector<8x256xf32> to vector<8x64xf32>
    %996 = vector.extract_strided_slice %993 {offsets = [0, 128], sizes = [8, 64], strides = [1, 1]} : vector<8x256xf32> to vector<8x64xf32>
    %997 = vector.extract_strided_slice %993 {offsets = [0, 192], sizes = [8, 64], strides = [1, 1]} : vector<8x256xf32> to vector<8x64xf32>
    %998 = arith.mulf %995, %977 : vector<8x64xf32>
    %999 = arith.mulf %994, %996 : vector<8x64xf32>
    %1000 = arith.addf %998, %999 : vector<8x64xf32>
    %1001 = math.tanh %1000 : vector<8x64xf32>
    %1002 = arith.mulf %997, %1001 : vector<8x64xf32>
    %1003 = vector.extract_strided_slice %1002 {offsets = [0, 0], sizes = [8, 32], strides = [1, 1]} : vector<8x64xf32> to vector<8x32xf32>
    %c56_334 = arith.constant 56 : index
    %c0_335 = arith.constant 0 : index
    %1004 = vector.load %arg9[%c56_334, %c0_335] : memref<64x64xf32, #tpu.memory_space<vmem>>, vector<8x32xf32>
    tpu.vector_store %arg9[%c56_334, %c0_335], %1003 {strides = array<i32>} : memref<64x64xf32, #tpu.memory_space<vmem>>, vector<8x32xf32>,
    %1005 = vector.extract_strided_slice %1002 {offsets = [0, 32], sizes = [8, 32], strides = [1, 1]} : vector<8x64xf32> to vector<8x32xf32>
    %c0_336 = arith.constant 0 : index
    %c32_337 = arith.constant 32 : index
    %1006 = vector.load %arg9[%c0_336, %c32_337] : memref<64x64xf32, #tpu.memory_space<vmem>>, vector<8x32xf32>
    tpu.vector_store %arg9[%c0_336, %c32_337], %1005 {strides = array<i32>} : memref<64x64xf32, #tpu.memory_space<vmem>>, vector<8x32xf32>,
    %c0_338 = arith.constant 0 : index
    %c0_339 = arith.constant 0 : index
    %1007 = vector.load %arg9[%c0_338, %c0_339] : memref<64x64xf32, #tpu.memory_space<vmem>>, vector<64x64xf32>
    %1008 = vector.extract_strided_slice %1007 {offsets = [56, 0], sizes = [8, 64], strides = [1, 1]} : vector<64x64xf32> to vector<8x64xf32>
    %1009 = vector.extract_strided_slice %1007 {offsets = [0, 0], sizes = [8, 64], strides = [1, 1]} : vector<64x64xf32> to vector<8x64xf32>
    %1010 = vector.shape_cast %31 : vector<1x64xi1> to vector<1x64xi1>
    %1011 = vector.broadcast %1010 : vector<1x64xi1> to vector<8x64xi1>
    %1012 = arith.select %1011, %1008, %1009 : vector<8x64xi1>, vector<8x64xf32>
    %1013 = vector.extract_strided_slice %1007 {offsets = [0, 0], sizes = [8, 64], strides = [1, 1]} : vector<64x64xf32> to vector<8x64xf32>
    %1014 = arith.mulf %1013, %1012 : vector<8x64xf32>
    %cst_340 = arith.constant dense<0.000000e+00> : vector<8xf32>
    %1015 = vector.multi_reduction <add>, %1014, %cst_340 [1] : vector<8x64xf32> to vector<8xf32>
    %1016 = vector.shape_cast %1015 : vector<8xf32> to vector<8x1xf32>
    %1017 = vector.extract_strided_slice %1007 {offsets = [8, 0], sizes = [8, 64], strides = [1, 1]} : vector<64x64xf32> to vector<8x64xf32>
    %1018 = arith.mulf %1017, %1012 : vector<8x64xf32>
    %cst_341 = arith.constant dense<0.000000e+00> : vector<8xf32>
    %1019 = vector.multi_reduction <add>, %1018, %cst_341 [1] : vector<8x64xf32> to vector<8xf32>
    %1020 = vector.shape_cast %1019 : vector<8xf32> to vector<8x1xf32>
    %1021 = vector.extract_strided_slice %1007 {offsets = [16, 0], sizes = [8, 64], strides = [1, 1]} : vector<64x64xf32> to vector<8x64xf32>
    %1022 = arith.mulf %1021, %1012 : vector<8x64xf32>
    %cst_342 = arith.constant dense<0.000000e+00> : vector<8xf32>
    %1023 = vector.multi_reduction <add>, %1022, %cst_342 [1] : vector<8x64xf32> to vector<8xf32>
    %1024 = vector.shape_cast %1023 : vector<8xf32> to vector<8x1xf32>
    %1025 = vector.extract_strided_slice %1007 {offsets = [24, 0], sizes = [8, 64], strides = [1, 1]} : vector<64x64xf32> to vector<8x64xf32>
    %1026 = arith.mulf %1025, %1012 : vector<8x64xf32>
    %cst_343 = arith.constant dense<0.000000e+00> : vector<8xf32>
    %1027 = vector.multi_reduction <add>, %1026, %cst_343 [1] : vector<8x64xf32> to vector<8xf32>
    %1028 = vector.shape_cast %1027 : vector<8xf32> to vector<8x1xf32>
    %1029 = vector.extract_strided_slice %1007 {offsets = [32, 0], sizes = [8, 64], strides = [1, 1]} : vector<64x64xf32> to vector<8x64xf32>
    %1030 = arith.mulf %1029, %1012 : vector<8x64xf32>
    %cst_344 = arith.constant dense<0.000000e+00> : vector<8xf32>
    %1031 = vector.multi_reduction <add>, %1030, %cst_344 [1] : vector<8x64xf32> to vector<8xf32>
    %1032 = vector.shape_cast %1031 : vector<8xf32> to vector<8x1xf32>
    %1033 = vector.extract_strided_slice %1007 {offsets = [40, 0], sizes = [8, 64], strides = [1, 1]} : vector<64x64xf32> to vector<8x64xf32>
    %1034 = arith.mulf %1033, %1012 : vector<8x64xf32>
    %cst_345 = arith.constant dense<0.000000e+00> : vector<8xf32>
    %1035 = vector.multi_reduction <add>, %1034, %cst_345 [1] : vector<8x64xf32> to vector<8xf32>
    %1036 = vector.shape_cast %1035 : vector<8xf32> to vector<8x1xf32>
    %1037 = vector.extract_strided_slice %1007 {offsets = [48, 0], sizes = [8, 64], strides = [1, 1]} : vector<64x64xf32> to vector<8x64xf32>
    %1038 = arith.mulf %1037, %1012 : vector<8x64xf32>
    %cst_346 = arith.constant dense<0.000000e+00> : vector<8xf32>
    %1039 = vector.multi_reduction <add>, %1038, %cst_346 [1] : vector<8x64xf32> to vector<8xf32>
    %1040 = vector.shape_cast %1039 : vector<8xf32> to vector<8x1xf32>
    %1041 = vector.extract_strided_slice %1007 {offsets = [56, 0], sizes = [8, 64], strides = [1, 1]} : vector<64x64xf32> to vector<8x64xf32>
    %1042 = arith.mulf %1041, %1012 : vector<8x64xf32>
    %cst_347 = arith.constant dense<0.000000e+00> : vector<8xf32>
    %1043 = vector.multi_reduction <add>, %1042, %cst_347 [1] : vector<8x64xf32> to vector<8xf32>
    %1044 = vector.shape_cast %1043 : vector<8xf32> to vector<8x1xf32>
    %1045 = arith.maximumf %1016, %1020 : vector<8x1xf32>
    %1046 = arith.maximumf %1045, %1024 : vector<8x1xf32>
    %1047 = arith.maximumf %1046, %1028 : vector<8x1xf32>
    %1048 = arith.maximumf %1047, %1032 : vector<8x1xf32>
    %1049 = arith.maximumf %1048, %1036 : vector<8x1xf32>
    %1050 = arith.maximumf %1049, %1040 : vector<8x1xf32>
    %1051 = arith.maximumf %1050, %1044 : vector<8x1xf32>
    %1052 = arith.subf %1016, %1051 : vector<8x1xf32>
    %1053 = math.exp %1052 : vector<8x1xf32>
    %1054 = arith.subf %1020, %1051 : vector<8x1xf32>
    %1055 = math.exp %1054 : vector<8x1xf32>
    %1056 = arith.subf %1024, %1051 : vector<8x1xf32>
    %1057 = math.exp %1056 : vector<8x1xf32>
    %1058 = arith.subf %1028, %1051 : vector<8x1xf32>
    %1059 = math.exp %1058 : vector<8x1xf32>
    %1060 = arith.subf %1032, %1051 : vector<8x1xf32>
    %1061 = math.exp %1060 : vector<8x1xf32>
    %1062 = arith.subf %1036, %1051 : vector<8x1xf32>
    %1063 = math.exp %1062 : vector<8x1xf32>
    %1064 = arith.subf %1040, %1051 : vector<8x1xf32>
    %1065 = math.exp %1064 : vector<8x1xf32>
    %1066 = arith.subf %1044, %1051 : vector<8x1xf32>
    %1067 = math.exp %1066 : vector<8x1xf32>
    %1068 = vector.extract_strided_slice %1007 {offsets = [0, 0], sizes = [8, 64], strides = [1, 1]} : vector<64x64xf32> to vector<8x64xf32>
    %1069 = vector.broadcast %1053 : vector<8x1xf32> to vector<8x64xf32>
    %1070 = arith.mulf %1068, %1069 : vector<8x64xf32>
    %1071 = arith.addf %1053, %1055 : vector<8x1xf32>
    %1072 = vector.extract_strided_slice %1007 {offsets = [8, 0], sizes = [8, 64], strides = [1, 1]} : vector<64x64xf32> to vector<8x64xf32>
    %1073 = vector.broadcast %1055 : vector<8x1xf32> to vector<8x64xf32>
    %1074 = arith.mulf %1072, %1073 : vector<8x64xf32>
    %1075 = arith.addf %1070, %1074 : vector<8x64xf32>
    %1076 = arith.addf %1071, %1057 : vector<8x1xf32>
    %1077 = vector.extract_strided_slice %1007 {offsets = [16, 0], sizes = [8, 64], strides = [1, 1]} : vector<64x64xf32> to vector<8x64xf32>
    %1078 = vector.broadcast %1057 : vector<8x1xf32> to vector<8x64xf32>
    %1079 = arith.mulf %1077, %1078 : vector<8x64xf32>
    %1080 = arith.addf %1075, %1079 : vector<8x64xf32>
    %1081 = arith.addf %1076, %1059 : vector<8x1xf32>
    %1082 = vector.extract_strided_slice %1007 {offsets = [24, 0], sizes = [8, 64], strides = [1, 1]} : vector<64x64xf32> to vector<8x64xf32>
    %1083 = vector.broadcast %1059 : vector<8x1xf32> to vector<8x64xf32>
    %1084 = arith.mulf %1082, %1083 : vector<8x64xf32>
    %1085 = arith.addf %1080, %1084 : vector<8x64xf32>
    %1086 = arith.addf %1081, %1061 : vector<8x1xf32>
    %1087 = vector.extract_strided_slice %1007 {offsets = [32, 0], sizes = [8, 64], strides = [1, 1]} : vector<64x64xf32> to vector<8x64xf32>
    %1088 = vector.broadcast %1061 : vector<8x1xf32> to vector<8x64xf32>
    %1089 = arith.mulf %1087, %1088 : vector<8x64xf32>
    %1090 = arith.addf %1085, %1089 : vector<8x64xf32>
    %1091 = arith.addf %1086, %1063 : vector<8x1xf32>
    %1092 = vector.extract_strided_slice %1007 {offsets = [40, 0], sizes = [8, 64], strides = [1, 1]} : vector<64x64xf32> to vector<8x64xf32>
    %1093 = vector.broadcast %1063 : vector<8x1xf32> to vector<8x64xf32>
    %1094 = arith.mulf %1092, %1093 : vector<8x64xf32>
    %1095 = arith.addf %1090, %1094 : vector<8x64xf32>
    %1096 = arith.addf %1091, %1065 : vector<8x1xf32>
    %1097 = vector.extract_strided_slice %1007 {offsets = [48, 0], sizes = [8, 64], strides = [1, 1]} : vector<64x64xf32> to vector<8x64xf32>
    %1098 = vector.broadcast %1065 : vector<8x1xf32> to vector<8x64xf32>
    %1099 = arith.mulf %1097, %1098 : vector<8x64xf32>
    %1100 = arith.addf %1095, %1099 : vector<8x64xf32>
    %1101 = arith.addf %1096, %1067 : vector<8x1xf32>
    %1102 = vector.extract_strided_slice %1007 {offsets = [56, 0], sizes = [8, 64], strides = [1, 1]} : vector<64x64xf32> to vector<8x64xf32>
    %1103 = vector.broadcast %1067 : vector<8x1xf32> to vector<8x64xf32>
    %1104 = arith.mulf %1102, %1103 : vector<8x64xf32>
    %1105 = arith.addf %1100, %1104 : vector<8x64xf32>
    %1106 = vector.broadcast %1101 : vector<8x1xf32> to vector<8x64xf32>
    %1107 = arith.divf %1105, %1106 : vector<8x64xf32>
    %c0_348 = arith.constant 0 : index
    %c0_349 = arith.constant 0 : index
    %1108 = vector.load %arg5[%c0_348, %c0_349] : memref<1x64xf32, #tpu.memory_space<vmem>>, vector<1x64xf32>
    %1109 = vector.broadcast %1108 : vector<1x64xf32> to vector<8x64xf32>
    %1110 = arith.mulf %1107, %1109 : vector<8x64xf32>
    %cst_350 = arith.constant dense<0.000000e+00> : vector<8xf32>
    %1111 = vector.multi_reduction <add>, %1110, %cst_350 [1] : vector<8x64xf32> to vector<8xf32>
    %1112 = vector.shape_cast %1111 : vector<8xf32> to vector<8x1xf32>
    %c0_351 = arith.constant 0 : index
    %c0_352 = arith.constant 0 : index
    %1113 = vector.load %arg6[%c0_351, %c0_352] : memref<1x1xf32, #tpu.memory_space<vmem>>, vector<1x1xf32>
    %1114 = vector.broadcast %1113 : vector<1x1xf32> to vector<8x1xf32>
    %1115 = arith.addf %1112, %1114 : vector<8x1xf32>
    %1116 = arith.negf %1115 : vector<8x1xf32>
    %1117 = math.exp %1116 : vector<8x1xf32>
    %cst_353 = arith.constant 1.000000e+00 : f32
    %1118 = vector.broadcast %cst_353 : f32 to vector<8x1xf32>
    %1119 = arith.addf %1118, %1117 : vector<8x1xf32>
    %1120 = arith.divf %1118, %1119 : vector<8x1xf32>
    %c0_354 = arith.constant 0 : index
    %c0_355 = arith.constant 0 : index
    %1121 = vector.load %arg7[%c0_354, %c0_355] : memref<8x1xf32, #tpu.memory_space<vmem>>, vector<8x1xf32>
    tpu.vector_store %arg7[%c0_354, %c0_355], %1120 {strides = array<i32>} : memref<8x1xf32, #tpu.memory_space<vmem>>, vector<8x1xf32>,
    return
  }
}

</mosaic_0001>

<llo_original>
// kernel: attention_rnn_forward.1
$region0: #{attention_rnn_forward.1}
  #allocation0 [shape = 'u32[]', space=smem, size = 0x4, offset = 0x4, fixed_abs, tag = 'smem constant byte address 0x4 - core index']
  #allocation1 [shape = 'u32[72,128]{1,0:T(1,128)}', space=vmem, size = 0x9000, scoped, tag = 'internal scratch']
  #allocation2 [shape = 'f32[64,256]{1,0:T(8,128)}', space=vmem, size = 0x10000, scoped, tag = 'scratch operand']
  #allocation3 [shape = 'f32[64,64]{1,0:T(8,128)}', space=vmem, size = 0x8000, scoped, tag = 'scratch operand']
  #allocation4 [shape = 'f32[1,1]{1,0:T(1,128)S(1)}', space=vmem, size = 0x200, scoped, tag = 'scoped memory for attention_rnn_forward.1']
  %s0 = inlined_call_operand.vmem [shape: f32[64,16], index: 0, kind: input, shape index: {}]
  %s1 = inlined_call_operand.vmem [shape: f32[16,256], index: 1, kind: input, shape index: {}]
  %s2 = inlined_call_operand.vmem [shape: f32[3,64,256], index: 2, kind: input, shape index: {}]
  %s3 = inlined_call_operand.vmem [shape: f32[4,64,256], index: 3, kind: input, shape index: {}]
  %s4 = inlined_call_operand.vmem [shape: f32[4,1,256], index: 4, kind: input, shape index: {}]
  %s5 = inlined_call_operand.vmem [shape: f32[1,64], index: 5, kind: input, shape index: {}]
  %s6 = inlined_call_operand.<no memory space> [shape: f32[1,1], index: 6, kind: input, shape index: {}]
  %s7 = inlined_call_operand.vmem [shape: f32[8,1], index: 7, kind: output, shape index: {}]
  %s8 = sld [smem:[#allocation0]]
  $region38: #{attention_rnn_forward.1} parent=0
    _
  %s10 = ssub.s32 1, %s8
  %s11 = scalar_select 0, %s10, %s8
  %v12 = vstv %s6
  %13 = vst [vmem:[#allocation4] sm:$0x1] %v12
  // Predicated region
  $region2: #{attention_rnn_forward.1} parent=0 // pred_check
    _
  $region3: #{attention_rnn_forward.1} parent=0 // pred_check_branch
    %15 = sbr.rel (0) target = $region5
  $region4: #{attention_rnn_forward.1} parent=0 // pred_region
    _
  $region5: #{attention_rnn_forward.1} parent=0 // pred_fallthru
    _
  // Predicated region
  $region6: #{attention_rnn_forward.1} parent=0 // pred_check
    _
  $region7: #{attention_rnn_forward.1} parent=0 // pred_check_branch
    %17 = sbr.rel (0) target = $region9
  $region8: #{attention_rnn_forward.1} parent=0 // pred_region
    _
  $region9: #{attention_rnn_forward.1} parent=0 // pred_fallthru
    _
  // Predicated region
  $region10: #{attention_rnn_forward.1} parent=0 // pred_check
    _
  $region11: #{attention_rnn_forward.1} parent=0 // pred_check_branch
    %19 = sbr.rel (0) target = $region13
  $region12: #{attention_rnn_forward.1} parent=0 // pred_region
    _
  $region13: #{attention_rnn_forward.1} parent=0 // pred_fallthru
    _
  // Predicated region
  $region14: #{attention_rnn_forward.1} parent=0 // pred_check
    _
  $region15: #{attention_rnn_forward.1} parent=0 // pred_check_branch
    %21 = sbr.rel (0) target = $region17
  $region16: #{attention_rnn_forward.1} parent=0 // pred_region
    _
  $region17: #{attention_rnn_forward.1} parent=0 // pred_fallthru
    _
  // Predicated region
  $region18: #{attention_rnn_forward.1} parent=0 // pred_check
    _
  $region19: #{attention_rnn_forward.1} parent=0 // pred_check_branch
    %23 = sbr.rel (0) target = $region21
  $region20: #{attention_rnn_forward.1} parent=0 // pred_region
    _
  $region21: #{attention_rnn_forward.1} parent=0 // pred_fallthru
    _
  // Predicated region
  $region22: #{attention_rnn_forward.1} parent=0 // pred_check
    _
  $region23: #{attention_rnn_forward.1} parent=0 // pred_check_branch
    %25 = sbr.rel (0) target = $region25
  $region24: #{attention_rnn_forward.1} parent=0 // pred_region
    _
  $region25: #{attention_rnn_forward.1} parent=0 // pred_fallthru
    _
  // Predicated region
  $region26: #{attention_rnn_forward.1} parent=0 // pred_check
    _
  $region27: #{attention_rnn_forward.1} parent=0 // pred_check_branch
    %27 = sbr.rel (0) target = $region29
  $region28: #{attention_rnn_forward.1} parent=0 // pred_region
    _
  $region29: #{attention_rnn_forward.1} parent=0 // pred_fallthru
    _
  %v28 = vlaneseq
  %v29 = vand.u32 %v28, 127
  %v30 = vadd.s32 %v29, 128
  %vm31 = vcmp.lt.s32.totalorder %v29, 0
  %v32 = vsub.s32 0, %v29
  %v33 = vsel %vm31, %v32, %v29
  %v34 = vshrl.u32 %v33, 6
  %v35 = vand.u32 %v33, 63
  %v36 = vsub.s32 0, %v35
  %v37 = vsel %vm31, %v36, %v35
  %vm38 = vcmp.lt.s32.totalorder %v30, 0
  %v39 = vsub.s32 0, %v30
  %v40 = vsel %vm38, %v39, %v30
  %v41 = vshrl.u32 %v40, 6
  %v42 = vand.u32 %v40, 63
  %v43 = vsub.s32 0, %v42
  %v44 = vsel %vm38, %v43, %v42
  %vm45 = vcmp.ne.s32.totalorder %v37, 0
  %vm46 = vcmp.ne.s32.totalorder %v44, 0
  %vm47 = vcmp.lt.s32.totalorder %v37, 0
  %vm48 = vcmp.lt.s32.totalorder %v44, 0
  %vm49 = vmand %vm47, %vm45
  %vm50 = vmand %vm48, %vm46
  %v51 = vadd.s32 %v37, 64
  %v52 = vadd.s32 %v44, 64
  %v53 = vsel %vm49, %v51, %v37
  %v54 = vsel %vm50, %v52, %v44
  %vm55 = vcmp.lt.s32.totalorder %v53, 32
  %vm56 = vcmp.lt.s32.totalorder %v54, 32
  %vm57 = vcmp.ge.s32.totalorder %v29, 128
  %vm58 = vcmp.ge.s32.totalorder %v30, 128
  %vm59 = vcmp.lt.s32.totalorder %v29, 192
  %vm60 = vcmp.lt.s32.totalorder %v30, 192
  %vm61 = vmand %vm57, %vm59
  %vm62 = vmand %vm58, %vm60
  %v63 = vsel %vm61, 1.0, 0.5
  %v64 = vsel %vm62, 1.0, 0.5
  %v65 = vsub.f32 1.0, %v63
  %v66 = vsub.f32 1.0, %v64
  %vm67 = vcmp.lt.s32.totalorder %v29, 32
  %v68 = vld [vmem:[%s0] sm:$0xff]
  %v69 = vld [vmem:[%s0 + $0x8] sm:$0xff]
  %v70 = vld [vmem:[%s0 + $0x10] sm:$0xff]
  %v71 = vld [vmem:[%s0 + $0x18] sm:$0xff]
  %v72 = vld [vmem:[%s0 + $0x20] sm:$0xff]
  %v73 = vld [vmem:[%s0 + $0x28] sm:$0xff]
  %v74 = vld [vmem:[%s0 + $0x30] sm:$0xff]
  %v75 = vld [vmem:[%s0 + $0x38] sm:$0xff]
  %v76 = vld [vmem:[%s1] sm:$0xff]
  %v77 = vld [vmem:[%s1 + $0x8] sm:$0xff]
  %v78 = vld [vmem:[%s1 + $0x10] sm:$0xff]
  %v79 = vld [vmem:[%s1 + $0x18] sm:$0xff]
  %v80 = vld [vmem:[%s4] sm:$0x3]
  %v82 = vperm.slane %v80, 0
  %v83 = vperm.slane %v80, 1
  %vm86 = vcmask 130048
  %v88 = vsel %vm86, %v68, 0
  %v91 = vsel %vm86, %v69, 0
  %v94 = vsel %vm86, %v70, 0
  %v97 = vsel %vm86, %v71, 0
  %v100 = vsel %vm86, %v72, 0
  %v103 = vsel %vm86, %v73, 0
  %v106 = vsel %vm86, %v74, 0
  %v109 = vsel %vm86, %v75, 0
  %111 = vmatpush.msra.mxu0 0.0
  %112 = vmatpush.msra.mxu0 0.0
  %113 = vmatpush.msra.mxu0 0.0
  %114 = vmatpush.msra.mxu0 0.0
  %115 = vmatpush.msra.mxu0 0.0
  %116 = vmatpush.msra.mxu0 0.0
  %117 = vmatpush.msra.mxu0 0.0
  %118 = vmatpush.msra.mxu0 0.0
  %119 = vmatpush.msra.mxu0 0.0
  %120 = vmatpush.msra.mxu0 0.0
  %121 = vmatpush.msra.mxu0 0.0
  %122 = vmatpush.msra.mxu0 0.0
  %123 = vmatpush.msra.mxu0 0.0
  %124 = vmatpush.msra.mxu0 0.0
  %125 = vmatpush.msra.mxu0 %v78
  %126 = vmatpush.msra.mxu0 %v76
  %127 = vmatmul.f32.gmra.mxu0 %v88
  %v128 = vpop.f32.mrf.mxu0
  %v129 = vadd.f32 %v82, %v128
  %130 = vmatmul.f32.gmra.mxu0 %v91
  %v131 = vpop.f32.mrf.mxu0
  %v132 = vadd.f32 %v82, %v131
  %133 = vmatmul.f32.gmra.mxu0 %v94
  %v134 = vpop.f32.mrf.mxu0
  %v135 = vadd.f32 %v82, %v134
  %136 = vmatmul.f32.gmra.mxu0 %v97
  %v137 = vpop.f32.mrf.mxu0
  %v138 = vadd.f32 %v82, %v137
  %139 = vmatmul.f32.gmra.mxu0 %v100
  %v140 = vpop.f32.mrf.mxu0
  %v141 = vadd.f32 %v82, %v140
  %142 = vmatmul.f32.gmra.mxu0 %v103
  %v143 = vpop.f32.mrf.mxu0
  %v144 = vadd.f32 %v82, %v143
  %145 = vmatmul.f32.gmra.mxu0 %v106
  %v146 = vpop.f32.mrf.mxu0
  %v147 = vadd.f32 %v82, %v146
  %148 = vmatmul.f32.gmra.mxu0 %v109
  %v149 = vpop.f32.mrf.mxu0
  %v150 = vadd.f32 %v82, %v149
  %151 = vdwg.mxu0
  %152 = vmatpush.msra.mxu0 0.0
  %153 = vmatpush.msra.mxu0 0.0
  %154 = vmatpush.msra.mxu0 0.0
  %155 = vmatpush.msra.mxu0 0.0
  %156 = vmatpush.msra.mxu0 0.0
  %157 = vmatpush.msra.mxu0 0.0
  %158 = vmatpush.msra.mxu0 0.0
  %159 = vmatpush.msra.mxu0 0.0
  %160 = vmatpush.msra.mxu0 0.0
  %161 = vmatpush.msra.mxu0 0.0
  %162 = vmatpush.msra.mxu0 0.0
  %163 = vmatpush.msra.mxu0 0.0
  %164 = vmatpush.msra.mxu0 0.0
  %165 = vmatpush.msra.mxu0 0.0
  %166 = vmatpush.msra.mxu0 %v79
  %167 = vmatpush.msra.mxu0 %v77
  %168 = vmatmul.f32.gmra.mxu0 %v88
  %v169 = vpop.f32.mrf.mxu0
  %v170 = vadd.f32 %v83, %v169
  %171 = vmatmul.f32.gmra.mxu0 %v91
  %v172 = vpop.f32.mrf.mxu0
  %v173 = vadd.f32 %v83, %v172
  %174 = vmatmul.f32.gmra.mxu0 %v94
  %v175 = vpop.f32.mrf.mxu0
  %v176 = vadd.f32 %v83, %v175
  %177 = vmatmul.f32.gmra.mxu0 %v97
  %v178 = vpop.f32.mrf.mxu0
  %v179 = vadd.f32 %v83, %v178
  %180 = vmatmul.f32.gmra.mxu0 %v100
  %v181 = vpop.f32.mrf.mxu0
  %v182 = vadd.f32 %v83, %v181
  %183 = vmatmul.f32.gmra.mxu0 %v103
  %v184 = vpop.f32.mrf.mxu0
  %v185 = vadd.f32 %v83, %v184
  %186 = vmatmul.f32.gmra.mxu0 %v106
  %v187 = vpop.f32.mrf.mxu0
  %v188 = vadd.f32 %v83, %v187
  %189 = vmatmul.f32.gmra.mxu0 %v109
  %v190 = vpop.f32.mrf.mxu0
  %v191 = vadd.f32 %v83, %v190
  %192 = vdwg.mxu0
  %v193 = vsel %vm55, 1, 0
  %v194 = vsel %vm56, 1, 0
  %vm195 = vcmp.eq.s32.totalorder %v193, 1
  %vm196 = vcmp.eq.s32.totalorder %v194, 1
  %v197 = vsel %vm195, %v129, %v150
  %v198 = vsel %vm196, %v170, %v191
  %199 = vst [vmem:[#allocation2] sm:$0xff] %v197
  %200 = vst [vmem:[#allocation2 + $0x8] sm:$0xff] %v198
  %v201 = vsel %vm195, %v132, %v147
  %v202 = vsel %vm196, %v173, %v188
  %203 = vst [vmem:[#allocation2 + $0x10] sm:$0xff] %v201
  %204 = vst [vmem:[#allocation2 + $0x18] sm:$0xff] %v202
  %v205 = vsel %vm195, %v135, %v144
  %v206 = vsel %vm196, %v176, %v185
  %207 = vst [vmem:[#allocation2 + $0x20] sm:$0xff] %v205
  %208 = vst [vmem:[#allocation2 + $0x28] sm:$0xff] %v206
  %v209 = vsel %vm195, %v138, %v141
  %v210 = vsel %vm196, %v179, %v182
  %211 = vst [vmem:[#allocation2 + $0x30] sm:$0xff] %v209
  %212 = vst [vmem:[#allocation2 + $0x38] sm:$0xff] %v210
  %v213 = vsel %vm195, %v141, %v138
  %v214 = vsel %vm196, %v182, %v179
  %215 = vst [vmem:[#allocation2 + $0x40] sm:$0xff] %v213
  %216 = vst [vmem:[#allocation2 + $0x48] sm:$0xff] %v214
  %v217 = vsel %vm195, %v144, %v135
  %v218 = vsel %vm196, %v185, %v176
  %219 = vst [vmem:[#allocation2 + $0x50] sm:$0xff] %v217
  %220 = vst [vmem:[#allocation2 + $0x58] sm:$0xff] %v218
  %v221 = vsel %vm195, %v147, %v132
  %v222 = vsel %vm196, %v188, %v173
  %223 = vst [vmem:[#allocation2 + $0x60] sm:$0xff] %v221
  %224 = vst [vmem:[#allocation2 + $0x68] sm:$0xff] %v222
  %v225 = vsel %vm195, %v150, %v129
  %v226 = vsel %vm196, %v191, %v170
  %227 = vst [vmem:[#allocation2 + $0x70] sm:$0xff] %v225
  %228 = vst [vmem:[#allocation2 + $0x78] sm:$0xff] %v226
  %v229 = vld [vmem:[%s3] sm:$0xff]
  %v230 = vld [vmem:[%s3 + $0x8] sm:$0xff]
  %v231 = vld [vmem:[%s3 + $0x10] sm:$0xff]
  %v232 = vld [vmem:[%s3 + $0x18] sm:$0xff]
  %v233 = vld [vmem:[%s3 + $0x20] sm:$0xff]
  %v234 = vld [vmem:[%s3 + $0x28] sm:$0xff]
  %v235 = vld [vmem:[%s3 + $0x30] sm:$0xff]
  %v236 = vld [vmem:[%s3 + $0x38] sm:$0xff]
  %v237 = vld [vmem:[%s3 + $0x40] sm:$0xff]
  %v238 = vld [vmem:[%s3 + $0x48] sm:$0xff]
  %v239 = vld [vmem:[%s3 + $0x50] sm:$0xff]
  %v240 = vld [vmem:[%s3 + $0x58] sm:$0xff]
  %v241 = vld [vmem:[%s3 + $0x60] sm:$0xff]
  %v242 = vld [vmem:[%s3 + $0x68] sm:$0xff]
  %v243 = vld [vmem:[%s3 + $0x70] sm:$0xff]
  %v244 = vld [vmem:[%s3 + $0x78] sm:$0xff]
  %v245 = vld [vmem:[#allocation2] sm:$0xff]
  %v246 = vld [vmem:[#allocation2 + $0x8] sm:$0xff]
  %vm247 = vcmask 523264
  %v249 = vsel %vm247, 0.0, 0
  %251 = vmatpush.msra.mxu0 0.0
  %252 = vmatpush.msra.mxu0 0.0
  %253 = vmatpush.msra.mxu0 0.0
  %254 = vmatpush.msra.mxu0 0.0
  %255 = vmatpush.msra.mxu0 0.0
  %256 = vmatpush.msra.mxu0 0.0
  %257 = vmatpush.msra.mxu0 0.0
  %258 = vmatpush.msra.mxu0 0.0
  %259 = vmatpush.msra.mxu0 %v243
  %260 = vmatpush.msra.mxu0 %v241
  %261 = vmatpush.msra.mxu0 %v239
  %262 = vmatpush.msra.mxu0 %v237
  %263 = vmatpush.msra.mxu0 %v235
  %264 = vmatpush.msra.mxu0 %v233
  %265 = vmatpush.msra.mxu0 %v231
  %266 = vmatpush.msra.mxu0 %v229
  %267 = vmatmul.f32.gmra.mxu0 %v249
  %v268 = vpop.f32.mrf.mxu0
  %v269 = vadd.f32 0.0, %v268
  %270 = vdwg.mxu0
  %271 = vmatpush.msra.mxu0 0.0
  %272 = vmatpush.msra.mxu0 0.0
  %273 = vmatpush.msra.mxu0 0.0
  %274 = vmatpush.msra.mxu0 0.0
  %275 = vmatpush.msra.mxu0 0.0
  %276 = vmatpush.msra.mxu0 0.0
  %277 = vmatpush.msra.mxu0 0.0
  %278 = vmatpush.msra.mxu0 0.0
  %279 = vmatpush.msra.mxu0 %v244
  %280 = vmatpush.msra.mxu0 %v242
  %281 = vmatpush.msra.mxu0 %v240
  %282 = vmatpush.msra.mxu0 %v238
  %283 = vmatpush.msra.mxu0 %v236
  %284 = vmatpush.msra.mxu0 %v234
  %285 = vmatpush.msra.mxu0 %v232
  %286 = vmatpush.msra.mxu0 %v230
  %287 = vmatmul.f32.gmra.mxu0 %v249
  %v288 = vpop.f32.mrf.mxu0
  %v289 = vadd.f32 0.0, %v288
  %290 = vdwg.mxu0
  %v291 = vadd.f32 %v245, %v269
  %v292 = vadd.f32 %v246, %v289
  %v293 = vmul.f32 %v291, %v63
  %v294 = vmul.f32 %v292, %v64
  %v295 = vtanh.pop %v293
  %v296 = vtanh.pop %v294
  %v297 = vmul.f32 %v295, %v63
  %v298 = vmul.f32 %v296, %v64
  %v299 = vadd.f32 %v297, %v65
  %v300 = vadd.f32 %v298, %v66
  %v301 = vmul.f32 %v299, 0.0
  %v302 = vmul.f32 %v299, %v300
  %304 = vrot.lane.b32.xlu0 %v302, 64
  %v305 = vpop.permute.xlu0 %304
  %v307 = vadd.f32 %v301, %v305
  %v308 = vtanh.pop %v307
  %v309 = vmul.f32 %v300, %v308
  %311 = vrot.lane.b32.xlu0 %v309, 64
  %v312 = vpop.permute.xlu0 %311
  %vm314 = vcmask 261120
  %315 = vst.msk [vmem:[#allocation3] sm:$0xff] %vm314, %v312
  %vm316 = vcmask 523520
  %317 = vst.msk [vmem:[#allocation3 + $0x38] sm:$0xff] %vm316, %v312
  %v318 = vld [vmem:[#allocation2 + $0x10] sm:$0xff]
  %v319 = vld [vmem:[#allocation2 + $0x18] sm:$0xff]
  %v320 = vsel %vm247, %v312, 0
  %322 = vmatpush.msra.mxu0 0.0
  %323 = vmatpush.msra.mxu0 0.0
  %324 = vmatpush.msra.mxu0 0.0
  %325 = vmatpush.msra.mxu0 0.0
  %326 = vmatpush.msra.mxu0 0.0
  %327 = vmatpush.msra.mxu0 0.0
  %328 = vmatpush.msra.mxu0 0.0
  %329 = vmatpush.msra.mxu0 0.0
  %330 = vmatpush.msra.mxu0 %v243
  %331 = vmatpush.msra.mxu0 %v241
  %332 = vmatpush.msra.mxu0 %v239
  %333 = vmatpush.msra.mxu0 %v237
  %334 = vmatpush.msra.mxu0 %v235
  %335 = vmatpush.msra.mxu0 %v233
  %336 = vmatpush.msra.mxu0 %v231
  %337 = vmatpush.msra.mxu0 %v229
  %338 = vmatmul.f32.gmra.mxu0 %v320
  %v339 = vpop.f32.mrf.mxu0
  %v340 = vadd.f32 0.0, %v339
  %341 = vdwg.mxu0
  %342 = vmatpush.msra.mxu0 0.0
  %343 = vmatpush.msra.mxu0 0.0
  %344 = vmatpush.msra.mxu0 0.0
  %345 = vmatpush.msra.mxu0 0.0
  %346 = vmatpush.msra.mxu0 0.0
  %347 = vmatpush.msra.mxu0 0.0
  %348 = vmatpush.msra.mxu0 0.0
  %349 = vmatpush.msra.mxu0 0.0
  %350 = vmatpush.msra.mxu0 %v244
  %351 = vmatpush.msra.mxu0 %v242
  %352 = vmatpush.msra.mxu0 %v240
  %353 = vmatpush.msra.mxu0 %v238
  %354 = vmatpush.msra.mxu0 %v236
  %355 = vmatpush.msra.mxu0 %v234
  %356 = vmatpush.msra.mxu0 %v232
  %357 = vmatpush.msra.mxu0 %v230
  %358 = vmatmul.f32.gmra.mxu0 %v320
  %v359 = vpop.f32.mrf.mxu0
  %v360 = vadd.f32 0.0, %v359
  %361 = vdwg.mxu0
  %v362 = vadd.f32 %v318, %v340
  %v363 = vadd.f32 %v319, %v360
  %v364 = vmul.f32 %v362, %v63
  %v365 = vmul.f32 %v363, %v64
  %v366 = vtanh.pop %v364
  %v367 = vtanh.pop %v365
  %v368 = vmul.f32 %v366, %v63
  %v369 = vmul.f32 %v367, %v64
  %v370 = vadd.f32 %v368, %v65
  %v371 = vadd.f32 %v369, %v66
  %v372 = vmul.f32 %v370, %v307
  %v373 = vmul.f32 %v370, %v371
  %375 = vrot.lane.b32.xlu0 %v373, 64
  %v376 = vpop.permute.xlu0 %375
  %v378 = vadd.f32 %v372, %v376
  %v379 = vtanh.pop %v378
  %v380 = vmul.f32 %v371, %v379
  %382 = vrot.lane.b32.xlu0 %v380, 64
  %v383 = vpop.permute.xlu0 %382
  %385 = vst.msk [vmem:[#allocation3 + $0x8] sm:$0xff] %vm314, %v383
  %386 = vst.msk [vmem:[#allocation3 + $0x30] sm:$0xff] %vm316, %v383
  %v387 = vld [vmem:[#allocation2 + $0x20] sm:$0xff]
  %v388 = vld [vmem:[#allocation2 + $0x28] sm:$0xff]
  %v389 = vsel %vm247, %v383, 0
  %391 = vmatpush.msra.mxu0 0.0
  %392 = vmatpush.msra.mxu0 0.0
  %393 = vmatpush.msra.mxu0 0.0
  %394 = vmatpush.msra.mxu0 0.0
  %395 = vmatpush.msra.mxu0 0.0
  %396 = vmatpush.msra.mxu0 0.0
  %397 = vmatpush.msra.mxu0 0.0
  %398 = vmatpush.msra.mxu0 0.0
  %399 = vmatpush.msra.mxu0 %v243
  %400 = vmatpush.msra.mxu0 %v241
  %401 = vmatpush.msra.mxu0 %v239
  %402 = vmatpush.msra.mxu0 %v237
  %403 = vmatpush.msra.mxu0 %v235
  %404 = vmatpush.msra.mxu0 %v233
  %405 = vmatpush.msra.mxu0 %v231
  %406 = vmatpush.msra.mxu0 %v229
  %407 = vmatmul.f32.gmra.mxu0 %v389
  %v408 = vpop.f32.mrf.mxu0
  %v409 = vadd.f32 0.0, %v408
  %410 = vdwg.mxu0
  %411 = vmatpush.msra.mxu0 0.0
  %412 = vmatpush.msra.mxu0 0.0
  %413 = vmatpush.msra.mxu0 0.0
  %414 = vmatpush.msra.mxu0 0.0
  %415 = vmatpush.msra.mxu0 0.0
  %416 = vmatpush.msra.mxu0 0.0
  %417 = vmatpush.msra.mxu0 0.0
  %418 = vmatpush.msra.mxu0 0.0
  %419 = vmatpush.msra.mxu0 %v244
  %420 = vmatpush.msra.mxu0 %v242
  %421 = vmatpush.msra.mxu0 %v240
  %422 = vmatpush.msra.mxu0 %v238
  %423 = vmatpush.msra.mxu0 %v236
  %424 = vmatpush.msra.mxu0 %v234
  %425 = vmatpush.msra.mxu0 %v232
  %426 = vmatpush.msra.mxu0 %v230
  %427 = vmatmul.f32.gmra.mxu0 %v389
  %v428 = vpop.f32.mrf.mxu0
  %v429 = vadd.f32 0.0, %v428
  %430 = vdwg.mxu0
  %v431 = vadd.f32 %v387, %v409
  %v432 = vadd.f32 %v388, %v429
  %v433 = vmul.f32 %v431, %v63
  %v434 = vmul.f32 %v432, %v64
  %v435 = vtanh.pop %v433
  %v436 = vtanh.pop %v434
  %v437 = vmul.f32 %v435, %v63
  %v438 = vmul.f32 %v436, %v64
  %v439 = vadd.f32 %v437, %v65
  %v440 = vadd.f32 %v438, %v66
  %v441 = vmul.f32 %v439, %v378
  %v442 = vmul.f32 %v439, %v440
  %444 = vrot.lane.b32.xlu0 %v442, 64
  %v445 = vpop.permute.xlu0 %444
  %v447 = vadd.f32 %v441, %v445
  %v448 = vtanh.pop %v447
  %v449 = vmul.f32 %v440, %v448
  %451 = vrot.lane.b32.xlu0 %v449, 64
  %v452 = vpop.permute.xlu0 %451
  %454 = vst.msk [vmem:[#allocation3 + $0x10] sm:$0xff] %vm314, %v452
  %455 = vst.msk [vmem:[#allocation3 + $0x28] sm:$0xff] %vm316, %v452
  %v456 = vld [vmem:[#allocation2 + $0x30] sm:$0xff]
  %v457 = vld [vmem:[#allocation2 + $0x38] sm:$0xff]
  %v458 = vsel %vm247, %v452, 0
  %460 = vmatpush.msra.mxu0 0.0
  %461 = vmatpush.msra.mxu0 0.0
  %462 = vmatpush.msra.mxu0 0.0
  %463 = vmatpush.msra.mxu0 0.0
  %464 = vmatpush.msra.mxu0 0.0
  %465 = vmatpush.msra.mxu0 0.0
  %466 = vmatpush.msra.mxu0 0.0
  %467 = vmatpush.msra.mxu0 0.0
  %468 = vmatpush.msra.mxu0 %v243
  %469 = vmatpush.msra.mxu0 %v241
  %470 = vmatpush.msra.mxu0 %v239
  %471 = vmatpush.msra.mxu0 %v237
  %472 = vmatpush.msra.mxu0 %v235
  %473 = vmatpush.msra.mxu0 %v233
  %474 = vmatpush.msra.mxu0 %v231
  %475 = vmatpush.msra.mxu0 %v229
  %476 = vmatmul.f32.gmra.mxu0 %v458
  %v477 = vpop.f32.mrf.mxu0
  %v478 = vadd.f32 0.0, %v477
  %479 = vdwg.mxu0
  %480 = vmatpush.msra.mxu0 0.0
  %481 = vmatpush.msra.mxu0 0.0
  %482 = vmatpush.msra.mxu0 0.0
  %483 = vmatpush.msra.mxu0 0.0
  %484 = vmatpush.msra.mxu0 0.0
  %485 = vmatpush.msra.mxu0 0.0
  %486 = vmatpush.msra.mxu0 0.0
  %487 = vmatpush.msra.mxu0 0.0
  %488 = vmatpush.msra.mxu0 %v244
  %489 = vmatpush.msra.mxu0 %v242
  %490 = vmatpush.msra.mxu0 %v240
  %491 = vmatpush.msra.mxu0 %v238
  %492 = vmatpush.msra.mxu0 %v236
  %493 = vmatpush.msra.mxu0 %v234
  %494 = vmatpush.msra.mxu0 %v232
  %495 = vmatpush.msra.mxu0 %v230
  %496 = vmatmul.f32.gmra.mxu0 %v458
  %v497 = vpop.f32.mrf.mxu0
  %v498 = vadd.f32 0.0, %v497
  %499 = vdwg.mxu0
  %v500 = vadd.f32 %v456, %v478
  %v501 = vadd.f32 %v457, %v498
  %v502 = vmul.f32 %v500, %v63
  %v503 = vmul.f32 %v501, %v64
  %v504 = vtanh.pop %v502
  %v505 = vtanh.pop %v503
  %v506 = vmul.f32 %v504, %v63
  %v507 = vmul.f32 %v505, %v64
  %v508 = vadd.f32 %v506, %v65
  %v509 = vadd.f32 %v507, %v66
  %v510 = vmul.f32 %v508, %v447
  %v511 = vmul.f32 %v508, %v509
  %513 = vrot.lane.b32.xlu0 %v511, 64
  %v514 = vpop.permute.xlu0 %513
  %v516 = vadd.f32 %v510, %v514
  %v517 = vtanh.pop %v516
  %v518 = vmul.f32 %v509, %v517
  %520 = vrot.lane.b32.xlu0 %v518, 64
  %v521 = vpop.permute.xlu0 %520
  %523 = vst.msk [vmem:[#allocation3 + $0x18] sm:$0xff] %vm314, %v521
  %524 = vst.msk [vmem:[#allocation3 + $0x20] sm:$0xff] %vm316, %v521
  %v525 = vld [vmem:[#allocation2 + $0x40] sm:$0xff]
  %v526 = vld [vmem:[#allocation2 + $0x48] sm:$0xff]
  %v527 = vsel %vm247, %v521, 0
  %529 = vmatpush.msra.mxu0 0.0
  %530 = vmatpush.msra.mxu0 0.0
  %531 = vmatpush.msra.mxu0 0.0
  %532 = vmatpush.msra.mxu0 0.0
  %533 = vmatpush.msra.mxu0 0.0
  %534 = vmatpush.msra.mxu0 0.0
  %535 = vmatpush.msra.mxu0 0.0
  %536 = vmatpush.msra.mxu0 0.0
  %537 = vmatpush.msra.mxu0 %v243
  %538 = vmatpush.msra.mxu0 %v241
  %539 = vmatpush.msra.mxu0 %v239
  %540 = vmatpush.msra.mxu0 %v237
  %541 = vmatpush.msra.mxu0 %v235
  %542 = vmatpush.msra.mxu0 %v233
  %543 = vmatpush.msra.mxu0 %v231
  %544 = vmatpush.msra.mxu0 %v229
  %545 = vmatmul.f32.gmra.mxu0 %v527
  %v546 = vpop.f32.mrf.mxu0
  %v547 = vadd.f32 0.0, %v546
  %548 = vdwg.mxu0
  %549 = vmatpush.msra.mxu0 0.0
  %550 = vmatpush.msra.mxu0 0.0
  %551 = vmatpush.msra.mxu0 0.0
  %552 = vmatpush.msra.mxu0 0.0
  %553 = vmatpush.msra.mxu0 0.0
  %554 = vmatpush.msra.mxu0 0.0
  %555 = vmatpush.msra.mxu0 0.0
  %556 = vmatpush.msra.mxu0 0.0
  %557 = vmatpush.msra.mxu0 %v244
  %558 = vmatpush.msra.mxu0 %v242
  %559 = vmatpush.msra.mxu0 %v240
  %560 = vmatpush.msra.mxu0 %v238
  %561 = vmatpush.msra.mxu0 %v236
  %562 = vmatpush.msra.mxu0 %v234
  %563 = vmatpush.msra.mxu0 %v232
  %564 = vmatpush.msra.mxu0 %v230
  %565 = vmatmul.f32.gmra.mxu0 %v527
  %v566 = vpop.f32.mrf.mxu0
  %v567 = vadd.f32 0.0, %v566
  %568 = vdwg.mxu0
  %v569 = vadd.f32 %v525, %v547
  %v570 = vadd.f32 %v526, %v567
  %v571 = vmul.f32 %v569, %v63
  %v572 = vmul.f32 %v570, %v64
  %v573 = vtanh.pop %v571
  %v574 = vtanh.pop %v572
  %v575 = vmul.f32 %v573, %v63
  %v576 = vmul.f32 %v574, %v64
  %v577 = vadd.f32 %v575, %v65
  %v578 = vadd.f32 %v576, %v66
  %v579 = vmul.f32 %v577, %v516
  %v580 = vmul.f32 %v577, %v578
  %582 = vrot.lane.b32.xlu0 %v580, 64
  %v583 = vpop.permute.xlu0 %582
  %v585 = vadd.f32 %v579, %v583
  %v586 = vtanh.pop %v585
  %v587 = vmul.f32 %v578, %v586
  %589 = vrot.lane.b32.xlu0 %v587, 64
  %v590 = vpop.permute.xlu0 %589
  %592 = vst.msk [vmem:[#allocation3 + $0x20] sm:$0xff] %vm314, %v590
  %593 = vst.msk [vmem:[#allocation3 + $0x18] sm:$0xff] %vm316, %v590
  %v594 = vld [vmem:[#allocation2 + $0x50] sm:$0xff]
  %v595 = vld [vmem:[#allocation2 + $0x58] sm:$0xff]
  %v596 = vsel %vm247, %v590, 0
  %598 = vmatpush.msra.mxu0 0.0
  %599 = vmatpush.msra.mxu0 0.0
  %600 = vmatpush.msra.mxu0 0.0
  %601 = vmatpush.msra.mxu0 0.0
  %602 = vmatpush.msra.mxu0 0.0
  %603 = vmatpush.msra.mxu0 0.0
  %604 = vmatpush.msra.mxu0 0.0
  %605 = vmatpush.msra.mxu0 0.0
  %606 = vmatpush.msra.mxu0 %v243
  %607 = vmatpush.msra.mxu0 %v241
  %608 = vmatpush.msra.mxu0 %v239
  %609 = vmatpush.msra.mxu0 %v237
  %610 = vmatpush.msra.mxu0 %v235
  %611 = vmatpush.msra.mxu0 %v233
  %612 = vmatpush.msra.mxu0 %v231
  %613 = vmatpush.msra.mxu0 %v229
  %614 = vmatmul.f32.gmra.mxu0 %v596
  %v615 = vpop.f32.mrf.mxu0
  %v616 = vadd.f32 0.0, %v615
  %617 = vdwg.mxu0
  %618 = vmatpush.msra.mxu0 0.0
  %619 = vmatpush.msra.mxu0 0.0
  %620 = vmatpush.msra.mxu0 0.0
  %621 = vmatpush.msra.mxu0 0.0
  %622 = vmatpush.msra.mxu0 0.0
  %623 = vmatpush.msra.mxu0 0.0
  %624 = vmatpush.msra.mxu0 0.0
  %625 = vmatpush.msra.mxu0 0.0
  %626 = vmatpush.msra.mxu0 %v244
  %627 = vmatpush.msra.mxu0 %v242
  %628 = vmatpush.msra.mxu0 %v240
  %629 = vmatpush.msra.mxu0 %v238
  %630 = vmatpush.msra.mxu0 %v236
  %631 = vmatpush.msra.mxu0 %v234
  %632 = vmatpush.msra.mxu0 %v232
  %633 = vmatpush.msra.mxu0 %v230
  %634 = vmatmul.f32.gmra.mxu0 %v596
  %v635 = vpop.f32.mrf.mxu0
  %v636 = vadd.f32 0.0, %v635
  %637 = vdwg.mxu0
  %v638 = vadd.f32 %v594, %v616
  %v639 = vadd.f32 %v595, %v636
  %v640 = vmul.f32 %v638, %v63
  %v641 = vmul.f32 %v639, %v64
  %v642 = vtanh.pop %v640
  %v643 = vtanh.pop %v641
  %v644 = vmul.f32 %v642, %v63
  %v645 = vmul.f32 %v643, %v64
  %v646 = vadd.f32 %v644, %v65
  %v647 = vadd.f32 %v645, %v66
  %v648 = vmul.f32 %v646, %v585
  %v649 = vmul.f32 %v646, %v647
  %651 = vrot.lane.b32.xlu0 %v649, 64
  %v652 = vpop.permute.xlu0 %651
  %v654 = vadd.f32 %v648, %v652
  %v655 = vtanh.pop %v654
  %v656 = vmul.f32 %v647, %v655
  %658 = vrot.lane.b32.xlu0 %v656, 64
  %v659 = vpop.permute.xlu0 %658
  %661 = vst.msk [vmem:[#allocation3 + $0x28] sm:$0xff] %vm314, %v659
  %662 = vst.msk [vmem:[#allocation3 + $0x10] sm:$0xff] %vm316, %v659
  %v663 = vld [vmem:[#allocation2 + $0x60] sm:$0xff]
  %v664 = vld [vmem:[#allocation2 + $0x68] sm:$0xff]
  %v665 = vsel %vm247, %v659, 0
  %667 = vmatpush.msra.mxu0 0.0
  %668 = vmatpush.msra.mxu0 0.0
  %669 = vmatpush.msra.mxu0 0.0
  %670 = vmatpush.msra.mxu0 0.0
  %671 = vmatpush.msra.mxu0 0.0
  %672 = vmatpush.msra.mxu0 0.0
  %673 = vmatpush.msra.mxu0 0.0
  %674 = vmatpush.msra.mxu0 0.0
  %675 = vmatpush.msra.mxu0 %v243
  %676 = vmatpush.msra.mxu0 %v241
  %677 = vmatpush.msra.mxu0 %v239
  %678 = vmatpush.msra.mxu0 %v237
  %679 = vmatpush.msra.mxu0 %v235
  %680 = vmatpush.msra.mxu0 %v233
  %681 = vmatpush.msra.mxu0 %v231
  %682 = vmatpush.msra.mxu0 %v229
  %683 = vmatmul.f32.gmra.mxu0 %v665
  %v684 = vpop.f32.mrf.mxu0
  %v685 = vadd.f32 0.0, %v684
  %686 = vdwg.mxu0
  %687 = vmatpush.msra.mxu0 0.0
  %688 = vmatpush.msra.mxu0 0.0
  %689 = vmatpush.msra.mxu0 0.0
  %690 = vmatpush.msra.mxu0 0.0
  %691 = vmatpush.msra.mxu0 0.0
  %692 = vmatpush.msra.mxu0 0.0
  %693 = vmatpush.msra.mxu0 0.0
  %694 = vmatpush.msra.mxu0 0.0
  %695 = vmatpush.msra.mxu0 %v244
  %696 = vmatpush.msra.mxu0 %v242
  %697 = vmatpush.msra.mxu0 %v240
  %698 = vmatpush.msra.mxu0 %v238
  %699 = vmatpush.msra.mxu0 %v236
  %700 = vmatpush.msra.mxu0 %v234
  %701 = vmatpush.msra.mxu0 %v232
  %702 = vmatpush.msra.mxu0 %v230
  %703 = vmatmul.f32.gmra.mxu0 %v665
  %v704 = vpop.f32.mrf.mxu0
  %v705 = vadd.f32 0.0, %v704
  %706 = vdwg.mxu0
  %v707 = vadd.f32 %v663, %v685
  %v708 = vadd.f32 %v664, %v705
  %v709 = vmul.f32 %v707, %v63
  %v710 = vmul.f32 %v708, %v64
  %v711 = vtanh.pop %v709
  %v712 = vtanh.pop %v710
  %v713 = vmul.f32 %v711, %v63
  %v714 = vmul.f32 %v712, %v64
  %v715 = vadd.f32 %v713, %v65
  %v716 = vadd.f32 %v714, %v66
  %v717 = vmul.f32 %v715, %v654
  %v718 = vmul.f32 %v715, %v716
  %720 = vrot.lane.b32.xlu0 %v718, 64
  %v721 = vpop.permute.xlu0 %720
  %v723 = vadd.f32 %v717, %v721
  %v724 = vtanh.pop %v723
  %v725 = vmul.f32 %v716, %v724
  %727 = vrot.lane.b32.xlu0 %v725, 64
  %v728 = vpop.permute.xlu0 %727
  %730 = vst.msk [vmem:[#allocation3 + $0x30] sm:$0xff] %vm314, %v728
  %731 = vst.msk [vmem:[#allocation3 + $0x8] sm:$0xff] %vm316, %v728
  %v732 = vld [vmem:[#allocation2 + $0x70] sm:$0xff]
  %v733 = vld [vmem:[#allocation2 + $0x78] sm:$0xff]
  %v734 = vsel %vm247, %v728, 0
  %736 = vmatpush.msra.mxu0 0.0
  %737 = vmatpush.msra.mxu0 0.0
  %738 = vmatpush.msra.mxu0 0.0
  %739 = vmatpush.msra.mxu0 0.0
  %740 = vmatpush.msra.mxu0 0.0
  %741 = vmatpush.msra.mxu0 0.0
  %742 = vmatpush.msra.mxu0 0.0
  %743 = vmatpush.msra.mxu0 0.0
  %744 = vmatpush.msra.mxu0 %v243
  %745 = vmatpush.msra.mxu0 %v241
  %746 = vmatpush.msra.mxu0 %v239
  %747 = vmatpush.msra.mxu0 %v237
  %748 = vmatpush.msra.mxu0 %v235
  %749 = vmatpush.msra.mxu0 %v233
  %750 = vmatpush.msra.mxu0 %v231
  %751 = vmatpush.msra.mxu0 %v229
  %752 = vmatmul.f32.gmra.mxu0 %v734
  %v753 = vpop.f32.mrf.mxu0
  %v754 = vadd.f32 0.0, %v753
  %755 = vdwg.mxu0
  %756 = vmatpush.msra.mxu0 0.0
  %757 = vmatpush.msra.mxu0 0.0
  %758 = vmatpush.msra.mxu0 0.0
  %759 = vmatpush.msra.mxu0 0.0
  %760 = vmatpush.msra.mxu0 0.0
  %761 = vmatpush.msra.mxu0 0.0
  %762 = vmatpush.msra.mxu0 0.0
  %763 = vmatpush.msra.mxu0 0.0
  %764 = vmatpush.msra.mxu0 %v244
  %765 = vmatpush.msra.mxu0 %v242
  %766 = vmatpush.msra.mxu0 %v240
  %767 = vmatpush.msra.mxu0 %v238
  %768 = vmatpush.msra.mxu0 %v236
  %769 = vmatpush.msra.mxu0 %v234
  %770 = vmatpush.msra.mxu0 %v232
  %771 = vmatpush.msra.mxu0 %v230
  %772 = vmatmul.f32.gmra.mxu0 %v734
  %v773 = vpop.f32.mrf.mxu0
  %v774 = vadd.f32 0.0, %v773
  %775 = vdwg.mxu0
  %v776 = vadd.f32 %v732, %v754
  %v777 = vadd.f32 %v733, %v774
  %v778 = vmul.f32 %v776, %v63
  %v779 = vmul.f32 %v777, %v64
  %v780 = vtanh.pop %v778
  %v781 = vtanh.pop %v779
  %v782 = vmul.f32 %v780, %v63
  %v783 = vmul.f32 %v781, %v64
  %v784 = vadd.f32 %v782, %v65
  %v785 = vadd.f32 %v783, %v66
  %v786 = vmul.f32 %v784, %v723
  %v787 = vmul.f32 %v784, %v785
  %789 = vrot.lane.b32.xlu0 %v787, 64
  %v790 = vpop.permute.xlu0 %789
  %v792 = vadd.f32 %v786, %v790
  %v793 = vtanh.pop %v792
  %v794 = vmul.f32 %v785, %v793
  %796 = vrot.lane.b32.xlu0 %v794, 64
  %v797 = vpop.permute.xlu0 %796
  %799 = vst.msk [vmem:[#allocation3 + $0x38] sm:$0xff] %vm314, %v797
  %800 = vst.msk [vmem:[#allocation3] sm:$0xff] %vm316, %v797
  %v801 = vld [vmem:[#allocation3] sm:$0xff]
  %v802 = vld [vmem:[#allocation3 + $0x8] sm:$0xff]
  %v803 = vld [vmem:[#allocation3 + $0x10] sm:$0xff]
  %v804 = vld [vmem:[#allocation3 + $0x18] sm:$0xff]
  %v805 = vld [vmem:[#allocation3 + $0x20] sm:$0xff]
  %v806 = vld [vmem:[#allocation3 + $0x28] sm:$0xff]
  %v807 = vld [vmem:[#allocation3 + $0x30] sm:$0xff]
  %v808 = vld [vmem:[#allocation3 + $0x38] sm:$0xff]
  %v809 = vld [vmem:[%s2] sm:$0xff]
  %v810 = vld [vmem:[%s2 + $0x8] sm:$0xff]
  %v811 = vld [vmem:[%s2 + $0x10] sm:$0xff]
  %v812 = vld [vmem:[%s2 + $0x18] sm:$0xff]
  %v813 = vld [vmem:[%s2 + $0x20] sm:$0xff]
  %v814 = vld [vmem:[%s2 + $0x28] sm:$0xff]
  %v815 = vld [vmem:[%s2 + $0x30] sm:$0xff]
  %v816 = vld [vmem:[%s2 + $0x38] sm:$0xff]
  %v817 = vld [vmem:[%s2 + $0x40] sm:$0xff]
  %v818 = vld [vmem:[%s2 + $0x48] sm:$0xff]
  %v819 = vld [vmem:[%s2 + $0x50] sm:$0xff]
  %v820 = vld [vmem:[%s2 + $0x58] sm:$0xff]
  %v821 = vld [vmem:[%s2 + $0x60] sm:$0xff]
  %v822 = vld [vmem:[%s2 + $0x68] sm:$0xff]
  %v823 = vld [vmem:[%s2 + $0x70] sm:$0xff]
  %v824 = vld [vmem:[%s2 + $0x78] sm:$0xff]
  %s825 = scalar_lea.vmem %s4, 2
  %v826 = vld [vmem:[%s825] sm:$0x3]
  %v828 = vperm.slane %v826, 0
  %v829 = vperm.slane %v826, 1
  %v833 = vsel %vm247, %v801, 0
  %v836 = vsel %vm247, %v802, 0
  %v839 = vsel %vm247, %v803, 0
  %v842 = vsel %vm247, %v804, 0
  %v845 = vsel %vm247, %v805, 0
  %v848 = vsel %vm247, %v806, 0
  %v851 = vsel %vm247, %v807, 0
  %v854 = vsel %vm247, %v808, 0
  %856 = vmatpush.msra.mxu0 0.0
  %857 = vmatpush.msra.mxu0 0.0
  %858 = vmatpush.msra.mxu0 0.0
  %859 = vmatpush.msra.mxu0 0.0
  %860 = vmatpush.msra.mxu0 0.0
  %861 = vmatpush.msra.mxu0 0.0
  %862 = vmatpush.msra.mxu0 0.0
  %863 = vmatpush.msra.mxu0 0.0
  %864 = vmatpush.msra.mxu0 %v823
  %865 = vmatpush.msra.mxu0 %v821
  %866 = vmatpush.msra.mxu0 %v819
  %867 = vmatpush.msra.mxu0 %v817
  %868 = vmatpush.msra.mxu0 %v815
  %869 = vmatpush.msra.mxu0 %v813
  %870 = vmatpush.msra.mxu0 %v811
  %871 = vmatpush.msra.mxu0 %v809
  %872 = vmatmul.f32.gmra.mxu0 %v833
  %v873 = vpop.f32.mrf.mxu0
  %v874 = vadd.f32 %v828, %v873
  %875 = vmatmul.f32.gmra.mxu0 %v836
  %v876 = vpop.f32.mrf.mxu0
  %v877 = vadd.f32 %v828, %v876
  %878 = vmatmul.f32.gmra.mxu0 %v839
  %v879 = vpop.f32.mrf.mxu0
  %v880 = vadd.f32 %v828, %v879
  %881 = vmatmul.f32.gmra.mxu0 %v842
  %v882 = vpop.f32.mrf.mxu0
  %v883 = vadd.f32 %v828, %v882
  %884 = vmatmul.f32.gmra.mxu0 %v845
  %v885 = vpop.f32.mrf.mxu0
  %v886 = vadd.f32 %v828, %v885
  %887 = vmatmul.f32.gmra.mxu0 %v848
  %v888 = vpop.f32.mrf.mxu0
  %v889 = vadd.f32 %v828, %v888
  %890 = vmatmul.f32.gmra.mxu0 %v851
  %v891 = vpop.f32.mrf.mxu0
  %v892 = vadd.f32 %v828, %v891
  %893 = vmatmul.f32.gmra.mxu0 %v854
  %v894 = vpop.f32.mrf.mxu0
  %v895 = vadd.f32 %v828, %v894
  %896 = vdwg.mxu0
  %897 = vmatpush.msra.mxu0 0.0
  %898 = vmatpush.msra.mxu0 0.0
  %899 = vmatpush.msra.mxu0 0.0
  %900 = vmatpush.msra.mxu0 0.0
  %901 = vmatpush.msra.mxu0 0.0
  %902 = vmatpush.msra.mxu0 0.0
  %903 = vmatpush.msra.mxu0 0.0
  %904 = vmatpush.msra.mxu0 0.0
  %905 = vmatpush.msra.mxu0 %v824
  %906 = vmatpush.msra.mxu0 %v822
  %907 = vmatpush.msra.mxu0 %v820
  %908 = vmatpush.msra.mxu0 %v818
  %909 = vmatpush.msra.mxu0 %v816
  %910 = vmatpush.msra.mxu0 %v814
  %911 = vmatpush.msra.mxu0 %v812
  %912 = vmatpush.msra.mxu0 %v810
  %913 = vmatmul.f32.gmra.mxu0 %v833
  %v914 = vpop.f32.mrf.mxu0
  %v915 = vadd.f32 %v829, %v914
  %916 = vmatmul.f32.gmra.mxu0 %v836
  %v917 = vpop.f32.mrf.mxu0
  %v918 = vadd.f32 %v829, %v917
  %919 = vmatmul.f32.gmra.mxu0 %v839
  %v920 = vpop.f32.mrf.mxu0
  %v921 = vadd.f32 %v829, %v920
  %922 = vmatmul.f32.gmra.mxu0 %v842
  %v923 = vpop.f32.mrf.mxu0
  %v924 = vadd.f32 %v829, %v923
  %925 = vmatmul.f32.gmra.mxu0 %v845
  %v926 = vpop.f32.mrf.mxu0
  %v927 = vadd.f32 %v829, %v926
  %928 = vmatmul.f32.gmra.mxu0 %v848
  %v929 = vpop.f32.mrf.mxu0
  %v930 = vadd.f32 %v829, %v929
  %931 = vmatmul.f32.gmra.mxu0 %v851
  %v932 = vpop.f32.mrf.mxu0
  %v933 = vadd.f32 %v829, %v932
  %934 = vmatmul.f32.gmra.mxu0 %v854
  %v935 = vpop.f32.mrf.mxu0
  %v936 = vadd.f32 %v829, %v935
  %937 = vdwg.mxu0
  %v938 = vsel %vm195, %v874, %v895
  %v939 = vsel %vm196, %v915, %v936
  %940 = vst [vmem:[#allocation2] sm:$0xff] %v938
  %941 = vst [vmem:[#allocation2 + $0x8] sm:$0xff] %v939
  %v942 = vsel %vm195, %v877, %v892
  %v943 = vsel %vm196, %v918, %v933
  %944 = vst [vmem:[#allocation2 + $0x10] sm:$0xff] %v942
  %945 = vst [vmem:[#allocation2 + $0x18] sm:$0xff] %v943
  %v946 = vsel %vm195, %v880, %v889
  %v947 = vsel %vm196, %v921, %v930
  %948 = vst [vmem:[#allocation2 + $0x20] sm:$0xff] %v946
  %949 = vst [vmem:[#allocation2 + $0x28] sm:$0xff] %v947
  %v950 = vsel %vm195, %v883, %v886
  %v951 = vsel %vm196, %v924, %v927
  %952 = vst [vmem:[#allocation2 + $0x30] sm:$0xff] %v950
  %953 = vst [vmem:[#allocation2 + $0x38] sm:$0xff] %v951
  %v954 = vsel %vm195, %v886, %v883
  %v955 = vsel %vm196, %v927, %v924
  %956 = vst [vmem:[#allocation2 + $0x40] sm:$0xff] %v954
  %957 = vst [vmem:[#allocation2 + $0x48] sm:$0xff] %v955
  %v958 = vsel %vm195, %v889, %v880
  %v959 = vsel %vm196, %v930, %v921
  %960 = vst [vmem:[#allocation2 + $0x50] sm:$0xff] %v958
  %961 = vst [vmem:[#allocation2 + $0x58] sm:$0xff] %v959
  %v962 = vsel %vm195, %v892, %v877
  %v963 = vsel %vm196, %v933, %v918
  %964 = vst [vmem:[#allocation2 + $0x60] sm:$0xff] %v962
  %965 = vst [vmem:[#allocation2 + $0x68] sm:$0xff] %v963
  %v966 = vsel %vm195, %v895, %v874
  %v967 = vsel %vm196, %v936, %v915
  %968 = vst [vmem:[#allocation2 + $0x70] sm:$0xff] %v966
  %969 = vst [vmem:[#allocation2 + $0x78] sm:$0xff] %v967
  %s970 = scalar_lea.vmem %s3, 128
  %v971 = vld [vmem:[%s970] sm:$0xff]
  %v972 = vld [vmem:[%s970 + $0x8] sm:$0xff]
  %v973 = vld [vmem:[%s970 + $0x10] sm:$0xff]
  %v974 = vld [vmem:[%s970 + $0x18] sm:$0xff]
  %v975 = vld [vmem:[%s970 + $0x20] sm:$0xff]
  %v976 = vld [vmem:[%s970 + $0x28] sm:$0xff]
  %v977 = vld [vmem:[%s970 + $0x30] sm:$0xff]
  %v978 = vld [vmem:[%s970 + $0x38] sm:$0xff]
  %v979 = vld [vmem:[%s970 + $0x40] sm:$0xff]
  %v980 = vld [vmem:[%s970 + $0x48] sm:$0xff]
  %v981 = vld [vmem:[%s970 + $0x50] sm:$0xff]
  %v982 = vld [vmem:[%s970 + $0x58] sm:$0xff]
  %v983 = vld [vmem:[%s970 + $0x60] sm:$0xff]
  %v984 = vld [vmem:[%s970 + $0x68] sm:$0xff]
  %v985 = vld [vmem:[%s970 + $0x70] sm:$0xff]
  %v986 = vld [vmem:[%s970 + $0x78] sm:$0xff]
  %v987 = vld [vmem:[#allocation2] sm:$0xff]
  %v988 = vld [vmem:[#allocation2 + $0x8] sm:$0xff]
  %989 = vmatpush.msra.mxu0 0.0
  %990 = vmatpush.msra.mxu0 0.0
  %991 = vmatpush.msra.mxu0 0.0
  %992 = vmatpush.msra.mxu0 0.0
  %993 = vmatpush.msra.mxu0 0.0
  %994 = vmatpush.msra.mxu0 0.0
  %995 = vmatpush.msra.mxu0 0.0
  %996 = vmatpush.msra.mxu0 0.0
  %997 = vmatpush.msra.mxu0 %v985
  %998 = vmatpush.msra.mxu0 %v983
  %999 = vmatpush.msra.mxu0 %v981
  %1000 = vmatpush.msra.mxu0 %v979
  %1001 = vmatpush.msra.mxu0 %v977
  %1002 = vmatpush.msra.mxu0 %v975
  %1003 = vmatpush.msra.mxu0 %v973
  %1004 = vmatpush.msra.mxu0 %v971
  %1005 = vmatmul.f32.gmra.mxu0 %v249
  %v1006 = vpop.f32.mrf.mxu0
  %v1007 = vadd.f32 0.0, %v1006
  %1008 = vdwg.mxu0
  %1009 = vmatpush.msra.mxu0 0.0
  %1010 = vmatpush.msra.mxu0 0.0
  %1011 = vmatpush.msra.mxu0 0.0
  %1012 = vmatpush.msra.mxu0 0.0
  %1013 = vmatpush.msra.mxu0 0.0
  %1014 = vmatpush.msra.mxu0 0.0
  %1015 = vmatpush.msra.mxu0 0.0
  %1016 = vmatpush.msra.mxu0 0.0
  %1017 = vmatpush.msra.mxu0 %v986
  %1018 = vmatpush.msra.mxu0 %v984
  %1019 = vmatpush.msra.mxu0 %v982
  %1020 = vmatpush.msra.mxu0 %v980
  %1021 = vmatpush.msra.mxu0 %v978
  %1022 = vmatpush.msra.mxu0 %v976
  %1023 = vmatpush.msra.mxu0 %v974
  %1024 = vmatpush.msra.mxu0 %v972
  %1025 = vmatmul.f32.gmra.mxu0 %v249
  %v1026 = vpop.f32.mrf.mxu0
  %v1027 = vadd.f32 0.0, %v1026
  %1028 = vdwg.mxu0
  %v1029 = vadd.f32 %v987, %v1007
  %v1030 = vadd.f32 %v988, %v1027
  %v1031 = vmul.f32 %v1029, %v63
  %v1032 = vmul.f32 %v1030, %v64
  %v1033 = vtanh.pop %v1031
  %v1034 = vtanh.pop %v1032
  %v1035 = vmul.f32 %v1033, %v63
  %v1036 = vmul.f32 %v1034, %v64
  %v1037 = vadd.f32 %v1035, %v65
  %v1038 = vadd.f32 %v1036, %v66
  %v1039 = vmul.f32 %v1037, 0.0
  %v1040 = vmul.f32 %v1037, %v1038
  %1042 = vrot.lane.b32.xlu0 %v1040, 64
  %v1043 = vpop.permute.xlu0 %1042
  %v1045 = vadd.f32 %v1039, %v1043
  %v1046 = vtanh.pop %v1045
  %v1047 = vmul.f32 %v1038, %v1046
  %1049 = vrot.lane.b32.xlu0 %v1047, 64
  %v1050 = vpop.permute.xlu0 %1049
  %1052 = vst.msk [vmem:[#allocation3] sm:$0xff] %vm314, %v1050
  %1053 = vst.msk [vmem:[#allocation3 + $0x38] sm:$0xff] %vm316, %v1050
  %v1054 = vld [vmem:[#allocation2 + $0x10] sm:$0xff]
  %v1055 = vld [vmem:[#allocation2 + $0x18] sm:$0xff]
  %v1056 = vsel %vm247, %v1050, 0
  %1058 = vmatpush.msra.mxu0 0.0
  %1059 = vmatpush.msra.mxu0 0.0
  %1060 = vmatpush.msra.mxu0 0.0
  %1061 = vmatpush.msra.mxu0 0.0
  %1062 = vmatpush.msra.mxu0 0.0
  %1063 = vmatpush.msra.mxu0 0.0
  %1064 = vmatpush.msra.mxu0 0.0
  %1065 = vmatpush.msra.mxu0 0.0
  %1066 = vmatpush.msra.mxu0 %v985
  %1067 = vmatpush.msra.mxu0 %v983
  %1068 = vmatpush.msra.mxu0 %v981
  %1069 = vmatpush.msra.mxu0 %v979
  %1070 = vmatpush.msra.mxu0 %v977
  %1071 = vmatpush.msra.mxu0 %v975
  %1072 = vmatpush.msra.mxu0 %v973
  %1073 = vmatpush.msra.mxu0 %v971
  %1074 = vmatmul.f32.gmra.mxu0 %v1056
  %v1075 = vpop.f32.mrf.mxu0
  %v1076 = vadd.f32 0.0, %v1075
  %1077 = vdwg.mxu0
  %1078 = vmatpush.msra.mxu0 0.0
  %1079 = vmatpush.msra.mxu0 0.0
  %1080 = vmatpush.msra.mxu0 0.0
  %1081 = vmatpush.msra.mxu0 0.0
  %1082 = vmatpush.msra.mxu0 0.0
  %1083 = vmatpush.msra.mxu0 0.0
  %1084 = vmatpush.msra.mxu0 0.0
  %1085 = vmatpush.msra.mxu0 0.0
  %1086 = vmatpush.msra.mxu0 %v986
  %1087 = vmatpush.msra.mxu0 %v984
  %1088 = vmatpush.msra.mxu0 %v982
  %1089 = vmatpush.msra.mxu0 %v980
  %1090 = vmatpush.msra.mxu0 %v978
  %1091 = vmatpush.msra.mxu0 %v976
  %1092 = vmatpush.msra.mxu0 %v974
  %1093 = vmatpush.msra.mxu0 %v972
  %1094 = vmatmul.f32.gmra.mxu0 %v1056
  %v1095 = vpop.f32.mrf.mxu0
  %v1096 = vadd.f32 0.0, %v1095
  %1097 = vdwg.mxu0
  %v1098 = vadd.f32 %v1054, %v1076
  %v1099 = vadd.f32 %v1055, %v1096
  %v1100 = vmul.f32 %v1098, %v63
  %v1101 = vmul.f32 %v1099, %v64
  %v1102 = vtanh.pop %v1100
  %v1103 = vtanh.pop %v1101
  %v1104 = vmul.f32 %v1102, %v63
  %v1105 = vmul.f32 %v1103, %v64
  %v1106 = vadd.f32 %v1104, %v65
  %v1107 = vadd.f32 %v1105, %v66
  %v1108 = vmul.f32 %v1106, %v1045
  %v1109 = vmul.f32 %v1106, %v1107
  %1111 = vrot.lane.b32.xlu0 %v1109, 64
  %v1112 = vpop.permute.xlu0 %1111
  %v1114 = vadd.f32 %v1108, %v1112
  %v1115 = vtanh.pop %v1114
  %v1116 = vmul.f32 %v1107, %v1115
  %1118 = vrot.lane.b32.xlu0 %v1116, 64
  %v1119 = vpop.permute.xlu0 %1118
  %1121 = vst.msk [vmem:[#allocation3 + $0x8] sm:$0xff] %vm314, %v1119
  %1122 = vst.msk [vmem:[#allocation3 + $0x30] sm:$0xff] %vm316, %v1119
  %v1123 = vld [vmem:[#allocation2 + $0x20] sm:$0xff]
  %v1124 = vld [vmem:[#allocation2 + $0x28] sm:$0xff]
  %v1125 = vsel %vm247, %v1119, 0
  %1127 = vmatpush.msra.mxu0 0.0
  %1128 = vmatpush.msra.mxu0 0.0
  %1129 = vmatpush.msra.mxu0 0.0
  %1130 = vmatpush.msra.mxu0 0.0
  %1131 = vmatpush.msra.mxu0 0.0
  %1132 = vmatpush.msra.mxu0 0.0
  %1133 = vmatpush.msra.mxu0 0.0
  %1134 = vmatpush.msra.mxu0 0.0
  %1135 = vmatpush.msra.mxu0 %v985
  %1136 = vmatpush.msra.mxu0 %v983
  %1137 = vmatpush.msra.mxu0 %v981
  %1138 = vmatpush.msra.mxu0 %v979
  %1139 = vmatpush.msra.mxu0 %v977
  %1140 = vmatpush.msra.mxu0 %v975
  %1141 = vmatpush.msra.mxu0 %v973
  %1142 = vmatpush.msra.mxu0 %v971
  %1143 = vmatmul.f32.gmra.mxu0 %v1125
  %v1144 = vpop.f32.mrf.mxu0
  %v1145 = vadd.f32 0.0, %v1144
  %1146 = vdwg.mxu0
  %1147 = vmatpush.msra.mxu0 0.0
  %1148 = vmatpush.msra.mxu0 0.0
  %1149 = vmatpush.msra.mxu0 0.0
  %1150 = vmatpush.msra.mxu0 0.0
  %1151 = vmatpush.msra.mxu0 0.0
  %1152 = vmatpush.msra.mxu0 0.0
  %1153 = vmatpush.msra.mxu0 0.0
  %1154 = vmatpush.msra.mxu0 0.0
  %1155 = vmatpush.msra.mxu0 %v986
  %1156 = vmatpush.msra.mxu0 %v984
  %1157 = vmatpush.msra.mxu0 %v982
  %1158 = vmatpush.msra.mxu0 %v980
  %1159 = vmatpush.msra.mxu0 %v978
  %1160 = vmatpush.msra.mxu0 %v976
  %1161 = vmatpush.msra.mxu0 %v974
  %1162 = vmatpush.msra.mxu0 %v972
  %1163 = vmatmul.f32.gmra.mxu0 %v1125
  %v1164 = vpop.f32.mrf.mxu0
  %v1165 = vadd.f32 0.0, %v1164
  %1166 = vdwg.mxu0
  %v1167 = vadd.f32 %v1123, %v1145
  %v1168 = vadd.f32 %v1124, %v1165
  %v1169 = vmul.f32 %v1167, %v63
  %v1170 = vmul.f32 %v1168, %v64
  %v1171 = vtanh.pop %v1169
  %v1172 = vtanh.pop %v1170
  %v1173 = vmul.f32 %v1171, %v63
  %v1174 = vmul.f32 %v1172, %v64
  %v1175 = vadd.f32 %v1173, %v65
  %v1176 = vadd.f32 %v1174, %v66
  %v1177 = vmul.f32 %v1175, %v1114
  %v1178 = vmul.f32 %v1175, %v1176
  %1180 = vrot.lane.b32.xlu0 %v1178, 64
  %v1181 = vpop.permute.xlu0 %1180
  %v1183 = vadd.f32 %v1177, %v1181
  %v1184 = vtanh.pop %v1183
  %v1185 = vmul.f32 %v1176, %v1184
  %1187 = vrot.lane.b32.xlu0 %v1185, 64
  %v1188 = vpop.permute.xlu0 %1187
  %1190 = vst.msk [vmem:[#allocation3 + $0x10] sm:$0xff] %vm314, %v1188
  %1191 = vst.msk [vmem:[#allocation3 + $0x28] sm:$0xff] %vm316, %v1188
  %v1192 = vld [vmem:[#allocation2 + $0x30] sm:$0xff]
  %v1193 = vld [vmem:[#allocation2 + $0x38] sm:$0xff]
  %v1194 = vsel %vm247, %v1188, 0
  %1196 = vmatpush.msra.mxu0 0.0
  %1197 = vmatpush.msra.mxu0 0.0
  %1198 = vmatpush.msra.mxu0 0.0
  %1199 = vmatpush.msra.mxu0 0.0
  %1200 = vmatpush.msra.mxu0 0.0
  %1201 = vmatpush.msra.mxu0 0.0
  %1202 = vmatpush.msra.mxu0 0.0
  %1203 = vmatpush.msra.mxu0 0.0
  %1204 = vmatpush.msra.mxu0 %v985
  %1205 = vmatpush.msra.mxu0 %v983
  %1206 = vmatpush.msra.mxu0 %v981
  %1207 = vmatpush.msra.mxu0 %v979
  %1208 = vmatpush.msra.mxu0 %v977
  %1209 = vmatpush.msra.mxu0 %v975
  %1210 = vmatpush.msra.mxu0 %v973
  %1211 = vmatpush.msra.mxu0 %v971
  %1212 = vmatmul.f32.gmra.mxu0 %v1194
  %v1213 = vpop.f32.mrf.mxu0
  %v1214 = vadd.f32 0.0, %v1213
  %1215 = vdwg.mxu0
  %1216 = vmatpush.msra.mxu0 0.0
  %1217 = vmatpush.msra.mxu0 0.0
  %1218 = vmatpush.msra.mxu0 0.0
  %1219 = vmatpush.msra.mxu0 0.0
  %1220 = vmatpush.msra.mxu0 0.0
  %1221 = vmatpush.msra.mxu0 0.0
  %1222 = vmatpush.msra.mxu0 0.0
  %1223 = vmatpush.msra.mxu0 0.0
  %1224 = vmatpush.msra.mxu0 %v986
  %1225 = vmatpush.msra.mxu0 %v984
  %1226 = vmatpush.msra.mxu0 %v982
  %1227 = vmatpush.msra.mxu0 %v980
  %1228 = vmatpush.msra.mxu0 %v978
  %1229 = vmatpush.msra.mxu0 %v976
  %1230 = vmatpush.msra.mxu0 %v974
  %1231 = vmatpush.msra.mxu0 %v972
  %1232 = vmatmul.f32.gmra.mxu0 %v1194
  %v1233 = vpop.f32.mrf.mxu0
  %v1234 = vadd.f32 0.0, %v1233
  %1235 = vdwg.mxu0
  %v1236 = vadd.f32 %v1192, %v1214
  %v1237 = vadd.f32 %v1193, %v1234
  %v1238 = vmul.f32 %v1236, %v63
  %v1239 = vmul.f32 %v1237, %v64
  %v1240 = vtanh.pop %v1238
  %v1241 = vtanh.pop %v1239
  %v1242 = vmul.f32 %v1240, %v63
  %v1243 = vmul.f32 %v1241, %v64
  %v1244 = vadd.f32 %v1242, %v65
  %v1245 = vadd.f32 %v1243, %v66
  %v1246 = vmul.f32 %v1244, %v1183
  %v1247 = vmul.f32 %v1244, %v1245
  %1249 = vrot.lane.b32.xlu0 %v1247, 64
  %v1250 = vpop.permute.xlu0 %1249
  %v1252 = vadd.f32 %v1246, %v1250
  %v1253 = vtanh.pop %v1252
  %v1254 = vmul.f32 %v1245, %v1253
  %1256 = vrot.lane.b32.xlu0 %v1254, 64
  %v1257 = vpop.permute.xlu0 %1256
  %1259 = vst.msk [vmem:[#allocation3 + $0x18] sm:$0xff] %vm314, %v1257
  %1260 = vst.msk [vmem:[#allocation3 + $0x20] sm:$0xff] %vm316, %v1257
  %v1261 = vld [vmem:[#allocation2 + $0x40] sm:$0xff]
  %v1262 = vld [vmem:[#allocation2 + $0x48] sm:$0xff]
  %v1263 = vsel %vm247, %v1257, 0
  %1265 = vmatpush.msra.mxu0 0.0
  %1266 = vmatpush.msra.mxu0 0.0
  %1267 = vmatpush.msra.mxu0 0.0
  %1268 = vmatpush.msra.mxu0 0.0
  %1269 = vmatpush.msra.mxu0 0.0
  %1270 = vmatpush.msra.mxu0 0.0
  %1271 = vmatpush.msra.mxu0 0.0
  %1272 = vmatpush.msra.mxu0 0.0
  %1273 = vmatpush.msra.mxu0 %v985
  %1274 = vmatpush.msra.mxu0 %v983
  %1275 = vmatpush.msra.mxu0 %v981
  %1276 = vmatpush.msra.mxu0 %v979
  %1277 = vmatpush.msra.mxu0 %v977
  %1278 = vmatpush.msra.mxu0 %v975
  %1279 = vmatpush.msra.mxu0 %v973
  %1280 = vmatpush.msra.mxu0 %v971
  %1281 = vmatmul.f32.gmra.mxu0 %v1263
  %v1282 = vpop.f32.mrf.mxu0
  %v1283 = vadd.f32 0.0, %v1282
  %1284 = vdwg.mxu0
  %1285 = vmatpush.msra.mxu0 0.0
  %1286 = vmatpush.msra.mxu0 0.0
  %1287 = vmatpush.msra.mxu0 0.0
  %1288 = vmatpush.msra.mxu0 0.0
  %1289 = vmatpush.msra.mxu0 0.0
  %1290 = vmatpush.msra.mxu0 0.0
  %1291 = vmatpush.msra.mxu0 0.0
  %1292 = vmatpush.msra.mxu0 0.0
  %1293 = vmatpush.msra.mxu0 %v986
  %1294 = vmatpush.msra.mxu0 %v984
  %1295 = vmatpush.msra.mxu0 %v982
  %1296 = vmatpush.msra.mxu0 %v980
  %1297 = vmatpush.msra.mxu0 %v978
  %1298 = vmatpush.msra.mxu0 %v976
  %1299 = vmatpush.msra.mxu0 %v974
  %1300 = vmatpush.msra.mxu0 %v972
  %1301 = vmatmul.f32.gmra.mxu0 %v1263
  %v1302 = vpop.f32.mrf.mxu0
  %v1303 = vadd.f32 0.0, %v1302
  %1304 = vdwg.mxu0
  %v1305 = vadd.f32 %v1261, %v1283
  %v1306 = vadd.f32 %v1262, %v1303
  %v1307 = vmul.f32 %v1305, %v63
  %v1308 = vmul.f32 %v1306, %v64
  %v1309 = vtanh.pop %v1307
  %v1310 = vtanh.pop %v1308
  %v1311 = vmul.f32 %v1309, %v63
  %v1312 = vmul.f32 %v1310, %v64
  %v1313 = vadd.f32 %v1311, %v65
  %v1314 = vadd.f32 %v1312, %v66
  %v1315 = vmul.f32 %v1313, %v1252
  %v1316 = vmul.f32 %v1313, %v1314
  %1318 = vrot.lane.b32.xlu0 %v1316, 64
  %v1319 = vpop.permute.xlu0 %1318
  %v1321 = vadd.f32 %v1315, %v1319
  %v1322 = vtanh.pop %v1321
  %v1323 = vmul.f32 %v1314, %v1322
  %1325 = vrot.lane.b32.xlu0 %v1323, 64
  %v1326 = vpop.permute.xlu0 %1325
  %1328 = vst.msk [vmem:[#allocation3 + $0x20] sm:$0xff] %vm314, %v1326
  %1329 = vst.msk [vmem:[#allocation3 + $0x18] sm:$0xff] %vm316, %v1326
  %v1330 = vld [vmem:[#allocation2 + $0x50] sm:$0xff]
  %v1331 = vld [vmem:[#allocation2 + $0x58] sm:$0xff]
  %v1332 = vsel %vm247, %v1326, 0
  %1334 = vmatpush.msra.mxu0 0.0
  %1335 = vmatpush.msra.mxu0 0.0
  %1336 = vmatpush.msra.mxu0 0.0
  %1337 = vmatpush.msra.mxu0 0.0
  %1338 = vmatpush.msra.mxu0 0.0
  %1339 = vmatpush.msra.mxu0 0.0
  %1340 = vmatpush.msra.mxu0 0.0
  %1341 = vmatpush.msra.mxu0 0.0
  %1342 = vmatpush.msra.mxu0 %v985
  %1343 = vmatpush.msra.mxu0 %v983
  %1344 = vmatpush.msra.mxu0 %v981
  %1345 = vmatpush.msra.mxu0 %v979
  %1346 = vmatpush.msra.mxu0 %v977
  %1347 = vmatpush.msra.mxu0 %v975
  %1348 = vmatpush.msra.mxu0 %v973
  %1349 = vmatpush.msra.mxu0 %v971
  %1350 = vmatmul.f32.gmra.mxu0 %v1332
  %v1351 = vpop.f32.mrf.mxu0
  %v1352 = vadd.f32 0.0, %v1351
  %1353 = vdwg.mxu0
  %1354 = vmatpush.msra.mxu0 0.0
  %1355 = vmatpush.msra.mxu0 0.0
  %1356 = vmatpush.msra.mxu0 0.0
  %1357 = vmatpush.msra.mxu0 0.0
  %1358 = vmatpush.msra.mxu0 0.0
  %1359 = vmatpush.msra.mxu0 0.0
  %1360 = vmatpush.msra.mxu0 0.0
  %1361 = vmatpush.msra.mxu0 0.0
  %1362 = vmatpush.msra.mxu0 %v986
  %1363 = vmatpush.msra.mxu0 %v984
  %1364 = vmatpush.msra.mxu0 %v982
  %1365 = vmatpush.msra.mxu0 %v980
  %1366 = vmatpush.msra.mxu0 %v978
  %1367 = vmatpush.msra.mxu0 %v976
  %1368 = vmatpush.msra.mxu0 %v974
  %1369 = vmatpush.msra.mxu0 %v972
  %1370 = vmatmul.f32.gmra.mxu0 %v1332
  %v1371 = vpop.f32.mrf.mxu0
  %v1372 = vadd.f32 0.0, %v1371
  %1373 = vdwg.mxu0
  %v1374 = vadd.f32 %v1330, %v1352
  %v1375 = vadd.f32 %v1331, %v1372
  %v1376 = vmul.f32 %v1374, %v63
  %v1377 = vmul.f32 %v1375, %v64
  %v1378 = vtanh.pop %v1376
  %v1379 = vtanh.pop %v1377
  %v1380 = vmul.f32 %v1378, %v63
  %v1381 = vmul.f32 %v1379, %v64
  %v1382 = vadd.f32 %v1380, %v65
  %v1383 = vadd.f32 %v1381, %v66
  %v1384 = vmul.f32 %v1382, %v1321
  %v1385 = vmul.f32 %v1382, %v1383
  %1387 = vrot.lane.b32.xlu0 %v1385, 64
  %v1388 = vpop.permute.xlu0 %1387
  %v1390 = vadd.f32 %v1384, %v1388
  %v1391 = vtanh.pop %v1390
  %v1392 = vmul.f32 %v1383, %v1391
  %1394 = vrot.lane.b32.xlu0 %v1392, 64
  %v1395 = vpop.permute.xlu0 %1394
  %1397 = vst.msk [vmem:[#allocation3 + $0x28] sm:$0xff] %vm314, %v1395
  %1398 = vst.msk [vmem:[#allocation3 + $0x10] sm:$0xff] %vm316, %v1395
  %v1399 = vld [vmem:[#allocation2 + $0x60] sm:$0xff]
  %v1400 = vld [vmem:[#allocation2 + $0x68] sm:$0xff]
  %v1401 = vsel %vm247, %v1395, 0
  %1403 = vmatpush.msra.mxu0 0.0
  %1404 = vmatpush.msra.mxu0 0.0
  %1405 = vmatpush.msra.mxu0 0.0
  %1406 = vmatpush.msra.mxu0 0.0
  %1407 = vmatpush.msra.mxu0 0.0
  %1408 = vmatpush.msra.mxu0 0.0
  %1409 = vmatpush.msra.mxu0 0.0
  %1410 = vmatpush.msra.mxu0 0.0
  %1411 = vmatpush.msra.mxu0 %v985
  %1412 = vmatpush.msra.mxu0 %v983
  %1413 = vmatpush.msra.mxu0 %v981
  %1414 = vmatpush.msra.mxu0 %v979
  %1415 = vmatpush.msra.mxu0 %v977
  %1416 = vmatpush.msra.mxu0 %v975
  %1417 = vmatpush.msra.mxu0 %v973
  %1418 = vmatpush.msra.mxu0 %v971
  %1419 = vmatmul.f32.gmra.mxu0 %v1401
  %v1420 = vpop.f32.mrf.mxu0
  %v1421 = vadd.f32 0.0, %v1420
  %1422 = vdwg.mxu0
  %1423 = vmatpush.msra.mxu0 0.0
  %1424 = vmatpush.msra.mxu0 0.0
  %1425 = vmatpush.msra.mxu0 0.0
  %1426 = vmatpush.msra.mxu0 0.0
  %1427 = vmatpush.msra.mxu0 0.0
  %1428 = vmatpush.msra.mxu0 0.0
  %1429 = vmatpush.msra.mxu0 0.0
  %1430 = vmatpush.msra.mxu0 0.0
  %1431 = vmatpush.msra.mxu0 %v986
  %1432 = vmatpush.msra.mxu0 %v984
  %1433 = vmatpush.msra.mxu0 %v982
  %1434 = vmatpush.msra.mxu0 %v980
  %1435 = vmatpush.msra.mxu0 %v978
  %1436 = vmatpush.msra.mxu0 %v976
  %1437 = vmatpush.msra.mxu0 %v974
  %1438 = vmatpush.msra.mxu0 %v972
  %1439 = vmatmul.f32.gmra.mxu0 %v1401
  %v1440 = vpop.f32.mrf.mxu0
  %v1441 = vadd.f32 0.0, %v1440
  %1442 = vdwg.mxu0
  %v1443 = vadd.f32 %v1399, %v1421
  %v1444 = vadd.f32 %v1400, %v1441
  %v1445 = vmul.f32 %v1443, %v63
  %v1446 = vmul.f32 %v1444, %v64
  %v1447 = vtanh.pop %v1445
  %v1448 = vtanh.pop %v1446
  %v1449 = vmul.f32 %v1447, %v63
  %v1450 = vmul.f32 %v1448, %v64
  %v1451 = vadd.f32 %v1449, %v65
  %v1452 = vadd.f32 %v1450, %v66
  %v1453 = vmul.f32 %v1451, %v1390
  %v1454 = vmul.f32 %v1451, %v1452
  %1456 = vrot.lane.b32.xlu0 %v1454, 64
  %v1457 = vpop.permute.xlu0 %1456
  %v1459 = vadd.f32 %v1453, %v1457
  %v1460 = vtanh.pop %v1459
  %v1461 = vmul.f32 %v1452, %v1460
  %1463 = vrot.lane.b32.xlu0 %v1461, 64
  %v1464 = vpop.permute.xlu0 %1463
  %1466 = vst.msk [vmem:[#allocation3 + $0x30] sm:$0xff] %vm314, %v1464
  %1467 = vst.msk [vmem:[#allocation3 + $0x8] sm:$0xff] %vm316, %v1464
  %v1468 = vld [vmem:[#allocation2 + $0x70] sm:$0xff]
  %v1469 = vld [vmem:[#allocation2 + $0x78] sm:$0xff]
  %v1470 = vsel %vm247, %v1464, 0
  %1472 = vmatpush.msra.mxu0 0.0
  %1473 = vmatpush.msra.mxu0 0.0
  %1474 = vmatpush.msra.mxu0 0.0
  %1475 = vmatpush.msra.mxu0 0.0
  %1476 = vmatpush.msra.mxu0 0.0
  %1477 = vmatpush.msra.mxu0 0.0
  %1478 = vmatpush.msra.mxu0 0.0
  %1479 = vmatpush.msra.mxu0 0.0
  %1480 = vmatpush.msra.mxu0 %v985
  %1481 = vmatpush.msra.mxu0 %v983
  %1482 = vmatpush.msra.mxu0 %v981
  %1483 = vmatpush.msra.mxu0 %v979
  %1484 = vmatpush.msra.mxu0 %v977
  %1485 = vmatpush.msra.mxu0 %v975
  %1486 = vmatpush.msra.mxu0 %v973
  %1487 = vmatpush.msra.mxu0 %v971
  %1488 = vmatmul.f32.gmra.mxu0 %v1470
  %v1489 = vpop.f32.mrf.mxu0
  %v1490 = vadd.f32 0.0, %v1489
  %1491 = vdwg.mxu0
  %1492 = vmatpush.msra.mxu0 0.0
  %1493 = vmatpush.msra.mxu0 0.0
  %1494 = vmatpush.msra.mxu0 0.0
  %1495 = vmatpush.msra.mxu0 0.0
  %1496 = vmatpush.msra.mxu0 0.0
  %1497 = vmatpush.msra.mxu0 0.0
  %1498 = vmatpush.msra.mxu0 0.0
  %1499 = vmatpush.msra.mxu0 0.0
  %1500 = vmatpush.msra.mxu0 %v986
  %1501 = vmatpush.msra.mxu0 %v984
  %1502 = vmatpush.msra.mxu0 %v982
  %1503 = vmatpush.msra.mxu0 %v980
  %1504 = vmatpush.msra.mxu0 %v978
  %1505 = vmatpush.msra.mxu0 %v976
  %1506 = vmatpush.msra.mxu0 %v974
  %1507 = vmatpush.msra.mxu0 %v972
  %1508 = vmatmul.f32.gmra.mxu0 %v1470
  %v1509 = vpop.f32.mrf.mxu0
  %v1510 = vadd.f32 0.0, %v1509
  %1511 = vdwg.mxu0
  %v1512 = vadd.f32 %v1468, %v1490
  %v1513 = vadd.f32 %v1469, %v1510
  %v1514 = vmul.f32 %v1512, %v63
  %v1515 = vmul.f32 %v1513, %v64
  %v1516 = vtanh.pop %v1514
  %v1517 = vtanh.pop %v1515
  %v1518 = vmul.f32 %v1516, %v63
  %v1519 = vmul.f32 %v1517, %v64
  %v1520 = vadd.f32 %v1518, %v65
  %v1521 = vadd.f32 %v1519, %v66
  %v1522 = vmul.f32 %v1520, %v1459
  %v1523 = vmul.f32 %v1520, %v1521
  %1525 = vrot.lane.b32.xlu0 %v1523, 64
  %v1526 = vpop.permute.xlu0 %1525
  %v1528 = vadd.f32 %v1522, %v1526
  %v1529 = vtanh.pop %v1528
  %v1530 = vmul.f32 %v1521, %v1529
  %1532 = vrot.lane.b32.xlu0 %v1530, 64
  %v1533 = vpop.permute.xlu0 %1532
  %1535 = vst.msk [vmem:[#allocation3 + $0x38] sm:$0xff] %vm314, %v1533
  %1536 = vst.msk [vmem:[#allocation3] sm:$0xff] %vm316, %v1533
  %v1537 = vld [vmem:[#allocation3] sm:$0xff]
  %v1538 = vld [vmem:[#allocation3 + $0x8] sm:$0xff]
  %v1539 = vld [vmem:[#allocation3 + $0x10] sm:$0xff]
  %v1540 = vld [vmem:[#allocation3 + $0x18] sm:$0xff]
  %v1541 = vld [vmem:[#allocation3 + $0x20] sm:$0xff]
  %v1542 = vld [vmem:[#allocation3 + $0x28] sm:$0xff]
  %v1543 = vld [vmem:[#allocation3 + $0x30] sm:$0xff]
  %v1544 = vld [vmem:[#allocation3 + $0x38] sm:$0xff]
  %s1545 = scalar_lea.vmem %s2, 128
  %v1546 = vld [vmem:[%s1545] sm:$0xff]
  %v1547 = vld [vmem:[%s1545 + $0x8] sm:$0xff]
  %v1548 = vld [vmem:[%s1545 + $0x10] sm:$0xff]
  %v1549 = vld [vmem:[%s1545 + $0x18] sm:$0xff]
  %v1550 = vld [vmem:[%s1545 + $0x20] sm:$0xff]
  %v1551 = vld [vmem:[%s1545 + $0x28] sm:$0xff]
  %v1552 = vld [vmem:[%s1545 + $0x30] sm:$0xff]
  %v1553 = vld [vmem:[%s1545 + $0x38] sm:$0xff]
  %v1554 = vld [vmem:[%s1545 + $0x40] sm:$0xff]
  %v1555 = vld [vmem:[%s1545 + $0x48] sm:$0xff]
  %v1556 = vld [vmem:[%s1545 + $0x50] sm:$0xff]
  %v1557 = vld [vmem:[%s1545 + $0x58] sm:$0xff]
  %v1558 = vld [vmem:[%s1545 + $0x60] sm:$0xff]
  %v1559 = vld [vmem:[%s1545 + $0x68] sm:$0xff]
  %v1560 = vld [vmem:[%s1545 + $0x70] sm:$0xff]
  %v1561 = vld [vmem:[%s1545 + $0x78] sm:$0xff]
  %s1562 = scalar_lea.vmem %s4, 4
  %v1563 = vld [vmem:[%s1562] sm:$0x3]
  %v1565 = vperm.slane %v1563, 0
  %v1566 = vperm.slane %v1563, 1
  %v1570 = vsel %vm247, %v1537, 0
  %v1573 = vsel %vm247, %v1538, 0
  %v1576 = vsel %vm247, %v1539, 0
  %v1579 = vsel %vm247, %v1540, 0
  %v1582 = vsel %vm247, %v1541, 0
  %v1585 = vsel %vm247, %v1542, 0
  %v1588 = vsel %vm247, %v1543, 0
  %v1591 = vsel %vm247, %v1544, 0
  %1593 = vmatpush.msra.mxu0 0.0
  %1594 = vmatpush.msra.mxu0 0.0
  %1595 = vmatpush.msra.mxu0 0.0
  %1596 = vmatpush.msra.mxu0 0.0
  %1597 = vmatpush.msra.mxu0 0.0
  %1598 = vmatpush.msra.mxu0 0.0
  %1599 = vmatpush.msra.mxu0 0.0
  %1600 = vmatpush.msra.mxu0 0.0
  %1601 = vmatpush.msra.mxu0 %v1560
  %1602 = vmatpush.msra.mxu0 %v1558
  %1603 = vmatpush.msra.mxu0 %v1556
  %1604 = vmatpush.msra.mxu0 %v1554
  %1605 = vmatpush.msra.mxu0 %v1552
  %1606 = vmatpush.msra.mxu0 %v1550
  %1607 = vmatpush.msra.mxu0 %v1548
  %1608 = vmatpush.msra.mxu0 %v1546
  %1609 = vmatmul.f32.gmra.mxu0 %v1570
  %v1610 = vpop.f32.mrf.mxu0
  %v1611 = vadd.f32 %v1565, %v1610
  %1612 = vmatmul.f32.gmra.mxu0 %v1573
  %v1613 = vpop.f32.mrf.mxu0
  %v1614 = vadd.f32 %v1565, %v1613
  %1615 = vmatmul.f32.gmra.mxu0 %v1576
  %v1616 = vpop.f32.mrf.mxu0
  %v1617 = vadd.f32 %v1565, %v1616
  %1618 = vmatmul.f32.gmra.mxu0 %v1579
  %v1619 = vpop.f32.mrf.mxu0
  %v1620 = vadd.f32 %v1565, %v1619
  %1621 = vmatmul.f32.gmra.mxu0 %v1582
  %v1622 = vpop.f32.mrf.mxu0
  %v1623 = vadd.f32 %v1565, %v1622
  %1624 = vmatmul.f32.gmra.mxu0 %v1585
  %v1625 = vpop.f32.mrf.mxu0
  %v1626 = vadd.f32 %v1565, %v1625
  %1627 = vmatmul.f32.gmra.mxu0 %v1588
  %v1628 = vpop.f32.mrf.mxu0
  %v1629 = vadd.f32 %v1565, %v1628
  %1630 = vmatmul.f32.gmra.mxu0 %v1591
  %v1631 = vpop.f32.mrf.mxu0
  %v1632 = vadd.f32 %v1565, %v1631
  %1633 = vdwg.mxu0
  %1634 = vmatpush.msra.mxu0 0.0
  %1635 = vmatpush.msra.mxu0 0.0
  %1636 = vmatpush.msra.mxu0 0.0
  %1637 = vmatpush.msra.mxu0 0.0
  %1638 = vmatpush.msra.mxu0 0.0
  %1639 = vmatpush.msra.mxu0 0.0
  %1640 = vmatpush.msra.mxu0 0.0
  %1641 = vmatpush.msra.mxu0 0.0
  %1642 = vmatpush.msra.mxu0 %v1561
  %1643 = vmatpush.msra.mxu0 %v1559
  %1644 = vmatpush.msra.mxu0 %v1557
  %1645 = vmatpush.msra.mxu0 %v1555
  %1646 = vmatpush.msra.mxu0 %v1553
  %1647 = vmatpush.msra.mxu0 %v1551
  %1648 = vmatpush.msra.mxu0 %v1549
  %1649 = vmatpush.msra.mxu0 %v1547
  %1650 = vmatmul.f32.gmra.mxu0 %v1570
  %v1651 = vpop.f32.mrf.mxu0
  %v1652 = vadd.f32 %v1566, %v1651
  %1653 = vmatmul.f32.gmra.mxu0 %v1573
  %v1654 = vpop.f32.mrf.mxu0
  %v1655 = vadd.f32 %v1566, %v1654
  %1656 = vmatmul.f32.gmra.mxu0 %v1576
  %v1657 = vpop.f32.mrf.mxu0
  %v1658 = vadd.f32 %v1566, %v1657
  %1659 = vmatmul.f32.gmra.mxu0 %v1579
  %v1660 = vpop.f32.mrf.mxu0
  %v1661 = vadd.f32 %v1566, %v1660
  %1662 = vmatmul.f32.gmra.mxu0 %v1582
  %v1663 = vpop.f32.mrf.mxu0
  %v1664 = vadd.f32 %v1566, %v1663
  %1665 = vmatmul.f32.gmra.mxu0 %v1585
  %v1666 = vpop.f32.mrf.mxu0
  %v1667 = vadd.f32 %v1566, %v1666
  %1668 = vmatmul.f32.gmra.mxu0 %v1588
  %v1669 = vpop.f32.mrf.mxu0
  %v1670 = vadd.f32 %v1566, %v1669
  %1671 = vmatmul.f32.gmra.mxu0 %v1591
  %v1672 = vpop.f32.mrf.mxu0
  %v1673 = vadd.f32 %v1566, %v1672
  %1674 = vdwg.mxu0
  %v1675 = vsel %vm195, %v1611, %v1632
  %v1676 = vsel %vm196, %v1652, %v1673
  %1677 = vst [vmem:[#allocation2] sm:$0xff] %v1675
  %1678 = vst [vmem:[#allocation2 + $0x8] sm:$0xff] %v1676
  %v1679 = vsel %vm195, %v1614, %v1629
  %v1680 = vsel %vm196, %v1655, %v1670
  %1681 = vst [vmem:[#allocation2 + $0x10] sm:$0xff] %v1679
  %1682 = vst [vmem:[#allocation2 + $0x18] sm:$0xff] %v1680
  %v1683 = vsel %vm195, %v1617, %v1626
  %v1684 = vsel %vm196, %v1658, %v1667
  %1685 = vst [vmem:[#allocation2 + $0x20] sm:$0xff] %v1683
  %1686 = vst [vmem:[#allocation2 + $0x28] sm:$0xff] %v1684
  %v1687 = vsel %vm195, %v1620, %v1623
  %v1688 = vsel %vm196, %v1661, %v1664
  %1689 = vst [vmem:[#allocation2 + $0x30] sm:$0xff] %v1687
  %1690 = vst [vmem:[#allocation2 + $0x38] sm:$0xff] %v1688
  %v1691 = vsel %vm195, %v1623, %v1620
  %v1692 = vsel %vm196, %v1664, %v1661
  %1693 = vst [vmem:[#allocation2 + $0x40] sm:$0xff] %v1691
  %1694 = vst [vmem:[#allocation2 + $0x48] sm:$0xff] %v1692
  %v1695 = vsel %vm195, %v1626, %v1617
  %v1696 = vsel %vm196, %v1667, %v1658
  %1697 = vst [vmem:[#allocation2 + $0x50] sm:$0xff] %v1695
  %1698 = vst [vmem:[#allocation2 + $0x58] sm:$0xff] %v1696
  %v1699 = vsel %vm195, %v1629, %v1614
  %v1700 = vsel %vm196, %v1670, %v1655
  %1701 = vst [vmem:[#allocation2 + $0x60] sm:$0xff] %v1699
  %1702 = vst [vmem:[#allocation2 + $0x68] sm:$0xff] %v1700
  %v1703 = vsel %vm195, %v1632, %v1611
  %v1704 = vsel %vm196, %v1673, %v1652
  %1705 = vst [vmem:[#allocation2 + $0x70] sm:$0xff] %v1703
  %1706 = vst [vmem:[#allocation2 + $0x78] sm:$0xff] %v1704
  %s1707 = scalar_lea.vmem %s3, 256
  %v1708 = vld [vmem:[%s1707] sm:$0xff]
  %v1709 = vld [vmem:[%s1707 + $0x8] sm:$0xff]
  %v1710 = vld [vmem:[%s1707 + $0x10] sm:$0xff]
  %v1711 = vld [vmem:[%s1707 + $0x18] sm:$0xff]
  %v1712 = vld [vmem:[%s1707 + $0x20] sm:$0xff]
  %v1713 = vld [vmem:[%s1707 + $0x28] sm:$0xff]
  %v1714 = vld [vmem:[%s1707 + $0x30] sm:$0xff]
  %v1715 = vld [vmem:[%s1707 + $0x38] sm:$0xff]
  %v1716 = vld [vmem:[%s1707 + $0x40] sm:$0xff]
  %v1717 = vld [vmem:[%s1707 + $0x48] sm:$0xff]
  %v1718 = vld [vmem:[%s1707 + $0x50] sm:$0xff]
  %v1719 = vld [vmem:[%s1707 + $0x58] sm:$0xff]
  %v1720 = vld [vmem:[%s1707 + $0x60] sm:$0xff]
  %v1721 = vld [vmem:[%s1707 + $0x68] sm:$0xff]
  %v1722 = vld [vmem:[%s1707 + $0x70] sm:$0xff]
  %v1723 = vld [vmem:[%s1707 + $0x78] sm:$0xff]
  %v1724 = vld [vmem:[#allocation2] sm:$0xff]
  %v1725 = vld [vmem:[#allocation2 + $0x8] sm:$0xff]
  %1726 = vmatpush.msra.mxu0 0.0
  %1727 = vmatpush.msra.mxu0 0.0
  %1728 = vmatpush.msra.mxu0 0.0
  %1729 = vmatpush.msra.mxu0 0.0
  %1730 = vmatpush.msra.mxu0 0.0
  %1731 = vmatpush.msra.mxu0 0.0
  %1732 = vmatpush.msra.mxu0 0.0
  %1733 = vmatpush.msra.mxu0 0.0
  %1734 = vmatpush.msra.mxu0 %v1722
  %1735 = vmatpush.msra.mxu0 %v1720
  %1736 = vmatpush.msra.mxu0 %v1718
  %1737 = vmatpush.msra.mxu0 %v1716
  %1738 = vmatpush.msra.mxu0 %v1714
  %1739 = vmatpush.msra.mxu0 %v1712
  %1740 = vmatpush.msra.mxu0 %v1710
  %1741 = vmatpush.msra.mxu0 %v1708
  %1742 = vmatmul.f32.gmra.mxu0 %v249
  %v1743 = vpop.f32.mrf.mxu0
  %v1744 = vadd.f32 0.0, %v1743
  %1745 = vdwg.mxu0
  %1746 = vmatpush.msra.mxu0 0.0
  %1747 = vmatpush.msra.mxu0 0.0
  %1748 = vmatpush.msra.mxu0 0.0
  %1749 = vmatpush.msra.mxu0 0.0
  %1750 = vmatpush.msra.mxu0 0.0
  %1751 = vmatpush.msra.mxu0 0.0
  %1752 = vmatpush.msra.mxu0 0.0
  %1753 = vmatpush.msra.mxu0 0.0
  %1754 = vmatpush.msra.mxu0 %v1723
  %1755 = vmatpush.msra.mxu0 %v1721
  %1756 = vmatpush.msra.mxu0 %v1719
  %1757 = vmatpush.msra.mxu0 %v1717
  %1758 = vmatpush.msra.mxu0 %v1715
  %1759 = vmatpush.msra.mxu0 %v1713
  %1760 = vmatpush.msra.mxu0 %v1711
  %1761 = vmatpush.msra.mxu0 %v1709
  %1762 = vmatmul.f32.gmra.mxu0 %v249
  %v1763 = vpop.f32.mrf.mxu0
  %v1764 = vadd.f32 0.0, %v1763
  %1765 = vdwg.mxu0
  %v1766 = vadd.f32 %v1724, %v1744
  %v1767 = vadd.f32 %v1725, %v1764
  %v1768 = vmul.f32 %v1766, %v63
  %v1769 = vmul.f32 %v1767, %v64
  %v1770 = vtanh.pop %v1768
  %v1771 = vtanh.pop %v1769
  %v1772 = vmul.f32 %v1770, %v63
  %v1773 = vmul.f32 %v1771, %v64
  %v1774 = vadd.f32 %v1772, %v65
  %v1775 = vadd.f32 %v1773, %v66
  %v1776 = vmul.f32 %v1774, 0.0
  %v1777 = vmul.f32 %v1774, %v1775
  %1779 = vrot.lane.b32.xlu0 %v1777, 64
  %v1780 = vpop.permute.xlu0 %1779
  %v1782 = vadd.f32 %v1776, %v1780
  %v1783 = vtanh.pop %v1782
  %v1784 = vmul.f32 %v1775, %v1783
  %1786 = vrot.lane.b32.xlu0 %v1784, 64
  %v1787 = vpop.permute.xlu0 %1786
  %1789 = vst.msk [vmem:[#allocation3] sm:$0xff] %vm314, %v1787
  %1790 = vst.msk [vmem:[#allocation3 + $0x38] sm:$0xff] %vm316, %v1787
  %v1791 = vld [vmem:[#allocation2 + $0x10] sm:$0xff]
  %v1792 = vld [vmem:[#allocation2 + $0x18] sm:$0xff]
  %v1793 = vsel %vm247, %v1787, 0
  %1795 = vmatpush.msra.mxu0 0.0
  %1796 = vmatpush.msra.mxu0 0.0
  %1797 = vmatpush.msra.mxu0 0.0
  %1798 = vmatpush.msra.mxu0 0.0
  %1799 = vmatpush.msra.mxu0 0.0
  %1800 = vmatpush.msra.mxu0 0.0
  %1801 = vmatpush.msra.mxu0 0.0
  %1802 = vmatpush.msra.mxu0 0.0
  %1803 = vmatpush.msra.mxu0 %v1722
  %1804 = vmatpush.msra.mxu0 %v1720
  %1805 = vmatpush.msra.mxu0 %v1718
  %1806 = vmatpush.msra.mxu0 %v1716
  %1807 = vmatpush.msra.mxu0 %v1714
  %1808 = vmatpush.msra.mxu0 %v1712
  %1809 = vmatpush.msra.mxu0 %v1710
  %1810 = vmatpush.msra.mxu0 %v1708
  %1811 = vmatmul.f32.gmra.mxu0 %v1793
  %v1812 = vpop.f32.mrf.mxu0
  %v1813 = vadd.f32 0.0, %v1812
  %1814 = vdwg.mxu0
  %1815 = vmatpush.msra.mxu0 0.0
  %1816 = vmatpush.msra.mxu0 0.0
  %1817 = vmatpush.msra.mxu0 0.0
  %1818 = vmatpush.msra.mxu0 0.0
  %1819 = vmatpush.msra.mxu0 0.0
  %1820 = vmatpush.msra.mxu0 0.0
  %1821 = vmatpush.msra.mxu0 0.0
  %1822 = vmatpush.msra.mxu0 0.0
  %1823 = vmatpush.msra.mxu0 %v1723
  %1824 = vmatpush.msra.mxu0 %v1721
  %1825 = vmatpush.msra.mxu0 %v1719
  %1826 = vmatpush.msra.mxu0 %v1717
  %1827 = vmatpush.msra.mxu0 %v1715
  %1828 = vmatpush.msra.mxu0 %v1713
  %1829 = vmatpush.msra.mxu0 %v1711
  %1830 = vmatpush.msra.mxu0 %v1709
  %1831 = vmatmul.f32.gmra.mxu0 %v1793
  %v1832 = vpop.f32.mrf.mxu0
  %v1833 = vadd.f32 0.0, %v1832
  %1834 = vdwg.mxu0
  %v1835 = vadd.f32 %v1791, %v1813
  %v1836 = vadd.f32 %v1792, %v1833
  %v1837 = vmul.f32 %v1835, %v63
  %v1838 = vmul.f32 %v1836, %v64
  %v1839 = vtanh.pop %v1837
  %v1840 = vtanh.pop %v1838
  %v1841 = vmul.f32 %v1839, %v63
  %v1842 = vmul.f32 %v1840, %v64
  %v1843 = vadd.f32 %v1841, %v65
  %v1844 = vadd.f32 %v1842, %v66
  %v1845 = vmul.f32 %v1843, %v1782
  %v1846 = vmul.f32 %v1843, %v1844
  %1848 = vrot.lane.b32.xlu0 %v1846, 64
  %v1849 = vpop.permute.xlu0 %1848
  %v1851 = vadd.f32 %v1845, %v1849
  %v1852 = vtanh.pop %v1851
  %v1853 = vmul.f32 %v1844, %v1852
  %1855 = vrot.lane.b32.xlu0 %v1853, 64
  %v1856 = vpop.permute.xlu0 %1855
  %1858 = vst.msk [vmem:[#allocation3 + $0x8] sm:$0xff] %vm314, %v1856
  %1859 = vst.msk [vmem:[#allocation3 + $0x30] sm:$0xff] %vm316, %v1856
  %v1860 = vld [vmem:[#allocation2 + $0x20] sm:$0xff]
  %v1861 = vld [vmem:[#allocation2 + $0x28] sm:$0xff]
  %v1862 = vsel %vm247, %v1856, 0
  %1864 = vmatpush.msra.mxu0 0.0
  %1865 = vmatpush.msra.mxu0 0.0
  %1866 = vmatpush.msra.mxu0 0.0
  %1867 = vmatpush.msra.mxu0 0.0
  %1868 = vmatpush.msra.mxu0 0.0
  %1869 = vmatpush.msra.mxu0 0.0
  %1870 = vmatpush.msra.mxu0 0.0
  %1871 = vmatpush.msra.mxu0 0.0
  %1872 = vmatpush.msra.mxu0 %v1722
  %1873 = vmatpush.msra.mxu0 %v1720
  %1874 = vmatpush.msra.mxu0 %v1718
  %1875 = vmatpush.msra.mxu0 %v1716
  %1876 = vmatpush.msra.mxu0 %v1714
  %1877 = vmatpush.msra.mxu0 %v1712
  %1878 = vmatpush.msra.mxu0 %v1710
  %1879 = vmatpush.msra.mxu0 %v1708
  %1880 = vmatmul.f32.gmra.mxu0 %v1862
  %v1881 = vpop.f32.mrf.mxu0
  %v1882 = vadd.f32 0.0, %v1881
  %1883 = vdwg.mxu0
  %1884 = vmatpush.msra.mxu0 0.0
  %1885 = vmatpush.msra.mxu0 0.0
  %1886 = vmatpush.msra.mxu0 0.0
  %1887 = vmatpush.msra.mxu0 0.0
  %1888 = vmatpush.msra.mxu0 0.0
  %1889 = vmatpush.msra.mxu0 0.0
  %1890 = vmatpush.msra.mxu0 0.0
  %1891 = vmatpush.msra.mxu0 0.0
  %1892 = vmatpush.msra.mxu0 %v1723
  %1893 = vmatpush.msra.mxu0 %v1721
  %1894 = vmatpush.msra.mxu0 %v1719
  %1895 = vmatpush.msra.mxu0 %v1717
  %1896 = vmatpush.msra.mxu0 %v1715
  %1897 = vmatpush.msra.mxu0 %v1713
  %1898 = vmatpush.msra.mxu0 %v1711
  %1899 = vmatpush.msra.mxu0 %v1709
  %1900 = vmatmul.f32.gmra.mxu0 %v1862
  %v1901 = vpop.f32.mrf.mxu0
  %v1902 = vadd.f32 0.0, %v1901
  %1903 = vdwg.mxu0
  %v1904 = vadd.f32 %v1860, %v1882
  %v1905 = vadd.f32 %v1861, %v1902
  %v1906 = vmul.f32 %v1904, %v63
  %v1907 = vmul.f32 %v1905, %v64
  %v1908 = vtanh.pop %v1906
  %v1909 = vtanh.pop %v1907
  %v1910 = vmul.f32 %v1908, %v63
  %v1911 = vmul.f32 %v1909, %v64
  %v1912 = vadd.f32 %v1910, %v65
  %v1913 = vadd.f32 %v1911, %v66
  %v1914 = vmul.f32 %v1912, %v1851
  %v1915 = vmul.f32 %v1912, %v1913
  %1917 = vrot.lane.b32.xlu0 %v1915, 64
  %v1918 = vpop.permute.xlu0 %1917
  %v1920 = vadd.f32 %v1914, %v1918
  %v1921 = vtanh.pop %v1920
  %v1922 = vmul.f32 %v1913, %v1921
  %1924 = vrot.lane.b32.xlu0 %v1922, 64
  %v1925 = vpop.permute.xlu0 %1924
  %1927 = vst.msk [vmem:[#allocation3 + $0x10] sm:$0xff] %vm314, %v1925
  %1928 = vst.msk [vmem:[#allocation3 + $0x28] sm:$0xff] %vm316, %v1925
  %v1929 = vld [vmem:[#allocation2 + $0x30] sm:$0xff]
  %v1930 = vld [vmem:[#allocation2 + $0x38] sm:$0xff]
  %v1931 = vsel %vm247, %v1925, 0
  %1933 = vmatpush.msra.mxu0 0.0
  %1934 = vmatpush.msra.mxu0 0.0
  %1935 = vmatpush.msra.mxu0 0.0
  %1936 = vmatpush.msra.mxu0 0.0
  %1937 = vmatpush.msra.mxu0 0.0
  %1938 = vmatpush.msra.mxu0 0.0
  %1939 = vmatpush.msra.mxu0 0.0
  %1940 = vmatpush.msra.mxu0 0.0
  %1941 = vmatpush.msra.mxu0 %v1722
  %1942 = vmatpush.msra.mxu0 %v1720
  %1943 = vmatpush.msra.mxu0 %v1718
  %1944 = vmatpush.msra.mxu0 %v1716
  %1945 = vmatpush.msra.mxu0 %v1714
  %1946 = vmatpush.msra.mxu0 %v1712
  %1947 = vmatpush.msra.mxu0 %v1710
  %1948 = vmatpush.msra.mxu0 %v1708
  %1949 = vmatmul.f32.gmra.mxu0 %v1931
  %v1950 = vpop.f32.mrf.mxu0
  %v1951 = vadd.f32 0.0, %v1950
  %1952 = vdwg.mxu0
  %1953 = vmatpush.msra.mxu0 0.0
  %1954 = vmatpush.msra.mxu0 0.0
  %1955 = vmatpush.msra.mxu0 0.0
  %1956 = vmatpush.msra.mxu0 0.0
  %1957 = vmatpush.msra.mxu0 0.0
  %1958 = vmatpush.msra.mxu0 0.0
  %1959 = vmatpush.msra.mxu0 0.0
  %1960 = vmatpush.msra.mxu0 0.0
  %1961 = vmatpush.msra.mxu0 %v1723
  %1962 = vmatpush.msra.mxu0 %v1721
  %1963 = vmatpush.msra.mxu0 %v1719
  %1964 = vmatpush.msra.mxu0 %v1717
  %1965 = vmatpush.msra.mxu0 %v1715
  %1966 = vmatpush.msra.mxu0 %v1713
  %1967 = vmatpush.msra.mxu0 %v1711
  %1968 = vmatpush.msra.mxu0 %v1709
  %1969 = vmatmul.f32.gmra.mxu0 %v1931
  %v1970 = vpop.f32.mrf.mxu0
  %v1971 = vadd.f32 0.0, %v1970
  %1972 = vdwg.mxu0
  %v1973 = vadd.f32 %v1929, %v1951
  %v1974 = vadd.f32 %v1930, %v1971
  %v1975 = vmul.f32 %v1973, %v63
  %v1976 = vmul.f32 %v1974, %v64
  %v1977 = vtanh.pop %v1975
  %v1978 = vtanh.pop %v1976
  %v1979 = vmul.f32 %v1977, %v63
  %v1980 = vmul.f32 %v1978, %v64
  %v1981 = vadd.f32 %v1979, %v65
  %v1982 = vadd.f32 %v1980, %v66
  %v1983 = vmul.f32 %v1981, %v1920
  %v1984 = vmul.f32 %v1981, %v1982
  %1986 = vrot.lane.b32.xlu0 %v1984, 64
  %v1987 = vpop.permute.xlu0 %1986
  %v1989 = vadd.f32 %v1983, %v1987
  %v1990 = vtanh.pop %v1989
  %v1991 = vmul.f32 %v1982, %v1990
  %1993 = vrot.lane.b32.xlu0 %v1991, 64
  %v1994 = vpop.permute.xlu0 %1993
  %1996 = vst.msk [vmem:[#allocation3 + $0x18] sm:$0xff] %vm314, %v1994
  %1997 = vst.msk [vmem:[#allocation3 + $0x20] sm:$0xff] %vm316, %v1994
  %v1998 = vld [vmem:[#allocation2 + $0x40] sm:$0xff]
  %v1999 = vld [vmem:[#allocation2 + $0x48] sm:$0xff]
  %v2000 = vsel %vm247, %v1994, 0
  %2002 = vmatpush.msra.mxu0 0.0
  %2003 = vmatpush.msra.mxu0 0.0
  %2004 = vmatpush.msra.mxu0 0.0
  %2005 = vmatpush.msra.mxu0 0.0
  %2006 = vmatpush.msra.mxu0 0.0
  %2007 = vmatpush.msra.mxu0 0.0
  %2008 = vmatpush.msra.mxu0 0.0
  %2009 = vmatpush.msra.mxu0 0.0
  %2010 = vmatpush.msra.mxu0 %v1722
  %2011 = vmatpush.msra.mxu0 %v1720
  %2012 = vmatpush.msra.mxu0 %v1718
  %2013 = vmatpush.msra.mxu0 %v1716
  %2014 = vmatpush.msra.mxu0 %v1714
  %2015 = vmatpush.msra.mxu0 %v1712
  %2016 = vmatpush.msra.mxu0 %v1710
  %2017 = vmatpush.msra.mxu0 %v1708
  %2018 = vmatmul.f32.gmra.mxu0 %v2000
  %v2019 = vpop.f32.mrf.mxu0
  %v2020 = vadd.f32 0.0, %v2019
  %2021 = vdwg.mxu0
  %2022 = vmatpush.msra.mxu0 0.0
  %2023 = vmatpush.msra.mxu0 0.0
  %2024 = vmatpush.msra.mxu0 0.0
  %2025 = vmatpush.msra.mxu0 0.0
  %2026 = vmatpush.msra.mxu0 0.0
  %2027 = vmatpush.msra.mxu0 0.0
  %2028 = vmatpush.msra.mxu0 0.0
  %2029 = vmatpush.msra.mxu0 0.0
  %2030 = vmatpush.msra.mxu0 %v1723
  %2031 = vmatpush.msra.mxu0 %v1721
  %2032 = vmatpush.msra.mxu0 %v1719
  %2033 = vmatpush.msra.mxu0 %v1717
  %2034 = vmatpush.msra.mxu0 %v1715
  %2035 = vmatpush.msra.mxu0 %v1713
  %2036 = vmatpush.msra.mxu0 %v1711
  %2037 = vmatpush.msra.mxu0 %v1709
  %2038 = vmatmul.f32.gmra.mxu0 %v2000
  %v2039 = vpop.f32.mrf.mxu0
  %v2040 = vadd.f32 0.0, %v2039
  %2041 = vdwg.mxu0
  %v2042 = vadd.f32 %v1998, %v2020
  %v2043 = vadd.f32 %v1999, %v2040
  %v2044 = vmul.f32 %v2042, %v63
  %v2045 = vmul.f32 %v2043, %v64
  %v2046 = vtanh.pop %v2044
  %v2047 = vtanh.pop %v2045
  %v2048 = vmul.f32 %v2046, %v63
  %v2049 = vmul.f32 %v2047, %v64
  %v2050 = vadd.f32 %v2048, %v65
  %v2051 = vadd.f32 %v2049, %v66
  %v2052 = vmul.f32 %v2050, %v1989
  %v2053 = vmul.f32 %v2050, %v2051
  %2055 = vrot.lane.b32.xlu0 %v2053, 64
  %v2056 = vpop.permute.xlu0 %2055
  %v2058 = vadd.f32 %v2052, %v2056
  %v2059 = vtanh.pop %v2058
  %v2060 = vmul.f32 %v2051, %v2059
  %2062 = vrot.lane.b32.xlu0 %v2060, 64
  %v2063 = vpop.permute.xlu0 %2062
  %2065 = vst.msk [vmem:[#allocation3 + $0x20] sm:$0xff] %vm314, %v2063
  %2066 = vst.msk [vmem:[#allocation3 + $0x18] sm:$0xff] %vm316, %v2063
  %v2067 = vld [vmem:[#allocation2 + $0x50] sm:$0xff]
  %v2068 = vld [vmem:[#allocation2 + $0x58] sm:$0xff]
  %v2069 = vsel %vm247, %v2063, 0
  %2071 = vmatpush.msra.mxu0 0.0
  %2072 = vmatpush.msra.mxu0 0.0
  %2073 = vmatpush.msra.mxu0 0.0
  %2074 = vmatpush.msra.mxu0 0.0
  %2075 = vmatpush.msra.mxu0 0.0
  %2076 = vmatpush.msra.mxu0 0.0
  %2077 = vmatpush.msra.mxu0 0.0
  %2078 = vmatpush.msra.mxu0 0.0
  %2079 = vmatpush.msra.mxu0 %v1722
  %2080 = vmatpush.msra.mxu0 %v1720
  %2081 = vmatpush.msra.mxu0 %v1718
  %2082 = vmatpush.msra.mxu0 %v1716
  %2083 = vmatpush.msra.mxu0 %v1714
  %2084 = vmatpush.msra.mxu0 %v1712
  %2085 = vmatpush.msra.mxu0 %v1710
  %2086 = vmatpush.msra.mxu0 %v1708
  %2087 = vmatmul.f32.gmra.mxu0 %v2069
  %v2088 = vpop.f32.mrf.mxu0
  %v2089 = vadd.f32 0.0, %v2088
  %2090 = vdwg.mxu0
  %2091 = vmatpush.msra.mxu0 0.0
  %2092 = vmatpush.msra.mxu0 0.0
  %2093 = vmatpush.msra.mxu0 0.0
  %2094 = vmatpush.msra.mxu0 0.0
  %2095 = vmatpush.msra.mxu0 0.0
  %2096 = vmatpush.msra.mxu0 0.0
  %2097 = vmatpush.msra.mxu0 0.0
  %2098 = vmatpush.msra.mxu0 0.0
  %2099 = vmatpush.msra.mxu0 %v1723
  %2100 = vmatpush.msra.mxu0 %v1721
  %2101 = vmatpush.msra.mxu0 %v1719
  %2102 = vmatpush.msra.mxu0 %v1717
  %2103 = vmatpush.msra.mxu0 %v1715
  %2104 = vmatpush.msra.mxu0 %v1713
  %2105 = vmatpush.msra.mxu0 %v1711
  %2106 = vmatpush.msra.mxu0 %v1709
  %2107 = vmatmul.f32.gmra.mxu0 %v2069
  %v2108 = vpop.f32.mrf.mxu0
  %v2109 = vadd.f32 0.0, %v2108
  %2110 = vdwg.mxu0
  %v2111 = vadd.f32 %v2067, %v2089
  %v2112 = vadd.f32 %v2068, %v2109
  %v2113 = vmul.f32 %v2111, %v63
  %v2114 = vmul.f32 %v2112, %v64
  %v2115 = vtanh.pop %v2113
  %v2116 = vtanh.pop %v2114
  %v2117 = vmul.f32 %v2115, %v63
  %v2118 = vmul.f32 %v2116, %v64
  %v2119 = vadd.f32 %v2117, %v65
  %v2120 = vadd.f32 %v2118, %v66
  %v2121 = vmul.f32 %v2119, %v2058
  %v2122 = vmul.f32 %v2119, %v2120
  %2124 = vrot.lane.b32.xlu0 %v2122, 64
  %v2125 = vpop.permute.xlu0 %2124
  %v2127 = vadd.f32 %v2121, %v2125
  %v2128 = vtanh.pop %v2127
  %v2129 = vmul.f32 %v2120, %v2128
  %2131 = vrot.lane.b32.xlu0 %v2129, 64
  %v2132 = vpop.permute.xlu0 %2131
  %2134 = vst.msk [vmem:[#allocation3 + $0x28] sm:$0xff] %vm314, %v2132
  %2135 = vst.msk [vmem:[#allocation3 + $0x10] sm:$0xff] %vm316, %v2132
  %v2136 = vld [vmem:[#allocation2 + $0x60] sm:$0xff]
  %v2137 = vld [vmem:[#allocation2 + $0x68] sm:$0xff]
  %v2138 = vsel %vm247, %v2132, 0
  %2140 = vmatpush.msra.mxu0 0.0
  %2141 = vmatpush.msra.mxu0 0.0
  %2142 = vmatpush.msra.mxu0 0.0
  %2143 = vmatpush.msra.mxu0 0.0
  %2144 = vmatpush.msra.mxu0 0.0
  %2145 = vmatpush.msra.mxu0 0.0
  %2146 = vmatpush.msra.mxu0 0.0
  %2147 = vmatpush.msra.mxu0 0.0
  %2148 = vmatpush.msra.mxu0 %v1722
  %2149 = vmatpush.msra.mxu0 %v1720
  %2150 = vmatpush.msra.mxu0 %v1718
  %2151 = vmatpush.msra.mxu0 %v1716
  %2152 = vmatpush.msra.mxu0 %v1714
  %2153 = vmatpush.msra.mxu0 %v1712
  %2154 = vmatpush.msra.mxu0 %v1710
  %2155 = vmatpush.msra.mxu0 %v1708
  %2156 = vmatmul.f32.gmra.mxu0 %v2138
  %v2157 = vpop.f32.mrf.mxu0
  %v2158 = vadd.f32 0.0, %v2157
  %2159 = vdwg.mxu0
  %2160 = vmatpush.msra.mxu0 0.0
  %2161 = vmatpush.msra.mxu0 0.0
  %2162 = vmatpush.msra.mxu0 0.0
  %2163 = vmatpush.msra.mxu0 0.0
  %2164 = vmatpush.msra.mxu0 0.0
  %2165 = vmatpush.msra.mxu0 0.0
  %2166 = vmatpush.msra.mxu0 0.0
  %2167 = vmatpush.msra.mxu0 0.0
  %2168 = vmatpush.msra.mxu0 %v1723
  %2169 = vmatpush.msra.mxu0 %v1721
  %2170 = vmatpush.msra.mxu0 %v1719
  %2171 = vmatpush.msra.mxu0 %v1717
  %2172 = vmatpush.msra.mxu0 %v1715
  %2173 = vmatpush.msra.mxu0 %v1713
  %2174 = vmatpush.msra.mxu0 %v1711
  %2175 = vmatpush.msra.mxu0 %v1709
  %2176 = vmatmul.f32.gmra.mxu0 %v2138
  %v2177 = vpop.f32.mrf.mxu0
  %v2178 = vadd.f32 0.0, %v2177
  %2179 = vdwg.mxu0
  %v2180 = vadd.f32 %v2136, %v2158
  %v2181 = vadd.f32 %v2137, %v2178
  %v2182 = vmul.f32 %v2180, %v63
  %v2183 = vmul.f32 %v2181, %v64
  %v2184 = vtanh.pop %v2182
  %v2185 = vtanh.pop %v2183
  %v2186 = vmul.f32 %v2184, %v63
  %v2187 = vmul.f32 %v2185, %v64
  %v2188 = vadd.f32 %v2186, %v65
  %v2189 = vadd.f32 %v2187, %v66
  %v2190 = vmul.f32 %v2188, %v2127
  %v2191 = vmul.f32 %v2188, %v2189
  %2193 = vrot.lane.b32.xlu0 %v2191, 64
  %v2194 = vpop.permute.xlu0 %2193
  %v2196 = vadd.f32 %v2190, %v2194
  %v2197 = vtanh.pop %v2196
  %v2198 = vmul.f32 %v2189, %v2197
  %2200 = vrot.lane.b32.xlu0 %v2198, 64
  %v2201 = vpop.permute.xlu0 %2200
  %2203 = vst.msk [vmem:[#allocation3 + $0x30] sm:$0xff] %vm314, %v2201
  %2204 = vst.msk [vmem:[#allocation3 + $0x8] sm:$0xff] %vm316, %v2201
  %v2205 = vld [vmem:[#allocation2 + $0x70] sm:$0xff]
  %v2206 = vld [vmem:[#allocation2 + $0x78] sm:$0xff]
  %v2207 = vsel %vm247, %v2201, 0
  %2209 = vmatpush.msra.mxu0 0.0
  %2210 = vmatpush.msra.mxu0 0.0
  %2211 = vmatpush.msra.mxu0 0.0
  %2212 = vmatpush.msra.mxu0 0.0
  %2213 = vmatpush.msra.mxu0 0.0
  %2214 = vmatpush.msra.mxu0 0.0
  %2215 = vmatpush.msra.mxu0 0.0
  %2216 = vmatpush.msra.mxu0 0.0
  %2217 = vmatpush.msra.mxu0 %v1722
  %2218 = vmatpush.msra.mxu0 %v1720
  %2219 = vmatpush.msra.mxu0 %v1718
  %2220 = vmatpush.msra.mxu0 %v1716
  %2221 = vmatpush.msra.mxu0 %v1714
  %2222 = vmatpush.msra.mxu0 %v1712
  %2223 = vmatpush.msra.mxu0 %v1710
  %2224 = vmatpush.msra.mxu0 %v1708
  %2225 = vmatmul.f32.gmra.mxu0 %v2207
  %v2226 = vpop.f32.mrf.mxu0
  %v2227 = vadd.f32 0.0, %v2226
  %2228 = vdwg.mxu0
  %2229 = vmatpush.msra.mxu0 0.0
  %2230 = vmatpush.msra.mxu0 0.0
  %2231 = vmatpush.msra.mxu0 0.0
  %2232 = vmatpush.msra.mxu0 0.0
  %2233 = vmatpush.msra.mxu0 0.0
  %2234 = vmatpush.msra.mxu0 0.0
  %2235 = vmatpush.msra.mxu0 0.0
  %2236 = vmatpush.msra.mxu0 0.0
  %2237 = vmatpush.msra.mxu0 %v1723
  %2238 = vmatpush.msra.mxu0 %v1721
  %2239 = vmatpush.msra.mxu0 %v1719
  %2240 = vmatpush.msra.mxu0 %v1717
  %2241 = vmatpush.msra.mxu0 %v1715
  %2242 = vmatpush.msra.mxu0 %v1713
  %2243 = vmatpush.msra.mxu0 %v1711
  %2244 = vmatpush.msra.mxu0 %v1709
  %2245 = vmatmul.f32.gmra.mxu0 %v2207
  %v2246 = vpop.f32.mrf.mxu0
  %v2247 = vadd.f32 0.0, %v2246
  %2248 = vdwg.mxu0
  %v2249 = vadd.f32 %v2205, %v2227
  %v2250 = vadd.f32 %v2206, %v2247
  %v2251 = vmul.f32 %v2249, %v63
  %v2252 = vmul.f32 %v2250, %v64
  %v2253 = vtanh.pop %v2251
  %v2254 = vtanh.pop %v2252
  %v2255 = vmul.f32 %v2253, %v63
  %v2256 = vmul.f32 %v2254, %v64
  %v2257 = vadd.f32 %v2255, %v65
  %v2258 = vadd.f32 %v2256, %v66
  %v2259 = vmul.f32 %v2257, %v2196
  %v2260 = vmul.f32 %v2257, %v2258
  %2262 = vrot.lane.b32.xlu0 %v2260, 64
  %v2263 = vpop.permute.xlu0 %2262
  %v2265 = vadd.f32 %v2259, %v2263
  %v2266 = vtanh.pop %v2265
  %v2267 = vmul.f32 %v2258, %v2266
  %2269 = vrot.lane.b32.xlu0 %v2267, 64
  %v2270 = vpop.permute.xlu0 %2269
  %2272 = vst.msk [vmem:[#allocation3 + $0x38] sm:$0xff] %vm314, %v2270
  %2273 = vst.msk [vmem:[#allocation3] sm:$0xff] %vm316, %v2270
  %v2274 = vld [vmem:[#allocation3] sm:$0xff]
  %v2275 = vld [vmem:[#allocation3 + $0x8] sm:$0xff]
  %v2276 = vld [vmem:[#allocation3 + $0x10] sm:$0xff]
  %v2277 = vld [vmem:[#allocation3 + $0x18] sm:$0xff]
  %v2278 = vld [vmem:[#allocation3 + $0x20] sm:$0xff]
  %v2279 = vld [vmem:[#allocation3 + $0x28] sm:$0xff]
  %v2280 = vld [vmem:[#allocation3 + $0x30] sm:$0xff]
  %v2281 = vld [vmem:[#allocation3 + $0x38] sm:$0xff]
  %s2282 = scalar_lea.vmem %s2, 256
  %v2283 = vld [vmem:[%s2282] sm:$0xff]
  %v2284 = vld [vmem:[%s2282 + $0x8] sm:$0xff]
  %v2285 = vld [vmem:[%s2282 + $0x10] sm:$0xff]
  %v2286 = vld [vmem:[%s2282 + $0x18] sm:$0xff]
  %v2287 = vld [vmem:[%s2282 + $0x20] sm:$0xff]
  %v2288 = vld [vmem:[%s2282 + $0x28] sm:$0xff]
  %v2289 = vld [vmem:[%s2282 + $0x30] sm:$0xff]
  %v2290 = vld [vmem:[%s2282 + $0x38] sm:$0xff]
  %v2291 = vld [vmem:[%s2282 + $0x40] sm:$0xff]
  %v2292 = vld [vmem:[%s2282 + $0x48] sm:$0xff]
  %v2293 = vld [vmem:[%s2282 + $0x50] sm:$0xff]
  %v2294 = vld [vmem:[%s2282 + $0x58] sm:$0xff]
  %v2295 = vld [vmem:[%s2282 + $0x60] sm:$0xff]
  %v2296 = vld [vmem:[%s2282 + $0x68] sm:$0xff]
  %v2297 = vld [vmem:[%s2282 + $0x70] sm:$0xff]
  %v2298 = vld [vmem:[%s2282 + $0x78] sm:$0xff]
  %s2299 = scalar_lea.vmem %s4, 6
  %v2300 = vld [vmem:[%s2299] sm:$0x3]
  %v2302 = vperm.slane %v2300, 0
  %v2303 = vperm.slane %v2300, 1
  %v2307 = vsel %vm247, %v2274, 0
  %v2310 = vsel %vm247, %v2275, 0
  %v2313 = vsel %vm247, %v2276, 0
  %v2316 = vsel %vm247, %v2277, 0
  %v2319 = vsel %vm247, %v2278, 0
  %v2322 = vsel %vm247, %v2279, 0
  %v2325 = vsel %vm247, %v2280, 0
  %v2328 = vsel %vm247, %v2281, 0
  %2330 = vmatpush.msra.mxu0 0.0
  %2331 = vmatpush.msra.mxu0 0.0
  %2332 = vmatpush.msra.mxu0 0.0
  %2333 = vmatpush.msra.mxu0 0.0
  %2334 = vmatpush.msra.mxu0 0.0
  %2335 = vmatpush.msra.mxu0 0.0
  %2336 = vmatpush.msra.mxu0 0.0
  %2337 = vmatpush.msra.mxu0 0.0
  %2338 = vmatpush.msra.mxu0 %v2297
  %2339 = vmatpush.msra.mxu0 %v2295
  %2340 = vmatpush.msra.mxu0 %v2293
  %2341 = vmatpush.msra.mxu0 %v2291
  %2342 = vmatpush.msra.mxu0 %v2289
  %2343 = vmatpush.msra.mxu0 %v2287
  %2344 = vmatpush.msra.mxu0 %v2285
  %2345 = vmatpush.msra.mxu0 %v2283
  %2346 = vmatmul.f32.gmra.mxu0 %v2307
  %v2347 = vpop.f32.mrf.mxu0
  %v2348 = vadd.f32 %v2302, %v2347
  %2349 = vmatmul.f32.gmra.mxu0 %v2310
  %v2350 = vpop.f32.mrf.mxu0
  %v2351 = vadd.f32 %v2302, %v2350
  %2352 = vmatmul.f32.gmra.mxu0 %v2313
  %v2353 = vpop.f32.mrf.mxu0
  %v2354 = vadd.f32 %v2302, %v2353
  %2355 = vmatmul.f32.gmra.mxu0 %v2316
  %v2356 = vpop.f32.mrf.mxu0
  %v2357 = vadd.f32 %v2302, %v2356
  %2358 = vmatmul.f32.gmra.mxu0 %v2319
  %v2359 = vpop.f32.mrf.mxu0
  %v2360 = vadd.f32 %v2302, %v2359
  %2361 = vmatmul.f32.gmra.mxu0 %v2322
  %v2362 = vpop.f32.mrf.mxu0
  %v2363 = vadd.f32 %v2302, %v2362
  %2364 = vmatmul.f32.gmra.mxu0 %v2325
  %v2365 = vpop.f32.mrf.mxu0
  %v2366 = vadd.f32 %v2302, %v2365
  %2367 = vmatmul.f32.gmra.mxu0 %v2328
  %v2368 = vpop.f32.mrf.mxu0
  %v2369 = vadd.f32 %v2302, %v2368
  %2370 = vdwg.mxu0
  %2371 = vmatpush.msra.mxu0 0.0
  %2372 = vmatpush.msra.mxu0 0.0
  %2373 = vmatpush.msra.mxu0 0.0
  %2374 = vmatpush.msra.mxu0 0.0
  %2375 = vmatpush.msra.mxu0 0.0
  %2376 = vmatpush.msra.mxu0 0.0
  %2377 = vmatpush.msra.mxu0 0.0
  %2378 = vmatpush.msra.mxu0 0.0
  %2379 = vmatpush.msra.mxu0 %v2298
  %2380 = vmatpush.msra.mxu0 %v2296
  %2381 = vmatpush.msra.mxu0 %v2294
  %2382 = vmatpush.msra.mxu0 %v2292
  %2383 = vmatpush.msra.mxu0 %v2290
  %2384 = vmatpush.msra.mxu0 %v2288
  %2385 = vmatpush.msra.mxu0 %v2286
  %2386 = vmatpush.msra.mxu0 %v2284
  %2387 = vmatmul.f32.gmra.mxu0 %v2307
  %v2388 = vpop.f32.mrf.mxu0
  %v2389 = vadd.f32 %v2303, %v2388
  %2390 = vmatmul.f32.gmra.mxu0 %v2310
  %v2391 = vpop.f32.mrf.mxu0
  %v2392 = vadd.f32 %v2303, %v2391
  %2393 = vmatmul.f32.gmra.mxu0 %v2313
  %v2394 = vpop.f32.mrf.mxu0
  %v2395 = vadd.f32 %v2303, %v2394
  %2396 = vmatmul.f32.gmra.mxu0 %v2316
  %v2397 = vpop.f32.mrf.mxu0
  %v2398 = vadd.f32 %v2303, %v2397
  %2399 = vmatmul.f32.gmra.mxu0 %v2319
  %v2400 = vpop.f32.mrf.mxu0
  %v2401 = vadd.f32 %v2303, %v2400
  %2402 = vmatmul.f32.gmra.mxu0 %v2322
  %v2403 = vpop.f32.mrf.mxu0
  %v2404 = vadd.f32 %v2303, %v2403
  %2405 = vmatmul.f32.gmra.mxu0 %v2325
  %v2406 = vpop.f32.mrf.mxu0
  %v2407 = vadd.f32 %v2303, %v2406
  %2408 = vmatmul.f32.gmra.mxu0 %v2328
  %v2409 = vpop.f32.mrf.mxu0
  %v2410 = vadd.f32 %v2303, %v2409
  %2411 = vdwg.mxu0
  %v2412 = vsel %vm195, %v2348, %v2369
  %v2413 = vsel %vm196, %v2389, %v2410
  %2414 = vst [vmem:[#allocation2] sm:$0xff] %v2412
  %2415 = vst [vmem:[#allocation2 + $0x8] sm:$0xff] %v2413
  %v2416 = vsel %vm195, %v2351, %v2366
  %v2417 = vsel %vm196, %v2392, %v2407
  %2418 = vst [vmem:[#allocation2 + $0x10] sm:$0xff] %v2416
  %2419 = vst [vmem:[#allocation2 + $0x18] sm:$0xff] %v2417
  %v2420 = vsel %vm195, %v2354, %v2363
  %v2421 = vsel %vm196, %v2395, %v2404
  %2422 = vst [vmem:[#allocation2 + $0x20] sm:$0xff] %v2420
  %2423 = vst [vmem:[#allocation2 + $0x28] sm:$0xff] %v2421
  %v2424 = vsel %vm195, %v2357, %v2360
  %v2425 = vsel %vm196, %v2398, %v2401
  %2426 = vst [vmem:[#allocation2 + $0x30] sm:$0xff] %v2424
  %2427 = vst [vmem:[#allocation2 + $0x38] sm:$0xff] %v2425
  %v2428 = vsel %vm195, %v2360, %v2357
  %v2429 = vsel %vm196, %v2401, %v2398
  %2430 = vst [vmem:[#allocation2 + $0x40] sm:$0xff] %v2428
  %2431 = vst [vmem:[#allocation2 + $0x48] sm:$0xff] %v2429
  %v2432 = vsel %vm195, %v2363, %v2354
  %v2433 = vsel %vm196, %v2404, %v2395
  %2434 = vst [vmem:[#allocation2 + $0x50] sm:$0xff] %v2432
  %2435 = vst [vmem:[#allocation2 + $0x58] sm:$0xff] %v2433
  %v2436 = vsel %vm195, %v2366, %v2351
  %v2437 = vsel %vm196, %v2407, %v2392
  %2438 = vst [vmem:[#allocation2 + $0x60] sm:$0xff] %v2436
  %2439 = vst [vmem:[#allocation2 + $0x68] sm:$0xff] %v2437
  %v2440 = vsel %vm195, %v2369, %v2348
  %v2441 = vsel %vm196, %v2410, %v2389
  %2442 = vst [vmem:[#allocation2 + $0x70] sm:$0xff] %v2440
  %2443 = vst [vmem:[#allocation2 + $0x78] sm:$0xff] %v2441
  %s2444 = scalar_lea.vmem %s3, 384
  %v2445 = vld [vmem:[%s2444] sm:$0xff]
  %v2446 = vld [vmem:[%s2444 + $0x8] sm:$0xff]
  %v2447 = vld [vmem:[%s2444 + $0x10] sm:$0xff]
  %v2448 = vld [vmem:[%s2444 + $0x18] sm:$0xff]
  %v2449 = vld [vmem:[%s2444 + $0x20] sm:$0xff]
  %v2450 = vld [vmem:[%s2444 + $0x28] sm:$0xff]
  %v2451 = vld [vmem:[%s2444 + $0x30] sm:$0xff]
  %v2452 = vld [vmem:[%s2444 + $0x38] sm:$0xff]
  %v2453 = vld [vmem:[%s2444 + $0x40] sm:$0xff]
  %v2454 = vld [vmem:[%s2444 + $0x48] sm:$0xff]
  %v2455 = vld [vmem:[%s2444 + $0x50] sm:$0xff]
  %v2456 = vld [vmem:[%s2444 + $0x58] sm:$0xff]
  %v2457 = vld [vmem:[%s2444 + $0x60] sm:$0xff]
  %v2458 = vld [vmem:[%s2444 + $0x68] sm:$0xff]
  %v2459 = vld [vmem:[%s2444 + $0x70] sm:$0xff]
  %v2460 = vld [vmem:[%s2444 + $0x78] sm:$0xff]
  %v2461 = vld [vmem:[#allocation2] sm:$0xff]
  %v2462 = vld [vmem:[#allocation2 + $0x8] sm:$0xff]
  %2463 = vmatpush.msra.mxu0 0.0
  %2464 = vmatpush.msra.mxu0 0.0
  %2465 = vmatpush.msra.mxu0 0.0
  %2466 = vmatpush.msra.mxu0 0.0
  %2467 = vmatpush.msra.mxu0 0.0
  %2468 = vmatpush.msra.mxu0 0.0
  %2469 = vmatpush.msra.mxu0 0.0
  %2470 = vmatpush.msra.mxu0 0.0
  %2471 = vmatpush.msra.mxu0 %v2459
  %2472 = vmatpush.msra.mxu0 %v2457
  %2473 = vmatpush.msra.mxu0 %v2455
  %2474 = vmatpush.msra.mxu0 %v2453
  %2475 = vmatpush.msra.mxu0 %v2451
  %2476 = vmatpush.msra.mxu0 %v2449
  %2477 = vmatpush.msra.mxu0 %v2447
  %2478 = vmatpush.msra.mxu0 %v2445
  %2479 = vmatmul.f32.gmra.mxu0 %v249
  %v2480 = vpop.f32.mrf.mxu0
  %v2481 = vadd.f32 0.0, %v2480
  %2482 = vdwg.mxu0
  %2483 = vmatpush.msra.mxu0 0.0
  %2484 = vmatpush.msra.mxu0 0.0
  %2485 = vmatpush.msra.mxu0 0.0
  %2486 = vmatpush.msra.mxu0 0.0
  %2487 = vmatpush.msra.mxu0 0.0
  %2488 = vmatpush.msra.mxu0 0.0
  %2489 = vmatpush.msra.mxu0 0.0
  %2490 = vmatpush.msra.mxu0 0.0
  %2491 = vmatpush.msra.mxu0 %v2460
  %2492 = vmatpush.msra.mxu0 %v2458
  %2493 = vmatpush.msra.mxu0 %v2456
  %2494 = vmatpush.msra.mxu0 %v2454
  %2495 = vmatpush.msra.mxu0 %v2452
  %2496 = vmatpush.msra.mxu0 %v2450
  %2497 = vmatpush.msra.mxu0 %v2448
  %2498 = vmatpush.msra.mxu0 %v2446
  %2499 = vmatmul.f32.gmra.mxu0 %v249
  %v2500 = vpop.f32.mrf.mxu0
  %v2501 = vadd.f32 0.0, %v2500
  %2502 = vdwg.mxu0
  %v2503 = vadd.f32 %v2461, %v2481
  %v2504 = vadd.f32 %v2462, %v2501
  %v2505 = vmul.f32 %v2503, %v63
  %v2506 = vmul.f32 %v2504, %v64
  %v2507 = vtanh.pop %v2505
  %v2508 = vtanh.pop %v2506
  %v2509 = vmul.f32 %v2507, %v63
  %v2510 = vmul.f32 %v2508, %v64
  %v2511 = vadd.f32 %v2509, %v65
  %v2512 = vadd.f32 %v2510, %v66
  %v2513 = vmul.f32 %v2511, 0.0
  %v2514 = vmul.f32 %v2511, %v2512
  %2516 = vrot.lane.b32.xlu0 %v2514, 64
  %v2517 = vpop.permute.xlu0 %2516
  %v2519 = vadd.f32 %v2513, %v2517
  %v2520 = vtanh.pop %v2519
  %v2521 = vmul.f32 %v2512, %v2520
  %2523 = vrot.lane.b32.xlu0 %v2521, 64
  %v2524 = vpop.permute.xlu0 %2523
  %2526 = vst.msk [vmem:[#allocation3] sm:$0xff] %vm314, %v2524
  %2527 = vst.msk [vmem:[#allocation3 + $0x38] sm:$0xff] %vm316, %v2524
  %v2528 = vld [vmem:[#allocation2 + $0x10] sm:$0xff]
  %v2529 = vld [vmem:[#allocation2 + $0x18] sm:$0xff]
  %v2530 = vsel %vm247, %v2524, 0
  %2532 = vmatpush.msra.mxu0 0.0
  %2533 = vmatpush.msra.mxu0 0.0
  %2534 = vmatpush.msra.mxu0 0.0
  %2535 = vmatpush.msra.mxu0 0.0
  %2536 = vmatpush.msra.mxu0 0.0
  %2537 = vmatpush.msra.mxu0 0.0
  %2538 = vmatpush.msra.mxu0 0.0
  %2539 = vmatpush.msra.mxu0 0.0
  %2540 = vmatpush.msra.mxu0 %v2459
  %2541 = vmatpush.msra.mxu0 %v2457
  %2542 = vmatpush.msra.mxu0 %v2455
  %2543 = vmatpush.msra.mxu0 %v2453
  %2544 = vmatpush.msra.mxu0 %v2451
  %2545 = vmatpush.msra.mxu0 %v2449
  %2546 = vmatpush.msra.mxu0 %v2447
  %2547 = vmatpush.msra.mxu0 %v2445
  %2548 = vmatmul.f32.gmra.mxu0 %v2530
  %v2549 = vpop.f32.mrf.mxu0
  %v2550 = vadd.f32 0.0, %v2549
  %2551 = vdwg.mxu0
  %2552 = vmatpush.msra.mxu0 0.0
  %2553 = vmatpush.msra.mxu0 0.0
  %2554 = vmatpush.msra.mxu0 0.0
  %2555 = vmatpush.msra.mxu0 0.0
  %2556 = vmatpush.msra.mxu0 0.0
  %2557 = vmatpush.msra.mxu0 0.0
  %2558 = vmatpush.msra.mxu0 0.0
  %2559 = vmatpush.msra.mxu0 0.0
  %2560 = vmatpush.msra.mxu0 %v2460
  %2561 = vmatpush.msra.mxu0 %v2458
  %2562 = vmatpush.msra.mxu0 %v2456
  %2563 = vmatpush.msra.mxu0 %v2454
  %2564 = vmatpush.msra.mxu0 %v2452
  %2565 = vmatpush.msra.mxu0 %v2450
  %2566 = vmatpush.msra.mxu0 %v2448
  %2567 = vmatpush.msra.mxu0 %v2446
  %2568 = vmatmul.f32.gmra.mxu0 %v2530
  %v2569 = vpop.f32.mrf.mxu0
  %v2570 = vadd.f32 0.0, %v2569
  %2571 = vdwg.mxu0
  %v2572 = vadd.f32 %v2528, %v2550
  %v2573 = vadd.f32 %v2529, %v2570
  %v2574 = vmul.f32 %v2572, %v63
  %v2575 = vmul.f32 %v2573, %v64
  %v2576 = vtanh.pop %v2574
  %v2577 = vtanh.pop %v2575
  %v2578 = vmul.f32 %v2576, %v63
  %v2579 = vmul.f32 %v2577, %v64
  %v2580 = vadd.f32 %v2578, %v65
  %v2581 = vadd.f32 %v2579, %v66
  %v2582 = vmul.f32 %v2580, %v2519
  %v2583 = vmul.f32 %v2580, %v2581
  %2585 = vrot.lane.b32.xlu0 %v2583, 64
  %v2586 = vpop.permute.xlu0 %2585
  %v2588 = vadd.f32 %v2582, %v2586
  %v2589 = vtanh.pop %v2588
  %v2590 = vmul.f32 %v2581, %v2589
  %2592 = vrot.lane.b32.xlu0 %v2590, 64
  %v2593 = vpop.permute.xlu0 %2592
  %2595 = vst.msk [vmem:[#allocation3 + $0x8] sm:$0xff] %vm314, %v2593
  %2596 = vst.msk [vmem:[#allocation3 + $0x30] sm:$0xff] %vm316, %v2593
  %v2597 = vld [vmem:[#allocation2 + $0x20] sm:$0xff]
  %v2598 = vld [vmem:[#allocation2 + $0x28] sm:$0xff]
  %v2599 = vsel %vm247, %v2593, 0
  %2601 = vmatpush.msra.mxu0 0.0
  %2602 = vmatpush.msra.mxu0 0.0
  %2603 = vmatpush.msra.mxu0 0.0
  %2604 = vmatpush.msra.mxu0 0.0
  %2605 = vmatpush.msra.mxu0 0.0
  %2606 = vmatpush.msra.mxu0 0.0
  %2607 = vmatpush.msra.mxu0 0.0
  %2608 = vmatpush.msra.mxu0 0.0
  %2609 = vmatpush.msra.mxu0 %v2459
  %2610 = vmatpush.msra.mxu0 %v2457
  %2611 = vmatpush.msra.mxu0 %v2455
  %2612 = vmatpush.msra.mxu0 %v2453
  %2613 = vmatpush.msra.mxu0 %v2451
  %2614 = vmatpush.msra.mxu0 %v2449
  %2615 = vmatpush.msra.mxu0 %v2447
  %2616 = vmatpush.msra.mxu0 %v2445
  %2617 = vmatmul.f32.gmra.mxu0 %v2599
  %v2618 = vpop.f32.mrf.mxu0
  %v2619 = vadd.f32 0.0, %v2618
  %2620 = vdwg.mxu0
  %2621 = vmatpush.msra.mxu0 0.0
  %2622 = vmatpush.msra.mxu0 0.0
  %2623 = vmatpush.msra.mxu0 0.0
  %2624 = vmatpush.msra.mxu0 0.0
  %2625 = vmatpush.msra.mxu0 0.0
  %2626 = vmatpush.msra.mxu0 0.0
  %2627 = vmatpush.msra.mxu0 0.0
  %2628 = vmatpush.msra.mxu0 0.0
  %2629 = vmatpush.msra.mxu0 %v2460
  %2630 = vmatpush.msra.mxu0 %v2458
  %2631 = vmatpush.msra.mxu0 %v2456
  %2632 = vmatpush.msra.mxu0 %v2454
  %2633 = vmatpush.msra.mxu0 %v2452
  %2634 = vmatpush.msra.mxu0 %v2450
  %2635 = vmatpush.msra.mxu0 %v2448
  %2636 = vmatpush.msra.mxu0 %v2446
  %2637 = vmatmul.f32.gmra.mxu0 %v2599
  %v2638 = vpop.f32.mrf.mxu0
  %v2639 = vadd.f32 0.0, %v2638
  %2640 = vdwg.mxu0
  %v2641 = vadd.f32 %v2597, %v2619
  %v2642 = vadd.f32 %v2598, %v2639
  %v2643 = vmul.f32 %v2641, %v63
  %v2644 = vmul.f32 %v2642, %v64
  %v2645 = vtanh.pop %v2643
  %v2646 = vtanh.pop %v2644
  %v2647 = vmul.f32 %v2645, %v63
  %v2648 = vmul.f32 %v2646, %v64
  %v2649 = vadd.f32 %v2647, %v65
  %v2650 = vadd.f32 %v2648, %v66
  %v2651 = vmul.f32 %v2649, %v2588
  %v2652 = vmul.f32 %v2649, %v2650
  %2654 = vrot.lane.b32.xlu0 %v2652, 64
  %v2655 = vpop.permute.xlu0 %2654
  %v2657 = vadd.f32 %v2651, %v2655
  %v2658 = vtanh.pop %v2657
  %v2659 = vmul.f32 %v2650, %v2658
  %2661 = vrot.lane.b32.xlu0 %v2659, 64
  %v2662 = vpop.permute.xlu0 %2661
  %2664 = vst.msk [vmem:[#allocation3 + $0x10] sm:$0xff] %vm314, %v2662
  %2665 = vst.msk [vmem:[#allocation3 + $0x28] sm:$0xff] %vm316, %v2662
  %v2666 = vld [vmem:[#allocation2 + $0x30] sm:$0xff]
  %v2667 = vld [vmem:[#allocation2 + $0x38] sm:$0xff]
  %v2668 = vsel %vm247, %v2662, 0
  %2670 = vmatpush.msra.mxu0 0.0
  %2671 = vmatpush.msra.mxu0 0.0
  %2672 = vmatpush.msra.mxu0 0.0
  %2673 = vmatpush.msra.mxu0 0.0
  %2674 = vmatpush.msra.mxu0 0.0
  %2675 = vmatpush.msra.mxu0 0.0
  %2676 = vmatpush.msra.mxu0 0.0
  %2677 = vmatpush.msra.mxu0 0.0
  %2678 = vmatpush.msra.mxu0 %v2459
  %2679 = vmatpush.msra.mxu0 %v2457
  %2680 = vmatpush.msra.mxu0 %v2455
  %2681 = vmatpush.msra.mxu0 %v2453
  %2682 = vmatpush.msra.mxu0 %v2451
  %2683 = vmatpush.msra.mxu0 %v2449
  %2684 = vmatpush.msra.mxu0 %v2447
  %2685 = vmatpush.msra.mxu0 %v2445
  %2686 = vmatmul.f32.gmra.mxu0 %v2668
  %v2687 = vpop.f32.mrf.mxu0
  %v2688 = vadd.f32 0.0, %v2687
  %2689 = vdwg.mxu0
  %2690 = vmatpush.msra.mxu0 0.0
  %2691 = vmatpush.msra.mxu0 0.0
  %2692 = vmatpush.msra.mxu0 0.0
  %2693 = vmatpush.msra.mxu0 0.0
  %2694 = vmatpush.msra.mxu0 0.0
  %2695 = vmatpush.msra.mxu0 0.0
  %2696 = vmatpush.msra.mxu0 0.0
  %2697 = vmatpush.msra.mxu0 0.0
  %2698 = vmatpush.msra.mxu0 %v2460
  %2699 = vmatpush.msra.mxu0 %v2458
  %2700 = vmatpush.msra.mxu0 %v2456
  %2701 = vmatpush.msra.mxu0 %v2454
  %2702 = vmatpush.msra.mxu0 %v2452
  %2703 = vmatpush.msra.mxu0 %v2450
  %2704 = vmatpush.msra.mxu0 %v2448
  %2705 = vmatpush.msra.mxu0 %v2446
  %2706 = vmatmul.f32.gmra.mxu0 %v2668
  %v2707 = vpop.f32.mrf.mxu0
  %v2708 = vadd.f32 0.0, %v2707
  %2709 = vdwg.mxu0
  %v2710 = vadd.f32 %v2666, %v2688
  %v2711 = vadd.f32 %v2667, %v2708
  %v2712 = vmul.f32 %v2710, %v63
  %v2713 = vmul.f32 %v2711, %v64
  %v2714 = vtanh.pop %v2712
  %v2715 = vtanh.pop %v2713
  %v2716 = vmul.f32 %v2714, %v63
  %v2717 = vmul.f32 %v2715, %v64
  %v2718 = vadd.f32 %v2716, %v65
  %v2719 = vadd.f32 %v2717, %v66
  %v2720 = vmul.f32 %v2718, %v2657
  %v2721 = vmul.f32 %v2718, %v2719
  %2723 = vrot.lane.b32.xlu0 %v2721, 64
  %v2724 = vpop.permute.xlu0 %2723
  %v2726 = vadd.f32 %v2720, %v2724
  %v2727 = vtanh.pop %v2726
  %v2728 = vmul.f32 %v2719, %v2727
  %2730 = vrot.lane.b32.xlu0 %v2728, 64
  %v2731 = vpop.permute.xlu0 %2730
  %2733 = vst.msk [vmem:[#allocation3 + $0x18] sm:$0xff] %vm314, %v2731
  %2734 = vst.msk [vmem:[#allocation3 + $0x20] sm:$0xff] %vm316, %v2731
  %v2735 = vld [vmem:[#allocation2 + $0x40] sm:$0xff]
  %v2736 = vld [vmem:[#allocation2 + $0x48] sm:$0xff]
  %v2737 = vsel %vm247, %v2731, 0
  %2739 = vmatpush.msra.mxu0 0.0
  %2740 = vmatpush.msra.mxu0 0.0
  %2741 = vmatpush.msra.mxu0 0.0
  %2742 = vmatpush.msra.mxu0 0.0
  %2743 = vmatpush.msra.mxu0 0.0
  %2744 = vmatpush.msra.mxu0 0.0
  %2745 = vmatpush.msra.mxu0 0.0
  %2746 = vmatpush.msra.mxu0 0.0
  %2747 = vmatpush.msra.mxu0 %v2459
  %2748 = vmatpush.msra.mxu0 %v2457
  %2749 = vmatpush.msra.mxu0 %v2455
  %2750 = vmatpush.msra.mxu0 %v2453
  %2751 = vmatpush.msra.mxu0 %v2451
  %2752 = vmatpush.msra.mxu0 %v2449
  %2753 = vmatpush.msra.mxu0 %v2447
  %2754 = vmatpush.msra.mxu0 %v2445
  %2755 = vmatmul.f32.gmra.mxu0 %v2737
  %v2756 = vpop.f32.mrf.mxu0
  %v2757 = vadd.f32 0.0, %v2756
  %2758 = vdwg.mxu0
  %2759 = vmatpush.msra.mxu0 0.0
  %2760 = vmatpush.msra.mxu0 0.0
  %2761 = vmatpush.msra.mxu0 0.0
  %2762 = vmatpush.msra.mxu0 0.0
  %2763 = vmatpush.msra.mxu0 0.0
  %2764 = vmatpush.msra.mxu0 0.0
  %2765 = vmatpush.msra.mxu0 0.0
  %2766 = vmatpush.msra.mxu0 0.0
  %2767 = vmatpush.msra.mxu0 %v2460
  %2768 = vmatpush.msra.mxu0 %v2458
  %2769 = vmatpush.msra.mxu0 %v2456
  %2770 = vmatpush.msra.mxu0 %v2454
  %2771 = vmatpush.msra.mxu0 %v2452
  %2772 = vmatpush.msra.mxu0 %v2450
  %2773 = vmatpush.msra.mxu0 %v2448
  %2774 = vmatpush.msra.mxu0 %v2446
  %2775 = vmatmul.f32.gmra.mxu0 %v2737
  %v2776 = vpop.f32.mrf.mxu0
  %v2777 = vadd.f32 0.0, %v2776
  %2778 = vdwg.mxu0
  %v2779 = vadd.f32 %v2735, %v2757
  %v2780 = vadd.f32 %v2736, %v2777
  %v2781 = vmul.f32 %v2779, %v63
  %v2782 = vmul.f32 %v2780, %v64
  %v2783 = vtanh.pop %v2781
  %v2784 = vtanh.pop %v2782
  %v2785 = vmul.f32 %v2783, %v63
  %v2786 = vmul.f32 %v2784, %v64
  %v2787 = vadd.f32 %v2785, %v65
  %v2788 = vadd.f32 %v2786, %v66
  %v2789 = vmul.f32 %v2787, %v2726
  %v2790 = vmul.f32 %v2787, %v2788
  %2792 = vrot.lane.b32.xlu0 %v2790, 64
  %v2793 = vpop.permute.xlu0 %2792
  %v2795 = vadd.f32 %v2789, %v2793
  %v2796 = vtanh.pop %v2795
  %v2797 = vmul.f32 %v2788, %v2796
  %2799 = vrot.lane.b32.xlu0 %v2797, 64
  %v2800 = vpop.permute.xlu0 %2799
  %2802 = vst.msk [vmem:[#allocation3 + $0x20] sm:$0xff] %vm314, %v2800
  %2803 = vst.msk [vmem:[#allocation3 + $0x18] sm:$0xff] %vm316, %v2800
  %v2804 = vld [vmem:[#allocation2 + $0x50] sm:$0xff]
  %v2805 = vld [vmem:[#allocation2 + $0x58] sm:$0xff]
  %v2806 = vsel %vm247, %v2800, 0
  %2808 = vmatpush.msra.mxu0 0.0
  %2809 = vmatpush.msra.mxu0 0.0
  %2810 = vmatpush.msra.mxu0 0.0
  %2811 = vmatpush.msra.mxu0 0.0
  %2812 = vmatpush.msra.mxu0 0.0
  %2813 = vmatpush.msra.mxu0 0.0
  %2814 = vmatpush.msra.mxu0 0.0
  %2815 = vmatpush.msra.mxu0 0.0
  %2816 = vmatpush.msra.mxu0 %v2459
  %2817 = vmatpush.msra.mxu0 %v2457
  %2818 = vmatpush.msra.mxu0 %v2455
  %2819 = vmatpush.msra.mxu0 %v2453
  %2820 = vmatpush.msra.mxu0 %v2451
  %2821 = vmatpush.msra.mxu0 %v2449
  %2822 = vmatpush.msra.mxu0 %v2447
  %2823 = vmatpush.msra.mxu0 %v2445
  %2824 = vmatmul.f32.gmra.mxu0 %v2806
  %v2825 = vpop.f32.mrf.mxu0
  %v2826 = vadd.f32 0.0, %v2825
  %2827 = vdwg.mxu0
  %2828 = vmatpush.msra.mxu0 0.0
  %2829 = vmatpush.msra.mxu0 0.0
  %2830 = vmatpush.msra.mxu0 0.0
  %2831 = vmatpush.msra.mxu0 0.0
  %2832 = vmatpush.msra.mxu0 0.0
  %2833 = vmatpush.msra.mxu0 0.0
  %2834 = vmatpush.msra.mxu0 0.0
  %2835 = vmatpush.msra.mxu0 0.0
  %2836 = vmatpush.msra.mxu0 %v2460
  %2837 = vmatpush.msra.mxu0 %v2458
  %2838 = vmatpush.msra.mxu0 %v2456
  %2839 = vmatpush.msra.mxu0 %v2454
  %2840 = vmatpush.msra.mxu0 %v2452
  %2841 = vmatpush.msra.mxu0 %v2450
  %2842 = vmatpush.msra.mxu0 %v2448
  %2843 = vmatpush.msra.mxu0 %v2446
  %2844 = vmatmul.f32.gmra.mxu0 %v2806
  %v2845 = vpop.f32.mrf.mxu0
  %v2846 = vadd.f32 0.0, %v2845
  %2847 = vdwg.mxu0
  %v2848 = vadd.f32 %v2804, %v2826
  %v2849 = vadd.f32 %v2805, %v2846
  %v2850 = vmul.f32 %v2848, %v63
  %v2851 = vmul.f32 %v2849, %v64
  %v2852 = vtanh.pop %v2850
  %v2853 = vtanh.pop %v2851
  %v2854 = vmul.f32 %v2852, %v63
  %v2855 = vmul.f32 %v2853, %v64
  %v2856 = vadd.f32 %v2854, %v65
  %v2857 = vadd.f32 %v2855, %v66
  %v2858 = vmul.f32 %v2856, %v2795
  %v2859 = vmul.f32 %v2856, %v2857
  %2861 = vrot.lane.b32.xlu0 %v2859, 64
  %v2862 = vpop.permute.xlu0 %2861
  %v2864 = vadd.f32 %v2858, %v2862
  %v2865 = vtanh.pop %v2864
  %v2866 = vmul.f32 %v2857, %v2865
  %2868 = vrot.lane.b32.xlu0 %v2866, 64
  %v2869 = vpop.permute.xlu0 %2868
  %2871 = vst.msk [vmem:[#allocation3 + $0x28] sm:$0xff] %vm314, %v2869
  %2872 = vst.msk [vmem:[#allocation3 + $0x10] sm:$0xff] %vm316, %v2869
  %v2873 = vld [vmem:[#allocation2 + $0x60] sm:$0xff]
  %v2874 = vld [vmem:[#allocation2 + $0x68] sm:$0xff]
  %v2875 = vsel %vm247, %v2869, 0
  %2877 = vmatpush.msra.mxu0 0.0
  %2878 = vmatpush.msra.mxu0 0.0
  %2879 = vmatpush.msra.mxu0 0.0
  %2880 = vmatpush.msra.mxu0 0.0
  %2881 = vmatpush.msra.mxu0 0.0
  %2882 = vmatpush.msra.mxu0 0.0
  %2883 = vmatpush.msra.mxu0 0.0
  %2884 = vmatpush.msra.mxu0 0.0
  %2885 = vmatpush.msra.mxu0 %v2459
  %2886 = vmatpush.msra.mxu0 %v2457
  %2887 = vmatpush.msra.mxu0 %v2455
  %2888 = vmatpush.msra.mxu0 %v2453
  %2889 = vmatpush.msra.mxu0 %v2451
  %2890 = vmatpush.msra.mxu0 %v2449
  %2891 = vmatpush.msra.mxu0 %v2447
  %2892 = vmatpush.msra.mxu0 %v2445
  %2893 = vmatmul.f32.gmra.mxu0 %v2875
  %v2894 = vpop.f32.mrf.mxu0
  %v2895 = vadd.f32 0.0, %v2894
  %2896 = vdwg.mxu0
  %2897 = vmatpush.msra.mxu0 0.0
  %2898 = vmatpush.msra.mxu0 0.0
  %2899 = vmatpush.msra.mxu0 0.0
  %2900 = vmatpush.msra.mxu0 0.0
  %2901 = vmatpush.msra.mxu0 0.0
  %2902 = vmatpush.msra.mxu0 0.0
  %2903 = vmatpush.msra.mxu0 0.0
  %2904 = vmatpush.msra.mxu0 0.0
  %2905 = vmatpush.msra.mxu0 %v2460
  %2906 = vmatpush.msra.mxu0 %v2458
  %2907 = vmatpush.msra.mxu0 %v2456
  %2908 = vmatpush.msra.mxu0 %v2454
  %2909 = vmatpush.msra.mxu0 %v2452
  %2910 = vmatpush.msra.mxu0 %v2450
  %2911 = vmatpush.msra.mxu0 %v2448
  %2912 = vmatpush.msra.mxu0 %v2446
  %2913 = vmatmul.f32.gmra.mxu0 %v2875
  %v2914 = vpop.f32.mrf.mxu0
  %v2915 = vadd.f32 0.0, %v2914
  %2916 = vdwg.mxu0
  %v2917 = vadd.f32 %v2873, %v2895
  %v2918 = vadd.f32 %v2874, %v2915
  %v2919 = vmul.f32 %v2917, %v63
  %v2920 = vmul.f32 %v2918, %v64
  %v2921 = vtanh.pop %v2919
  %v2922 = vtanh.pop %v2920
  %v2923 = vmul.f32 %v2921, %v63
  %v2924 = vmul.f32 %v2922, %v64
  %v2925 = vadd.f32 %v2923, %v65
  %v2926 = vadd.f32 %v2924, %v66
  %v2927 = vmul.f32 %v2925, %v2864
  %v2928 = vmul.f32 %v2925, %v2926
  %2930 = vrot.lane.b32.xlu0 %v2928, 64
  %v2931 = vpop.permute.xlu0 %2930
  %v2933 = vadd.f32 %v2927, %v2931
  %v2934 = vtanh.pop %v2933
  %v2935 = vmul.f32 %v2926, %v2934
  %2937 = vrot.lane.b32.xlu0 %v2935, 64
  %v2938 = vpop.permute.xlu0 %2937
  %2940 = vst.msk [vmem:[#allocation3 + $0x30] sm:$0xff] %vm314, %v2938
  %2941 = vst.msk [vmem:[#allocation3 + $0x8] sm:$0xff] %vm316, %v2938
  %v2942 = vld [vmem:[#allocation2 + $0x70] sm:$0xff]
  %v2943 = vld [vmem:[#allocation2 + $0x78] sm:$0xff]
  %v2944 = vsel %vm247, %v2938, 0
  %2946 = vmatpush.msra.mxu0 0.0
  %2947 = vmatpush.msra.mxu0 0.0
  %2948 = vmatpush.msra.mxu0 0.0
  %2949 = vmatpush.msra.mxu0 0.0
  %2950 = vmatpush.msra.mxu0 0.0
  %2951 = vmatpush.msra.mxu0 0.0
  %2952 = vmatpush.msra.mxu0 0.0
  %2953 = vmatpush.msra.mxu0 0.0
  %2954 = vmatpush.msra.mxu0 %v2459
  %2955 = vmatpush.msra.mxu0 %v2457
  %2956 = vmatpush.msra.mxu0 %v2455
  %2957 = vmatpush.msra.mxu0 %v2453
  %2958 = vmatpush.msra.mxu0 %v2451
  %2959 = vmatpush.msra.mxu0 %v2449
  %2960 = vmatpush.msra.mxu0 %v2447
  %2961 = vmatpush.msra.mxu0 %v2445
  %2962 = vmatmul.f32.gmra.mxu0 %v2944
  %v2963 = vpop.f32.mrf.mxu0
  %v2964 = vadd.f32 0.0, %v2963
  %2965 = vdwg.mxu0
  %2966 = vmatpush.msra.mxu0 0.0
  %2967 = vmatpush.msra.mxu0 0.0
  %2968 = vmatpush.msra.mxu0 0.0
  %2969 = vmatpush.msra.mxu0 0.0
  %2970 = vmatpush.msra.mxu0 0.0
  %2971 = vmatpush.msra.mxu0 0.0
  %2972 = vmatpush.msra.mxu0 0.0
  %2973 = vmatpush.msra.mxu0 0.0
  %2974 = vmatpush.msra.mxu0 %v2460
  %2975 = vmatpush.msra.mxu0 %v2458
  %2976 = vmatpush.msra.mxu0 %v2456
  %2977 = vmatpush.msra.mxu0 %v2454
  %2978 = vmatpush.msra.mxu0 %v2452
  %2979 = vmatpush.msra.mxu0 %v2450
  %2980 = vmatpush.msra.mxu0 %v2448
  %2981 = vmatpush.msra.mxu0 %v2446
  %2982 = vmatmul.f32.gmra.mxu0 %v2944
  %v2983 = vpop.f32.mrf.mxu0
  %v2984 = vadd.f32 0.0, %v2983
  %2985 = vdwg.mxu0
  %v2986 = vadd.f32 %v2942, %v2964
  %v2987 = vadd.f32 %v2943, %v2984
  %v2988 = vmul.f32 %v2986, %v63
  %v2989 = vmul.f32 %v2987, %v64
  %v2990 = vtanh.pop %v2988
  %v2991 = vtanh.pop %v2989
  %v2992 = vmul.f32 %v2990, %v63
  %v2993 = vmul.f32 %v2991, %v64
  %v2994 = vadd.f32 %v2992, %v65
  %v2995 = vadd.f32 %v2993, %v66
  %v2996 = vmul.f32 %v2994, %v2933
  %v2997 = vmul.f32 %v2994, %v2995
  %2999 = vrot.lane.b32.xlu0 %v2997, 64
  %v3000 = vpop.permute.xlu0 %2999
  %v3002 = vadd.f32 %v2996, %v3000
  %v3003 = vtanh.pop %v3002
  %v3004 = vmul.f32 %v2995, %v3003
  %3006 = vrot.lane.b32.xlu0 %v3004, 64
  %v3007 = vpop.permute.xlu0 %3006
  %3009 = vst.msk [vmem:[#allocation3 + $0x38] sm:$0xff] %vm314, %v3007
  %3010 = vst.msk [vmem:[#allocation3] sm:$0xff] %vm316, %v3007
  %v3011 = vld [vmem:[#allocation3] sm:$0xff]
  %v3012 = vld [vmem:[#allocation3 + $0x8] sm:$0xff]
  %v3013 = vld [vmem:[#allocation3 + $0x10] sm:$0xff]
  %v3014 = vld [vmem:[#allocation3 + $0x18] sm:$0xff]
  %v3015 = vld [vmem:[#allocation3 + $0x20] sm:$0xff]
  %v3016 = vld [vmem:[#allocation3 + $0x28] sm:$0xff]
  %v3017 = vld [vmem:[#allocation3 + $0x30] sm:$0xff]
  %v3018 = vld [vmem:[#allocation3 + $0x38] sm:$0xff]
  %v3019 = vsel %vm67, 1, 0
  %vm3020 = vcmp.eq.s32.totalorder %v3019, 1
  %v3021 = vsel %vm3020, %v3018, %v3011
  %v3022 = vmul.f32 %v3011, %v3021
  %v3023 = vsel %vm247, %v3022, 0.0
  %3024 = vadd.xlane.f32.xlu0 %v3023
  %v3025 = vpop.xlane.xlu0 %3024
  %v3026 = vmul.f32 %v3012, %v3021
  %v3027 = vsel %vm247, %v3026, 0.0
  %3028 = vadd.xlane.f32.xlu0 %v3027
  %v3029 = vpop.xlane.xlu0 %3028
  %v3030 = vmul.f32 %v3013, %v3021
  %v3031 = vsel %vm247, %v3030, 0.0
  %3032 = vadd.xlane.f32.xlu0 %v3031
  %v3033 = vpop.xlane.xlu0 %3032
  %v3034 = vmul.f32 %v3014, %v3021
  %v3035 = vsel %vm247, %v3034, 0.0
  %3036 = vadd.xlane.f32.xlu0 %v3035
  %v3037 = vpop.xlane.xlu0 %3036
  %v3038 = vmul.f32 %v3015, %v3021
  %v3039 = vsel %vm247, %v3038, 0.0
  %3040 = vadd.xlane.f32.xlu0 %v3039
  %v3041 = vpop.xlane.xlu0 %3040
  %v3042 = vmul.f32 %v3016, %v3021
  %v3043 = vsel %vm247, %v3042, 0.0
  %3044 = vadd.xlane.f32.xlu0 %v3043
  %v3045 = vpop.xlane.xlu0 %3044
  %v3046 = vmul.f32 %v3017, %v3021
  %v3047 = vsel %vm247, %v3046, 0.0
  %3048 = vadd.xlane.f32.xlu0 %v3047
  %v3049 = vpop.xlane.xlu0 %3048
  %v3050 = vmul.f32 %v3018, %v3021
  %v3051 = vsel %vm247, %v3050, 0.0
  %3052 = vadd.xlane.f32.xlu0 %v3051
  %v3053 = vpop.xlane.xlu0 %3052
  %v3054 = vmax.f32 %v3025, %v3029
  %v3055 = vmax.f32 %v3054, %v3033
  %v3056 = vmax.f32 %v3055, %v3037
  %v3057 = vmax.f32 %v3056, %v3041
  %v3058 = vmax.f32 %v3057, %v3045
  %v3059 = vmax.f32 %v3058, %v3049
  %v3060 = vmax.f32 %v3059, %v3053
  %v3061 = vsub.f32 %v3025, %v3060
  %v3062 = vmul.f32 %v3061, 1.442695
  %v3063 = vpow.pop %v3062
  %v3064 = vsub.f32 %v3029, %v3060
  %v3065 = vmul.f32 %v3064, 1.442695
  %v3066 = vpow.pop %v3065
  %v3067 = vsub.f32 %v3033, %v3060
  %v3068 = vmul.f32 %v3067, 1.442695
  %v3069 = vpow.pop %v3068
  %v3070 = vsub.f32 %v3037, %v3060
  %v3071 = vmul.f32 %v3070, 1.442695
  %v3072 = vpow.pop %v3071
  %v3073 = vsub.f32 %v3041, %v3060
  %v3074 = vmul.f32 %v3073, 1.442695
  %v3075 = vpow.pop %v3074
  %v3076 = vsub.f32 %v3045, %v3060
  %v3077 = vmul.f32 %v3076, 1.442695
  %v3078 = vpow.pop %v3077
  %v3079 = vsub.f32 %v3049, %v3060
  %v3080 = vmul.f32 %v3079, 1.442695
  %v3081 = vpow.pop %v3080
  %v3082 = vsub.f32 %v3053, %v3060
  %v3083 = vmul.f32 %v3082, 1.442695
  %v3084 = vpow.pop %v3083
  %v3085 = vmul.f32 %v3011, %v3063
  %v3086 = vadd.f32 %v3063, %v3066
  %v3087 = vmul.f32 %v3012, %v3066
  %v3088 = vadd.f32 %v3085, %v3087
  %v3089 = vadd.f32 %v3086, %v3069
  %v3090 = vmul.f32 %v3013, %v3069
  %v3091 = vadd.f32 %v3088, %v3090
  %v3092 = vadd.f32 %v3089, %v3072
  %v3093 = vmul.f32 %v3014, %v3072
  %v3094 = vadd.f32 %v3091, %v3093
  %v3095 = vadd.f32 %v3092, %v3075
  %v3096 = vmul.f32 %v3015, %v3075
  %v3097 = vadd.f32 %v3094, %v3096
  %v3098 = vadd.f32 %v3095, %v3078
  %v3099 = vmul.f32 %v3016, %v3078
  %v3100 = vadd.f32 %v3097, %v3099
  %v3101 = vadd.f32 %v3098, %v3081
  %v3102 = vmul.f32 %v3017, %v3081
  %v3103 = vadd.f32 %v3100, %v3102
  %v3104 = vadd.f32 %v3101, %v3084
  %v3105 = vmul.f32 %v3018, %v3084
  %v3106 = vadd.f32 %v3103, %v3105
  %v3107 = vrcp.pop %v3104
  %v3108 = vmul.f32 %v3104, %v3107
  %v3109 = vsub.f32 1.0, %v3108
  %v3110 = vmul.f32 %v3107, %v3109
  %v3111 = vadd.f32 %v3107, %v3110
  %vm3112 = vweird.f32 %v3104
  %vm3113 = vweird.f32 %v3107
  %vm3114 = vmor %vm3112, %vm3113
  %v3115 = vsel %vm3114, %v3107, %v3111
  %v3116 = vand.u32 2147483647, %v3104
  %vm3117 = vcmp.eq.f32.partialorder %v3116, 8.507059e+37
  %v3118 = vand.u32 %v3104, 2147483648
  %v3119 = vor.u32 1.1754944e-38, %v3118
  %v3120 = vsel %vm3117, %v3119, %v3115
  %v3121 = vmul.f32 %v3106, %v3120
  %v3122 = vld [vmem:[%s5] sm:$0x1]
  %v3124 = vperm.slane %v3122, 0
  %v3126 = vmul.f32 %v3121, %v3124
  %v3127 = vsel %vm247, %v3126, 0.0
  %3128 = vadd.xlane.f32.xlu0 %v3127
  %v3129 = vpop.xlane.xlu0 %3128
  %v3130 = vld [vmem:[#allocation4] sm:$0x1]
  %v3132 = vperm.slane %v3130, 0
  %v3134 = vadd.f32 %v3129, %v3132
  %v3135 = vxor.u32 %v3134, 2147483648
  %v3136 = vmul.f32 %v3135, 1.442695
  %v3137 = vpow.pop %v3136
  %v3138 = vadd.f32 %v3137, 1.0
  %v3139 = vrcp.pop %v3138
  %v3140 = vmul.f32 %v3138, %v3139
  %v3141 = vsub.f32 1.0, %v3140
  %v3142 = vmul.f32 %v3139, %v3141
  %v3143 = vadd.f32 %v3139, %v3142
  %vm3144 = vweird.f32 %v3138
  %vm3145 = vweird.f32 %v3139
  %vm3146 = vmor %vm3144, %vm3145
  %v3147 = vsel %vm3146, %v3139, %v3143
  %v3148 = vand.u32 2147483647, %v3138
  %vm3149 = vcmp.eq.f32.partialorder %v3148, 8.507059e+37
  %v3150 = vand.u32 %v3138, 2147483648
  %v3151 = vor.u32 1.1754944e-38, %v3150
  %v3152 = vsel %vm3149, %v3151, %v3147
  %v3153 = vmul.f32 1.0, %v3152
  %vm3154 = vcmask 7168
  %3155 = vst.msk [vmem:[%s7] sm:$0xff] %vm3154, %v3153
  // Predicated region
  $region30: #{attention_rnn_forward.1} parent=0 // pred_check
    _
  $region31: #{attention_rnn_forward.1} parent=0 // pred_check_branch
    %3157 = sbr.rel (0) target = $region33
  $region32: #{attention_rnn_forward.1} parent=0 // pred_region
    _
  $region33: #{attention_rnn_forward.1} parent=0 // pred_fallthru
    _
  // Predicated region
  $region34: #{attention_rnn_forward.1} parent=0 // pred_check
    _
  $region35: #{attention_rnn_forward.1} parent=0 // pred_check_branch
    %3159 = sbr.rel (0) target = $region37
  $region36: #{attention_rnn_forward.1} parent=0 // pred_region
    _
  $region37: #{attention_rnn_forward.1} parent=0 // pred_fallthru
    _

</llo_original>
